<compile_context>
chip_gen: v7x
topology: tpu7x:2x2x1
jax: 0.10.0
libtpu: 0.0.40
codegen_flags: <defaults>
</compile_context>

<pallas_src>
import jax
import jax.numpy as jnp
from jax import lax
from jax.experimental import pallas as pl
from jax.experimental.pallas import tpu as pltpu

_BN_EPS = 1e-5
_NEG_INF = float("-inf")


def _pool5_same(v, pad_ref, w_idx):
    """k=5, stride-1, 'same' max-pool of v:(H, W, C) f32 with -inf boundary.

    H direction: -inf-bordered VMEM scratch, leading-dim slices (cheap aligned
    vreg-row loads, no concat copies).  W direction: sublane rotations on the
    XLU + iota masks on the VPU (no padded copy, no sublane-sliced loads).
    """
    H, W, C = v.shape

    # --- H (leading-dim) direction ---------------------------------------
    pad_ref[2:2 + H, :, :] = v                       # border rows stay -inf
    r = pad_ref[0:H, :, :]
    for dh in range(1, 5):
        r = jnp.maximum(r, pad_ref[dh:dh + H, :, :])

    # --- W (sublane) direction -------------------------------------------
    out = r
    for dw in (1, 2):
        # contribution of r[:, w + dw] (valid while w + dw < W)
        shifted = pltpu.roll(r, shift=(-dw) % W, axis=1)
        out = jnp.maximum(out, jnp.where(w_idx < W - dw, shifted, _NEG_INF))
        # contribution of r[:, w - dw] (valid while w - dw >= 0)
        shifted = pltpu.roll(r, shift=dw, axis=1)
        out = jnp.maximum(out, jnp.where(w_idx >= dw, shifted, _NEG_INF))
    return out


def _spp_conv_kernel(x_ref, w_ref, b_ref, y_ref, mean_ref, m2_ref,
                     pad_ref, acc_ref):
    """Per image: SPPF pooling cascade + split/accumulated 1x1 conv.

    pool9 = pool5(pool5), pool13 = pool5(pool5(pool5)) (exact).  Each pooled
    map is consumed by its (HW,C)x(C,C) dot immediately (no 4C concat).  Also
    emits per-tile BN partials (mean, M2) in a single extra VPU pass so the
    batch statistics can be folded outside the parallel grid.
    """
    H, W, C = x_ref.shape
    HW = H * W

    # -inf border rows of the H-padding scratch (W boundary handled by masks).
    pad_ref[0:2, :, :] = jnp.full((2, W, C), _NEG_INF, jnp.float32)
    pad_ref[H + 2:H + 4, :, :] = jnp.full((2, W, C), _NEG_INF, jnp.float32)

    w_idx = lax.broadcasted_iota(jnp.int32, (W, C), 0)   # W (sublane) index

    def conv_accum(v_f32, i, *, init=False):
        # bf16 MXU operands (pooled maps are finite), f32 accumulation in VMEM.
        rows = v_f32.reshape(HW, C).astype(jnp.bfloat16)
        part = jnp.dot(rows, w_ref[i], preferred_element_type=jnp.float32)
        if init:
            acc_ref[...] = part
        else:
            acc_ref[...] += part

    # Pooling math in f32 (v5e-friendly; HBM read is already bf16-halved).
    x0 = x_ref[...].astype(jnp.float32)                  # (H, W, C)
    conv_accum(x0, 0, init=True)
    p = _pool5_same(x0, pad_ref, w_idx)                   # == MaxPool k=5
    conv_accum(p, 1)
    p = _pool5_same(p, pad_ref, w_idx)                    # == MaxPool k=9
    conv_accum(p, 2)
    p = _pool5_same(p, pad_ref, w_idx)                    # == MaxPool k=13
    conv_accum(p, 3)

    y = acc_ref[...] + b_ref[...]                         # (HW, C) f32
    y_ref[...] = y.astype(y_ref.dtype)                    # bf16 HBM shuttle

    # Per-tile mean / M2 (deviations from the per-tile mean -> no E[y^2]-E[y]^2
    # catastrophic cancellation when the batch stats are combined).
    mean_t = jnp.sum(y, axis=0, keepdims=True) * (1.0 / float(HW))   # (1, C)
    d = y - mean_t
    mean_ref[...] = mean_t
    m2_ref[...] = jnp.sum(d * d, axis=0, keepdims=True)


def _bn_mish_kernel(y_ref, scale_ref, shift_ref, o_ref):
    """Folded BatchNorm (scale/shift) + Mish on the lane-dense (HW, C) slab."""
    z = y_ref[...].astype(jnp.float32) * scale_ref[...] + shift_ref[...]
    # Mish(z) = z * tanh(softplus(z)) = z - 2z / (1 + (1 + e^z)^2)
    u = 1.0 + jnp.exp(z)
    t = 1.0 + u * u
    o_ref[...] = z - (2.0 * z) * pl.reciprocal(t, approx=True)


def spp_forward(x_nhwc, w, b, gamma, beta):
    """SPP -> 1x1 Conv -> BatchNorm(train) -> Mish, NHWC end to end.

    x_nhwc: (N, H, W, C); pass bf16 to avoid any boundary cast.
    w: (4C, C) conv weight for the concat order [x, pool5, pool9, pool13].
    b / gamma / beta: (1, C).  Returns (N, H, W, C) float32.
    """
    N, H, W, C = x_nhwc.shape
    x = x_nhwc.astype(jnp.bfloat16)                      # no-op if already bf16
    w4 = w.reshape(4, C, C).astype(jnp.bfloat16)         # per-branch weights
    b = b.astype(jnp.float32)

    cparams = pltpu.CompilerParams(dimension_semantics=("parallel",))

    # ---- Pass 1: pooling cascade + accumulated 1x1 conv + BN partials ----
    y, tile_mean, tile_m2 = pl.pallas_call(
        _spp_conv_kernel,
        grid=(N,),
        in_specs=[
            pl.BlockSpec((None, H, W, C), lambda n: (n, 0, 0, 0)),
            pl.BlockSpec((4, C, C), lambda n: (0, 0, 0)),
            pl.BlockSpec((1, C), lambda n: (0, 0)),
        ],
        out_specs=(
            pl.BlockSpec((None, H * W, C), lambda n: (n, 0, 0)),
            pl.BlockSpec((None, 1, C), lambda n: (n, 0, 0)),
            pl.BlockSpec((None, 1, C), lambda n: (n, 0, 0)),
        ),
        out_shape=(
            jax.ShapeDtypeStruct((N, H * W, C), jnp.bfloat16),
            jax.ShapeDtypeStruct((N, 1, C), jnp.float32),
            jax.ShapeDtypeStruct((N, 1, C), jnp.float32),
        ),
        scratch_shapes=[
            pltpu.VMEM((H + 4, W, C), jnp.float32),      # -inf-bordered H pad
            pltpu.VMEM((H * W, C), jnp.float32),         # conv accumulator
        ],
        compiler_params=cparams,
    )(x, w4, b)

    # ---- Training-mode BatchNorm fold (parallel-variance combine, f32) ----
    mean = jnp.mean(tile_mean, axis=0)                   # (1, C)
    dm = tile_mean - mean                                # (N, 1, C)
    var = (jnp.sum(tile_m2, axis=0)
           + float(H * W) * jnp.sum(dm * dm, axis=0)) / float(N * H * W)
    scale = gamma.astype(jnp.float32) * lax.rsqrt(var + _BN_EPS)
    shift = beta.astype(jnp.float32) - mean * scale

    # ---- Pass 2: BN + Mish on the lane-dense (N, H*W, C) slab -------------
    # TODO(synk): fuse this pass into the consumer conv kernel's prologue.
    out = pl.pallas_call(
        _bn_mish_kernel,
        grid=(N,),
        in_specs=[
            pl.BlockSpec((None, H * W, C), lambda n: (n, 0, 0)),
            pl.BlockSpec((1, C), lambda n: (0, 0)),
            pl.BlockSpec((1, C), lambda n: (0, 0)),
        ],
        out_specs=pl.BlockSpec((None, H * W, C), lambda n: (n, 0, 0)),
        out_shape=jax.ShapeDtypeStruct((N, H * W, C), jnp.float32),
        compiler_params=cparams,
    )(y, scale, shift)

    return out.reshape(N, H, W, C)                       # free metadata reshape


def spp_reference(x_nhwc, w, b, gamma, beta):
    """Pure-JAX f32 reference (module semantics) for verification; NHWC."""
    x = x_nhwc.astype(jnp.float32)

    def pool(xx, k):
        p = (k - 1) // 2
        return lax.reduce_window(
            xx, -jnp.inf, lax.max, (1, k, k, 1), (1, 1, 1, 1),
            padding=((0, 0), (p, p), (p, p), (0, 0)))

    cat = jnp.concatenate([x, pool(x, 5), pool(x, 9), pool(x, 13)], axis=-1)
    y = jnp.einsum("nhwk,kc->nhwc", cat, w) + b[0]
    mean = jnp.mean(y, axis=(0, 1, 2), keepdims=True)
    var = jnp.mean((y - mean) ** 2, axis=(0, 1, 2), keepdims=True)
    y = (y - mean) / jnp.sqrt(var + _BN_EPS) * gamma[0] + beta[0]
    return y * jnp.tanh(jnp.logaddexp(0.0, y))            # Mish


if __name__ == "__main__":
    N, C, H, W = 2, 4, 16, 16

    key = jax.random.PRNGKey(0)
    kx, kw, kb, kg, kbeta = jax.random.split(key, 5)

    # NHWC end to end; pre-cast to bf16 so both the kernel and the reference
    # consume identical (rounded) inputs and the kernel's HBM read is halved.
    x = jax.random.normal(kx, (N, H, W, C), dtype=jnp.float32).astype(jnp.bfloat16)
    # Conv2d(4C -> C, kernel_size=1) weight: PyTorch (C, 4C, 1, 1) -> (4C, C)
    w = 0.1 * jax.random.normal(kw, (4 * C, C), dtype=jnp.float32)
    b = 0.1 * jax.random.normal(kb, (1, C), dtype=jnp.float32)
    gamma = 1.0 + 0.1 * jax.random.normal(kg, (1, C), dtype=jnp.float32)
    beta = 0.1 * jax.random.normal(kbeta, (1, C), dtype=jnp.float32)

    out = jax.block_until_ready(jax.jit(spp_forward)(x, w, b, gamma, beta))
    ref = jax.block_until_ready(spp_reference(x, w, b, gamma, beta))

    assert out.shape == (N, H, W, C), out.shape
    # Tolerance reflects the intentional bf16 MXU operands, bf16 intermediate
    # activation and EUP approximate reciprocal (perf-review items) vs. the
    # pure-f32 reference; a real logic bug (e.g. a shifted pooling window)
    # produces O(0.1-1) errors.
    assert jnp.allclose(out, ref, rtol=5e-2, atol=5e-2), (
        float(jnp.max(jnp.abs(out - ref))))
    print("KERNEL_OK")
</pallas_src>

<mosaic_0001>
module attributes {stable_mosaic.version = 11 : i64} {
  func.func @_spp_conv_kernel(%arg0: i32, %arg1: memref<1x16x16x4xbf16, #tpu.memory_space<vmem>>, %arg2: memref<4x4x4xbf16, #tpu.memory_space<vmem>>, %arg3: memref<1x4xf32, #tpu.memory_space<vmem>>, %arg4: memref<1x256x4xbf16, #tpu.memory_space<vmem>>, %arg5: memref<1x1x4xf32, #tpu.memory_space<vmem>>, %arg6: memref<1x1x4xf32, #tpu.memory_space<vmem>>, %arg7: memref<20x16x4xf32, #tpu.memory_space<vmem>>, %arg8: memref<256x4xf32, #tpu.memory_space<vmem>>) attributes {dimension_semantics = [#tpu.dimension_semantics<parallel>], iteration_bounds = array<i64: 2>, scalar_prefetch = 0 : i64, scratch_operands = 2 : i64, tpu.core_type = #tpu.core_type<tc>, window_params = [{transform_indices = @transform_0, window_bounds = array<i64: 1, 16, 16, 4>}, {pipeline_mode = #tpu.pipeline_mode<synchronous>, transform_indices = @transform_1, window_bounds = array<i64: 4, 4, 4>}, {pipeline_mode = #tpu.pipeline_mode<synchronous>, transform_indices = @transform_2, window_bounds = array<i64: 1, 4>}, {transform_indices = @transform_3, window_bounds = array<i64: 1, 256, 4>}, {transform_indices = @transform_4, window_bounds = array<i64: 1, 1, 4>}, {transform_indices = @transform_5, window_bounds = array<i64: 1, 1, 4>}]} {
    %cst = arith.constant 0xFF800000 : f32
    %0 = vector.broadcast %cst : f32 to vector<2x16x4xf32>
    %c0 = arith.constant 0 : index
    %c0_0 = arith.constant 0 : index
    %c0_1 = arith.constant 0 : index
    %1 = vector.load %arg7[%c0, %c0_0, %c0_1] : memref<20x16x4xf32, #tpu.memory_space<vmem>>, vector<2x16x4xf32>
    tpu.vector_store %arg7[%c0, %c0_0, %c0_1], %0 {strides = array<i32>} : memref<20x16x4xf32, #tpu.memory_space<vmem>>, vector<2x16x4xf32>,
    %cst_2 = arith.constant 0xFF800000 : f32
    %2 = vector.broadcast %cst_2 : f32 to vector<2x16x4xf32>
    %c18 = arith.constant 18 : index
    %c0_3 = arith.constant 0 : index
    %c0_4 = arith.constant 0 : index
    %3 = vector.load %arg7[%c18, %c0_3, %c0_4] : memref<20x16x4xf32, #tpu.memory_space<vmem>>, vector<2x16x4xf32>
    tpu.vector_store %arg7[%c18, %c0_3, %c0_4], %2 {strides = array<i32>} : memref<20x16x4xf32, #tpu.memory_space<vmem>>, vector<2x16x4xf32>,
    %4 = tpu.iota {dimensions = array<i32: 0>} : vector<16x4xi32>
    %c0_5 = arith.constant 0 : index
    %c0_6 = arith.constant 0 : index
    %c0_7 = arith.constant 0 : index
    %c0_8 = arith.constant 0 : index
    %5 = vector.load %arg1[%c0_5, %c0_6, %c0_7, %c0_8] : memref<1x16x16x4xbf16, #tpu.memory_space<vmem>>, vector<1x16x16x4xbf16>
    %6 = vector.shape_cast %5 : vector<1x16x16x4xbf16> to vector<16x16x4xbf16>
    %7 = arith.extf %6 : vector<16x16x4xbf16> to vector<16x16x4xf32>
    %8 = vector.shape_cast %7 : vector<16x16x4xf32> to vector<256x4xf32>
    %9 = arith.truncf %8 : vector<256x4xf32> to vector<256x4xbf16>
    %c0_9 = arith.constant 0 : index
    %c0_10 = arith.constant 0 : index
    %c0_11 = arith.constant 0 : index
    %10 = vector.load %arg2[%c0_9, %c0_10, %c0_11] : memref<4x4x4xbf16, #tpu.memory_space<vmem>>, vector<1x4x4xbf16>
    %11 = vector.shape_cast %10 : vector<1x4x4xbf16> to vector<4x4xbf16>
    %cst_12 = arith.constant dense<0.000000e+00> : vector<256x4xf32>
    %12 = tpu.matmul %9, %11, %cst_12 {dimension_numbers = #tpu.dot_dimension_numbers<[1], [0], [0], [1], [0, 0, 1, 1], [], []>} : vector<256x4xbf16>, vector<4x4xbf16>, vector<256x4xf32> -> vector<256x4xf32>
    %c0_13 = arith.constant 0 : index
    %c0_14 = arith.constant 0 : index
    %13 = vector.load %arg8[%c0_13, %c0_14] : memref<256x4xf32, #tpu.memory_space<vmem>>, vector<256x4xf32>
    tpu.vector_store %arg8[%c0_13, %c0_14], %12 {strides = array<i32>} : memref<256x4xf32, #tpu.memory_space<vmem>>, vector<256x4xf32>,
    %c2 = arith.constant 2 : index
    %c0_15 = arith.constant 0 : index
    %c0_16 = arith.constant 0 : index
    %14 = vector.load %arg7[%c2, %c0_15, %c0_16] : memref<20x16x4xf32, #tpu.memory_space<vmem>>, vector<16x16x4xf32>
    tpu.vector_store %arg7[%c2, %c0_15, %c0_16], %7 {strides = array<i32>} : memref<20x16x4xf32, #tpu.memory_space<vmem>>, vector<16x16x4xf32>,
    %c0_17 = arith.constant 0 : index
    %c0_18 = arith.constant 0 : index
    %c0_19 = arith.constant 0 : index
    %15 = vector.load %arg7[%c0_17, %c0_18, %c0_19] : memref<20x16x4xf32, #tpu.memory_space<vmem>>, vector<16x16x4xf32>
    %c1 = arith.constant 1 : index
    %c0_20 = arith.constant 0 : index
    %c0_21 = arith.constant 0 : index
    %16 = vector.load %arg7[%c1, %c0_20, %c0_21] : memref<20x16x4xf32, #tpu.memory_space<vmem>>, vector<16x16x4xf32>
    %17 = arith.maximumf %15, %16 : vector<16x16x4xf32>
    %c2_22 = arith.constant 2 : index
    %c0_23 = arith.constant 0 : index
    %c0_24 = arith.constant 0 : index
    %18 = vector.load %arg7[%c2_22, %c0_23, %c0_24] : memref<20x16x4xf32, #tpu.memory_space<vmem>>, vector<16x16x4xf32>
    %19 = arith.maximumf %17, %18 : vector<16x16x4xf32>
    %c3 = arith.constant 3 : index
    %c0_25 = arith.constant 0 : index
    %c0_26 = arith.constant 0 : index
    %20 = vector.load %arg7[%c3, %c0_25, %c0_26] : memref<20x16x4xf32, #tpu.memory_space<vmem>>, vector<16x16x4xf32>
    %21 = arith.maximumf %19, %20 : vector<16x16x4xf32>
    %c4 = arith.constant 4 : index
    %c0_27 = arith.constant 0 : index
    %c0_28 = arith.constant 0 : index
    %22 = vector.load %arg7[%c4, %c0_27, %c0_28] : memref<20x16x4xf32, #tpu.memory_space<vmem>>, vector<16x16x4xf32>
    %23 = arith.maximumf %21, %22 : vector<16x16x4xf32>
    %c15_i32 = arith.constant 15 : i32
    %24 = tpu.dynamic_rotate %23 by %c15_i32 dim 1 : vector<16x16x4xf32>, i32 -> vector<16x16x4xf32>
    %c15_i32_29 = arith.constant 15 : i32
    %25 = vector.broadcast %c15_i32_29 : i32 to vector<16x4xi32>
    %26 = arith.cmpi slt, %4, %25 : vector<16x4xi32>
    %cst_30 = arith.constant 0xFF800000 : f32
    %27 = vector.shape_cast %26 : vector<16x4xi1> to vector<1x16x4xi1>
    %28 = vector.broadcast %27 : vector<1x16x4xi1> to vector<16x16x4xi1>
    %29 = vector.broadcast %cst_30 : f32 to vector<16x16x4xf32>
    %30 = arith.select %28, %24, %29 : vector<16x16x4xi1>, vector<16x16x4xf32>
    %31 = arith.maximumf %23, %30 : vector<16x16x4xf32>
    %c1_i32 = arith.constant 1 : i32
    %32 = tpu.dynamic_rotate %23 by %c1_i32 dim 1 : vector<16x16x4xf32>, i32 -> vector<16x16x4xf32>
    %c1_i32_31 = arith.constant 1 : i32
    %33 = vector.broadcast %c1_i32_31 : i32 to vector<16x4xi32>
    %34 = arith.cmpi sge, %4, %33 : vector<16x4xi32>
    %cst_32 = arith.constant 0xFF800000 : f32
    %35 = vector.shape_cast %34 : vector<16x4xi1> to vector<1x16x4xi1>
    %36 = vector.broadcast %35 : vector<1x16x4xi1> to vector<16x16x4xi1>
    %37 = vector.broadcast %cst_32 : f32 to vector<16x16x4xf32>
    %38 = arith.select %36, %32, %37 : vector<16x16x4xi1>, vector<16x16x4xf32>
    %39 = arith.maximumf %31, %38 : vector<16x16x4xf32>
    %c14_i32 = arith.constant 14 : i32
    %40 = tpu.dynamic_rotate %23 by %c14_i32 dim 1 : vector<16x16x4xf32>, i32 -> vector<16x16x4xf32>
    %c14_i32_33 = arith.constant 14 : i32
    %41 = vector.broadcast %c14_i32_33 : i32 to vector<16x4xi32>
    %42 = arith.cmpi slt, %4, %41 : vector<16x4xi32>
    %cst_34 = arith.constant 0xFF800000 : f32
    %43 = vector.shape_cast %42 : vector<16x4xi1> to vector<1x16x4xi1>
    %44 = vector.broadcast %43 : vector<1x16x4xi1> to vector<16x16x4xi1>
    %45 = vector.broadcast %cst_34 : f32 to vector<16x16x4xf32>
    %46 = arith.select %44, %40, %45 : vector<16x16x4xi1>, vector<16x16x4xf32>
    %47 = arith.maximumf %39, %46 : vector<16x16x4xf32>
    %c2_i32 = arith.constant 2 : i32
    %48 = tpu.dynamic_rotate %23 by %c2_i32 dim 1 : vector<16x16x4xf32>, i32 -> vector<16x16x4xf32>
    %c2_i32_35 = arith.constant 2 : i32
    %49 = vector.broadcast %c2_i32_35 : i32 to vector<16x4xi32>
    %50 = arith.cmpi sge, %4, %49 : vector<16x4xi32>
    %cst_36 = arith.constant 0xFF800000 : f32
    %51 = vector.shape_cast %50 : vector<16x4xi1> to vector<1x16x4xi1>
    %52 = vector.broadcast %51 : vector<1x16x4xi1> to vector<16x16x4xi1>
    %53 = vector.broadcast %cst_36 : f32 to vector<16x16x4xf32>
    %54 = arith.select %52, %48, %53 : vector<16x16x4xi1>, vector<16x16x4xf32>
    %55 = arith.maximumf %47, %54 : vector<16x16x4xf32>
    %56 = vector.shape_cast %55 : vector<16x16x4xf32> to vector<256x4xf32>
    %57 = arith.truncf %56 : vector<256x4xf32> to vector<256x4xbf16>
    %c1_37 = arith.constant 1 : index
    %c0_38 = arith.constant 0 : index
    %c0_39 = arith.constant 0 : index
    %58 = vector.load %arg2[%c1_37, %c0_38, %c0_39] : memref<4x4x4xbf16, #tpu.memory_space<vmem>>, vector<1x4x4xbf16>
    %59 = vector.shape_cast %58 : vector<1x4x4xbf16> to vector<4x4xbf16>
    %cst_40 = arith.constant dense<0.000000e+00> : vector<256x4xf32>
    %60 = tpu.matmul %57, %59, %cst_40 {dimension_numbers = #tpu.dot_dimension_numbers<[1], [0], [0], [1], [0, 0, 1, 1], [], []>} : vector<256x4xbf16>, vector<4x4xbf16>, vector<256x4xf32> -> vector<256x4xf32>
    %c0_41 = arith.constant 0 : index
    %c0_42 = arith.constant 0 : index
    %61 = vector.load %arg8[%c0_41, %c0_42] : memref<256x4xf32, #tpu.memory_space<vmem>>, vector<256x4xf32>
    %62 = arith.addf %61, %60 : vector<256x4xf32>
    %c0_43 = arith.constant 0 : index
    %c0_44 = arith.constant 0 : index
    %63 = vector.load %arg8[%c0_43, %c0_44] : memref<256x4xf32, #tpu.memory_space<vmem>>, vector<256x4xf32>
    tpu.vector_store %arg8[%c0_43, %c0_44], %62 {strides = array<i32>} : memref<256x4xf32, #tpu.memory_space<vmem>>, vector<256x4xf32>,
    %c2_45 = arith.constant 2 : index
    %c0_46 = arith.constant 0 : index
    %c0_47 = arith.constant 0 : index
    %64 = vector.load %arg7[%c2_45, %c0_46, %c0_47] : memref<20x16x4xf32, #tpu.memory_space<vmem>>, vector<16x16x4xf32>
    tpu.vector_store %arg7[%c2_45, %c0_46, %c0_47], %55 {strides = array<i32>} : memref<20x16x4xf32, #tpu.memory_space<vmem>>, vector<16x16x4xf32>,
    %c0_48 = arith.constant 0 : index
    %c0_49 = arith.constant 0 : index
    %c0_50 = arith.constant 0 : index
    %65 = vector.load %arg7[%c0_48, %c0_49, %c0_50] : memref<20x16x4xf32, #tpu.memory_space<vmem>>, vector<16x16x4xf32>
    %c1_51 = arith.constant 1 : index
    %c0_52 = arith.constant 0 : index
    %c0_53 = arith.constant 0 : index
    %66 = vector.load %arg7[%c1_51, %c0_52, %c0_53] : memref<20x16x4xf32, #tpu.memory_space<vmem>>, vector<16x16x4xf32>
    %67 = arith.maximumf %65, %66 : vector<16x16x4xf32>
    %c2_54 = arith.constant 2 : index
    %c0_55 = arith.constant 0 : index
    %c0_56 = arith.constant 0 : index
    %68 = vector.load %arg7[%c2_54, %c0_55, %c0_56] : memref<20x16x4xf32, #tpu.memory_space<vmem>>, vector<16x16x4xf32>
    %69 = arith.maximumf %67, %68 : vector<16x16x4xf32>
    %c3_57 = arith.constant 3 : index
    %c0_58 = arith.constant 0 : index
    %c0_59 = arith.constant 0 : index
    %70 = vector.load %arg7[%c3_57, %c0_58, %c0_59] : memref<20x16x4xf32, #tpu.memory_space<vmem>>, vector<16x16x4xf32>
    %71 = arith.maximumf %69, %70 : vector<16x16x4xf32>
    %c4_60 = arith.constant 4 : index
    %c0_61 = arith.constant 0 : index
    %c0_62 = arith.constant 0 : index
    %72 = vector.load %arg7[%c4_60, %c0_61, %c0_62] : memref<20x16x4xf32, #tpu.memory_space<vmem>>, vector<16x16x4xf32>
    %73 = arith.maximumf %71, %72 : vector<16x16x4xf32>
    %c15_i32_63 = arith.constant 15 : i32
    %74 = tpu.dynamic_rotate %73 by %c15_i32_63 dim 1 : vector<16x16x4xf32>, i32 -> vector<16x16x4xf32>
    %c15_i32_64 = arith.constant 15 : i32
    %75 = vector.broadcast %c15_i32_64 : i32 to vector<16x4xi32>
    %76 = arith.cmpi slt, %4, %75 : vector<16x4xi32>
    %cst_65 = arith.constant 0xFF800000 : f32
    %77 = vector.shape_cast %76 : vector<16x4xi1> to vector<1x16x4xi1>
    %78 = vector.broadcast %77 : vector<1x16x4xi1> to vector<16x16x4xi1>
    %79 = vector.broadcast %cst_65 : f32 to vector<16x16x4xf32>
    %80 = arith.select %78, %74, %79 : vector<16x16x4xi1>, vector<16x16x4xf32>
    %81 = arith.maximumf %73, %80 : vector<16x16x4xf32>
    %c1_i32_66 = arith.constant 1 : i32
    %82 = tpu.dynamic_rotate %73 by %c1_i32_66 dim 1 : vector<16x16x4xf32>, i32 -> vector<16x16x4xf32>
    %c1_i32_67 = arith.constant 1 : i32
    %83 = vector.broadcast %c1_i32_67 : i32 to vector<16x4xi32>
    %84 = arith.cmpi sge, %4, %83 : vector<16x4xi32>
    %cst_68 = arith.constant 0xFF800000 : f32
    %85 = vector.shape_cast %84 : vector<16x4xi1> to vector<1x16x4xi1>
    %86 = vector.broadcast %85 : vector<1x16x4xi1> to vector<16x16x4xi1>
    %87 = vector.broadcast %cst_68 : f32 to vector<16x16x4xf32>
    %88 = arith.select %86, %82, %87 : vector<16x16x4xi1>, vector<16x16x4xf32>
    %89 = arith.maximumf %81, %88 : vector<16x16x4xf32>
    %c14_i32_69 = arith.constant 14 : i32
    %90 = tpu.dynamic_rotate %73 by %c14_i32_69 dim 1 : vector<16x16x4xf32>, i32 -> vector<16x16x4xf32>
    %c14_i32_70 = arith.constant 14 : i32
    %91 = vector.broadcast %c14_i32_70 : i32 to vector<16x4xi32>
    %92 = arith.cmpi slt, %4, %91 : vector<16x4xi32>
    %cst_71 = arith.constant 0xFF800000 : f32
    %93 = vector.shape_cast %92 : vector<16x4xi1> to vector<1x16x4xi1>
    %94 = vector.broadcast %93 : vector<1x16x4xi1> to vector<16x16x4xi1>
    %95 = vector.broadcast %cst_71 : f32 to vector<16x16x4xf32>
    %96 = arith.select %94, %90, %95 : vector<16x16x4xi1>, vector<16x16x4xf32>
    %97 = arith.maximumf %89, %96 : vector<16x16x4xf32>
    %c2_i32_72 = arith.constant 2 : i32
    %98 = tpu.dynamic_rotate %73 by %c2_i32_72 dim 1 : vector<16x16x4xf32>, i32 -> vector<16x16x4xf32>
    %c2_i32_73 = arith.constant 2 : i32
    %99 = vector.broadcast %c2_i32_73 : i32 to vector<16x4xi32>
    %100 = arith.cmpi sge, %4, %99 : vector<16x4xi32>
    %cst_74 = arith.constant 0xFF800000 : f32
    %101 = vector.shape_cast %100 : vector<16x4xi1> to vector<1x16x4xi1>
    %102 = vector.broadcast %101 : vector<1x16x4xi1> to vector<16x16x4xi1>
    %103 = vector.broadcast %cst_74 : f32 to vector<16x16x4xf32>
    %104 = arith.select %102, %98, %103 : vector<16x16x4xi1>, vector<16x16x4xf32>
    %105 = arith.maximumf %97, %104 : vector<16x16x4xf32>
    %106 = vector.shape_cast %105 : vector<16x16x4xf32> to vector<256x4xf32>
    %107 = arith.truncf %106 : vector<256x4xf32> to vector<256x4xbf16>
    %c2_75 = arith.constant 2 : index
    %c0_76 = arith.constant 0 : index
    %c0_77 = arith.constant 0 : index
    %108 = vector.load %arg2[%c2_75, %c0_76, %c0_77] : memref<4x4x4xbf16, #tpu.memory_space<vmem>>, vector<1x4x4xbf16>
    %109 = vector.shape_cast %108 : vector<1x4x4xbf16> to vector<4x4xbf16>
    %cst_78 = arith.constant dense<0.000000e+00> : vector<256x4xf32>
    %110 = tpu.matmul %107, %109, %cst_78 {dimension_numbers = #tpu.dot_dimension_numbers<[1], [0], [0], [1], [0, 0, 1, 1], [], []>} : vector<256x4xbf16>, vector<4x4xbf16>, vector<256x4xf32> -> vector<256x4xf32>
    %c0_79 = arith.constant 0 : index
    %c0_80 = arith.constant 0 : index
    %111 = vector.load %arg8[%c0_79, %c0_80] : memref<256x4xf32, #tpu.memory_space<vmem>>, vector<256x4xf32>
    %112 = arith.addf %111, %110 : vector<256x4xf32>
    %c0_81 = arith.constant 0 : index
    %c0_82 = arith.constant 0 : index
    %113 = vector.load %arg8[%c0_81, %c0_82] : memref<256x4xf32, #tpu.memory_space<vmem>>, vector<256x4xf32>
    tpu.vector_store %arg8[%c0_81, %c0_82], %112 {strides = array<i32>} : memref<256x4xf32, #tpu.memory_space<vmem>>, vector<256x4xf32>,
    %c2_83 = arith.constant 2 : index
    %c0_84 = arith.constant 0 : index
    %c0_85 = arith.constant 0 : index
    %114 = vector.load %arg7[%c2_83, %c0_84, %c0_85] : memref<20x16x4xf32, #tpu.memory_space<vmem>>, vector<16x16x4xf32>
    tpu.vector_store %arg7[%c2_83, %c0_84, %c0_85], %105 {strides = array<i32>} : memref<20x16x4xf32, #tpu.memory_space<vmem>>, vector<16x16x4xf32>,
    %c0_86 = arith.constant 0 : index
    %c0_87 = arith.constant 0 : index
    %c0_88 = arith.constant 0 : index
    %115 = vector.load %arg7[%c0_86, %c0_87, %c0_88] : memref<20x16x4xf32, #tpu.memory_space<vmem>>, vector<16x16x4xf32>
    %c1_89 = arith.constant 1 : index
    %c0_90 = arith.constant 0 : index
    %c0_91 = arith.constant 0 : index
    %116 = vector.load %arg7[%c1_89, %c0_90, %c0_91] : memref<20x16x4xf32, #tpu.memory_space<vmem>>, vector<16x16x4xf32>
    %117 = arith.maximumf %115, %116 : vector<16x16x4xf32>
    %c2_92 = arith.constant 2 : index
    %c0_93 = arith.constant 0 : index
    %c0_94 = arith.constant 0 : index
    %118 = vector.load %arg7[%c2_92, %c0_93, %c0_94] : memref<20x16x4xf32, #tpu.memory_space<vmem>>, vector<16x16x4xf32>
    %119 = arith.maximumf %117, %118 : vector<16x16x4xf32>
    %c3_95 = arith.constant 3 : index
    %c0_96 = arith.constant 0 : index
    %c0_97 = arith.constant 0 : index
    %120 = vector.load %arg7[%c3_95, %c0_96, %c0_97] : memref<20x16x4xf32, #tpu.memory_space<vmem>>, vector<16x16x4xf32>
    %121 = arith.maximumf %119, %120 : vector<16x16x4xf32>
    %c4_98 = arith.constant 4 : index
    %c0_99 = arith.constant 0 : index
    %c0_100 = arith.constant 0 : index
    %122 = vector.load %arg7[%c4_98, %c0_99, %c0_100] : memref<20x16x4xf32, #tpu.memory_space<vmem>>, vector<16x16x4xf32>
    %123 = arith.maximumf %121, %122 : vector<16x16x4xf32>
    %c15_i32_101 = arith.constant 15 : i32
    %124 = tpu.dynamic_rotate %123 by %c15_i32_101 dim 1 : vector<16x16x4xf32>, i32 -> vector<16x16x4xf32>
    %c15_i32_102 = arith.constant 15 : i32
    %125 = vector.broadcast %c15_i32_102 : i32 to vector<16x4xi32>
    %126 = arith.cmpi slt, %4, %125 : vector<16x4xi32>
    %cst_103 = arith.constant 0xFF800000 : f32
    %127 = vector.shape_cast %126 : vector<16x4xi1> to vector<1x16x4xi1>
    %128 = vector.broadcast %127 : vector<1x16x4xi1> to vector<16x16x4xi1>
    %129 = vector.broadcast %cst_103 : f32 to vector<16x16x4xf32>
    %130 = arith.select %128, %124, %129 : vector<16x16x4xi1>, vector<16x16x4xf32>
    %131 = arith.maximumf %123, %130 : vector<16x16x4xf32>
    %c1_i32_104 = arith.constant 1 : i32
    %132 = tpu.dynamic_rotate %123 by %c1_i32_104 dim 1 : vector<16x16x4xf32>, i32 -> vector<16x16x4xf32>
    %c1_i32_105 = arith.constant 1 : i32
    %133 = vector.broadcast %c1_i32_105 : i32 to vector<16x4xi32>
    %134 = arith.cmpi sge, %4, %133 : vector<16x4xi32>
    %cst_106 = arith.constant 0xFF800000 : f32
    %135 = vector.shape_cast %134 : vector<16x4xi1> to vector<1x16x4xi1>
    %136 = vector.broadcast %135 : vector<1x16x4xi1> to vector<16x16x4xi1>
    %137 = vector.broadcast %cst_106 : f32 to vector<16x16x4xf32>
    %138 = arith.select %136, %132, %137 : vector<16x16x4xi1>, vector<16x16x4xf32>
    %139 = arith.maximumf %131, %138 : vector<16x16x4xf32>
    %c14_i32_107 = arith.constant 14 : i32
    %140 = tpu.dynamic_rotate %123 by %c14_i32_107 dim 1 : vector<16x16x4xf32>, i32 -> vector<16x16x4xf32>
    %c14_i32_108 = arith.constant 14 : i32
    %141 = vector.broadcast %c14_i32_108 : i32 to vector<16x4xi32>
    %142 = arith.cmpi slt, %4, %141 : vector<16x4xi32>
    %cst_109 = arith.constant 0xFF800000 : f32
    %143 = vector.shape_cast %142 : vector<16x4xi1> to vector<1x16x4xi1>
    %144 = vector.broadcast %143 : vector<1x16x4xi1> to vector<16x16x4xi1>
    %145 = vector.broadcast %cst_109 : f32 to vector<16x16x4xf32>
    %146 = arith.select %144, %140, %145 : vector<16x16x4xi1>, vector<16x16x4xf32>
    %147 = arith.maximumf %139, %146 : vector<16x16x4xf32>
    %c2_i32_110 = arith.constant 2 : i32
    %148 = tpu.dynamic_rotate %123 by %c2_i32_110 dim 1 : vector<16x16x4xf32>, i32 -> vector<16x16x4xf32>
    %c2_i32_111 = arith.constant 2 : i32
    %149 = vector.broadcast %c2_i32_111 : i32 to vector<16x4xi32>
    %150 = arith.cmpi sge, %4, %149 : vector<16x4xi32>
    %cst_112 = arith.constant 0xFF800000 : f32
    %151 = vector.shape_cast %150 : vector<16x4xi1> to vector<1x16x4xi1>
    %152 = vector.broadcast %151 : vector<1x16x4xi1> to vector<16x16x4xi1>
    %153 = vector.broadcast %cst_112 : f32 to vector<16x16x4xf32>
    %154 = arith.select %152, %148, %153 : vector<16x16x4xi1>, vector<16x16x4xf32>
    %155 = arith.maximumf %147, %154 : vector<16x16x4xf32>
    %156 = vector.shape_cast %155 : vector<16x16x4xf32> to vector<256x4xf32>
    %157 = arith.truncf %156 : vector<256x4xf32> to vector<256x4xbf16>
    %c3_113 = arith.constant 3 : index
    %c0_114 = arith.constant 0 : index
    %c0_115 = arith.constant 0 : index
    %158 = vector.load %arg2[%c3_113, %c0_114, %c0_115] : memref<4x4x4xbf16, #tpu.memory_space<vmem>>, vector<1x4x4xbf16>
    %159 = vector.shape_cast %158 : vector<1x4x4xbf16> to vector<4x4xbf16>
    %cst_116 = arith.constant dense<0.000000e+00> : vector<256x4xf32>
    %160 = tpu.matmul %157, %159, %cst_116 {dimension_numbers = #tpu.dot_dimension_numbers<[1], [0], [0], [1], [0, 0, 1, 1], [], []>} : vector<256x4xbf16>, vector<4x4xbf16>, vector<256x4xf32> -> vector<256x4xf32>
    %c0_117 = arith.constant 0 : index
    %c0_118 = arith.constant 0 : index
    %161 = vector.load %arg8[%c0_117, %c0_118] : memref<256x4xf32, #tpu.memory_space<vmem>>, vector<256x4xf32>
    %162 = arith.addf %161, %160 : vector<256x4xf32>
    %c0_119 = arith.constant 0 : index
    %c0_120 = arith.constant 0 : index
    %163 = vector.load %arg8[%c0_119, %c0_120] : memref<256x4xf32, #tpu.memory_space<vmem>>, vector<256x4xf32>
    tpu.vector_store %arg8[%c0_119, %c0_120], %162 {strides = array<i32>} : memref<256x4xf32, #tpu.memory_space<vmem>>, vector<256x4xf32>,
    %c0_121 = arith.constant 0 : index
    %c0_122 = arith.constant 0 : index
    %164 = vector.load %arg8[%c0_121, %c0_122] : memref<256x4xf32, #tpu.memory_space<vmem>>, vector<256x4xf32>
    %c0_123 = arith.constant 0 : index
    %c0_124 = arith.constant 0 : index
    %165 = vector.load %arg3[%c0_123, %c0_124] : memref<1x4xf32, #tpu.memory_space<vmem>>, vector<1x4xf32>
    %166 = vector.broadcast %165 : vector<1x4xf32> to vector<256x4xf32>
    %167 = arith.addf %164, %166 : vector<256x4xf32>
    %168 = arith.truncf %167 : vector<256x4xf32> to vector<256x4xbf16>
    %c0_125 = arith.constant 0 : index
    %c0_126 = arith.constant 0 : index
    %c0_127 = arith.constant 0 : index
    %169 = vector.load %arg4[%c0_125, %c0_126, %c0_127] : memref<1x256x4xbf16, #tpu.memory_space<vmem>>, vector<1x256x4xbf16>
    %170 = vector.shape_cast %169 : vector<1x256x4xbf16> to vector<256x4xbf16>
    %171 = vector.shape_cast %168 : vector<256x4xbf16> to vector<1x256x4xbf16>
    tpu.vector_store %arg4[%c0_125, %c0_126, %c0_127], %171 {strides = array<i32>} : memref<1x256x4xbf16, #tpu.memory_space<vmem>>, vector<1x256x4xbf16>,
    %cst_128 = arith.constant dense<0.000000e+00> : vector<4xf32>
    %172 = vector.multi_reduction <add>, %167, %cst_128 [0] : vector<256x4xf32> to vector<4xf32>
    %173 = vector.shape_cast %172 : vector<4xf32> to vector<1x4xf32>
    %cst_129 = arith.constant 3.906250e-03 : f32
    %174 = vector.broadcast %cst_129 : f32 to vector<1x4xf32>
    %175 = arith.mulf %173, %174 : vector<1x4xf32>
    %176 = vector.broadcast %175 : vector<1x4xf32> to vector<256x4xf32>
    %177 = arith.subf %167, %176 : vector<256x4xf32>
    %c0_130 = arith.constant 0 : index
    %c0_131 = arith.constant 0 : index
    %c0_132 = arith.constant 0 : index
    %178 = vector.load %arg5[%c0_130, %c0_131, %c0_132] : memref<1x1x4xf32, #tpu.memory_space<vmem>>, vector<1x1x4xf32>
    %179 = vector.shape_cast %178 : vector<1x1x4xf32> to vector<1x4xf32>
    %180 = vector.shape_cast %175 : vector<1x4xf32> to vector<1x1x4xf32>
    tpu.vector_store %arg5[%c0_130, %c0_131, %c0_132], %180 {strides = array<i32>} : memref<1x1x4xf32, #tpu.memory_space<vmem>>, vector<1x1x4xf32>,
    %181 = arith.mulf %177, %177 : vector<256x4xf32>
    %cst_133 = arith.constant dense<0.000000e+00> : vector<4xf32>
    %182 = vector.multi_reduction <add>, %181, %cst_133 [0] : vector<256x4xf32> to vector<4xf32>
    %183 = vector.shape_cast %182 : vector<4xf32> to vector<1x4xf32>
    %c0_134 = arith.constant 0 : index
    %c0_135 = arith.constant 0 : index
    %c0_136 = arith.constant 0 : index
    %184 = vector.load %arg6[%c0_134, %c0_135, %c0_136] : memref<1x1x4xf32, #tpu.memory_space<vmem>>, vector<1x1x4xf32>
    %185 = vector.shape_cast %184 : vector<1x1x4xf32> to vector<1x4xf32>
    %186 = vector.shape_cast %183 : vector<1x4xf32> to vector<1x1x4xf32>
    tpu.vector_store %arg6[%c0_134, %c0_135, %c0_136], %186 {strides = array<i32>} : memref<1x1x4xf32, #tpu.memory_space<vmem>>, vector<1x1x4xf32>,
    return
  }
  func.func @transform_0(%arg0: i32) -> (i32, i32, i32, i32) {
    %c0_i32 = arith.constant 0 : i32
    %c0_i32_0 = arith.constant 0 : i32
    %c0_i32_1 = arith.constant 0 : i32
    %c0_i32_2 = arith.constant 0 : i32
    return %arg0, %c0_i32, %c0_i32_0, %c0_i32_1 : i32, i32, i32, i32
  }
  func.func @transform_1(%arg0: i32) -> (i32, i32, i32) {
    %c0_i32 = arith.constant 0 : i32
    %c0_i32_0 = arith.constant 0 : i32
    %c0_i32_1 = arith.constant 0 : i32
    %c0_i32_2 = arith.constant 0 : i32
    return %c0_i32, %c0_i32_0, %c0_i32_1 : i32, i32, i32
  }
  func.func @transform_2(%arg0: i32) -> (i32, i32) {
    %c0_i32 = arith.constant 0 : i32
    %c0_i32_0 = arith.constant 0 : i32
    %c0_i32_1 = arith.constant 0 : i32
    return %c0_i32, %c0_i32_0 : i32, i32
  }
  func.func @transform_3(%arg0: i32) -> (i32, i32, i32) {
    %c0_i32 = arith.constant 0 : i32
    %c0_i32_0 = arith.constant 0 : i32
    %c0_i32_1 = arith.constant 0 : i32
    return %arg0, %c0_i32, %c0_i32_0 : i32, i32, i32
  }
  func.func @transform_4(%arg0: i32) -> (i32, i32, i32) {
    %c0_i32 = arith.constant 0 : i32
    %c0_i32_0 = arith.constant 0 : i32
    %c0_i32_1 = arith.constant 0 : i32
    return %arg0, %c0_i32, %c0_i32_0 : i32, i32, i32
  }
  func.func @transform_5(%arg0: i32) -> (i32, i32, i32) {
    %c0_i32 = arith.constant 0 : i32
    %c0_i32_0 = arith.constant 0 : i32
    %c0_i32_1 = arith.constant 0 : i32
    return %arg0, %c0_i32, %c0_i32_0 : i32, i32, i32
  }
}

module attributes {stable_mosaic.version = 11 : i64} {
  func.func @_bn_mish_kernel(%arg0: i32, %arg1: memref<1x256x4xbf16, #tpu.memory_space<vmem>>, %arg2: memref<1x4xf32, #tpu.memory_space<vmem>>, %arg3: memref<1x4xf32, #tpu.memory_space<vmem>>, %arg4: memref<1x256x4xf32, #tpu.memory_space<vmem>>) attributes {dimension_semantics = [#tpu.dimension_semantics<parallel>], iteration_bounds = array<i64: 2>, scalar_prefetch = 0 : i64, scratch_operands = 0 : i64, tpu.core_type = #tpu.core_type<tc>, window_params = [{transform_indices = @transform_0, window_bounds = array<i64: 1, 256, 4>}, {pipeline_mode = #tpu.pipeline_mode<synchronous>, transform_indices = @transform_1, window_bounds = array<i64: 1, 4>}, {pipeline_mode = #tpu.pipeline_mode<synchronous>, transform_indices = @transform_2, window_bounds = array<i64: 1, 4>}, {transform_indices = @transform_3, window_bounds = array<i64: 1, 256, 4>}]} {
    %c0 = arith.constant 0 : index
    %c0_0 = arith.constant 0 : index
    %c0_1 = arith.constant 0 : index
    %0 = vector.load %arg1[%c0, %c0_0, %c0_1] : memref<1x256x4xbf16, #tpu.memory_space<vmem>>, vector<1x256x4xbf16>
    %1 = vector.shape_cast %0 : vector<1x256x4xbf16> to vector<256x4xbf16>
    %2 = arith.extf %1 : vector<256x4xbf16> to vector<256x4xf32>
    %c0_2 = arith.constant 0 : index
    %c0_3 = arith.constant 0 : index
    %3 = vector.load %arg2[%c0_2, %c0_3] : memref<1x4xf32, #tpu.memory_space<vmem>>, vector<1x4xf32>
    %4 = vector.broadcast %3 : vector<1x4xf32> to vector<256x4xf32>
    %5 = arith.mulf %2, %4 : vector<256x4xf32>
    %c0_4 = arith.constant 0 : index
    %c0_5 = arith.constant 0 : index
    %6 = vector.load %arg3[%c0_4, %c0_5] : memref<1x4xf32, #tpu.memory_space<vmem>>, vector<1x4xf32>
    %7 = vector.broadcast %6 : vector<1x4xf32> to vector<256x4xf32>
    %8 = arith.addf %5, %7 : vector<256x4xf32>
    %9 = math.exp %8 : vector<256x4xf32>
    %cst = arith.constant 1.000000e+00 : f32
    %10 = vector.broadcast %cst : f32 to vector<256x4xf32>
    %11 = arith.addf %10, %9 : vector<256x4xf32>
    %12 = arith.mulf %11, %11 : vector<256x4xf32>
    %cst_6 = arith.constant 1.000000e+00 : f32
    %13 = vector.broadcast %cst_6 : f32 to vector<256x4xf32>
    %14 = arith.addf %13, %12 : vector<256x4xf32>
    %cst_7 = arith.constant 2.000000e+00 : f32
    %15 = vector.broadcast %cst_7 : f32 to vector<256x4xf32>
    %16 = arith.mulf %15, %8 : vector<256x4xf32>
    %17 = tpu.reciprocal %14 {approx = true} : vector<256x4xf32> -> vector<256x4xf32>
    %18 = arith.mulf %16, %17 : vector<256x4xf32>
    %19 = arith.subf %8, %18 : vector<256x4xf32>
    %c0_8 = arith.constant 0 : index
    %c0_9 = arith.constant 0 : index
    %c0_10 = arith.constant 0 : index
    %20 = vector.load %arg4[%c0_8, %c0_9, %c0_10] : memref<1x256x4xf32, #tpu.memory_space<vmem>>, vector<1x256x4xf32>
    %21 = vector.shape_cast %20 : vector<1x256x4xf32> to vector<256x4xf32>
    %22 = vector.shape_cast %19 : vector<256x4xf32> to vector<1x256x4xf32>
    tpu.vector_store %arg4[%c0_8, %c0_9, %c0_10], %22 {strides = array<i32>} : memref<1x256x4xf32, #tpu.memory_space<vmem>>, vector<1x256x4xf32>,
    return
  }
  func.func @transform_0(%arg0: i32) -> (i32, i32, i32) {
    %c0_i32 = arith.constant 0 : i32
    %c0_i32_0 = arith.constant 0 : i32
    %c0_i32_1 = arith.constant 0 : i32
    return %arg0, %c0_i32, %c0_i32_0 : i32, i32, i32
  }
  func.func @transform_1(%arg0: i32) -> (i32, i32) {
    %c0_i32 = arith.constant 0 : i32
    %c0_i32_0 = arith.constant 0 : i32
    %c0_i32_1 = arith.constant 0 : i32
    return %c0_i32, %c0_i32_0 : i32, i32
  }
  func.func @transform_2(%arg0: i32) -> (i32, i32) {
    %c0_i32 = arith.constant 0 : i32
    %c0_i32_0 = arith.constant 0 : i32
    %c0_i32_1 = arith.constant 0 : i32
    return %c0_i32, %c0_i32_0 : i32, i32
  }
  func.func @transform_3(%arg0: i32) -> (i32, i32, i32) {
    %c0_i32 = arith.constant 0 : i32
    %c0_i32_0 = arith.constant 0 : i32
    %c0_i32_1 = arith.constant 0 : i32
    return %arg0, %c0_i32, %c0_i32_0 : i32, i32, i32
  }
}

</mosaic_0001>

<llo_original>
// kernel: spp_forward.3
$region0: #{spp_forward.3}
  #allocation0 [shape = 'u32[]', space=smem, size = 0x4, offset = 0x4, fixed_abs, tag = 'smem constant byte address 0x4 - core index']
  #allocation1 [shape = 'u32[144,128]{1,0:T(1,128)}', space=vmem, size = 0x12000, scoped, tag = 'internal scratch']
  %s0 = inlined_call_operand.vmem [shape: bf16[2,256,4], index: 0, kind: input, shape index: {}]
  %s1 = inlined_call_operand.vmem [shape: f32[1,4], index: 1, kind: input, shape index: {}]
  %s2 = inlined_call_operand.vmem [shape: f32[1,4], index: 2, kind: input, shape index: {}]
  %s3 = inlined_call_operand.vmem [shape: f32[2,256,4], index: 3, kind: output, shape index: {}]
  %s4 = sld [smem:[#allocation0]]
  $region45: #{spp_forward.3} parent=0
    _
  %s6 = ssub.s32 1, %s4
  %s7 = scalar_select 0, %s6, %s4
  loop: start=0, step=1, limit=4
  $region2: #{spp_forward.3} parent=0 // loop_pre_header
    _
  $region3: #{spp_forward.3} parent=0 // loop_header
    %s9 = sphi 0, %s13
    %p10 = scmp.ge.s32.totalorder %s9, 4
    %s19 = sphi 0, %s21
    %s22 = sphi 0, %s19
    %s23 = sphi 0, %s22
    %s39 = sphi 0, %s23
    %s43 = sphi 0, %s43
    %s45 = sphi 0, %s43
    %s46 = sphi 0, %s45
    %s60 = sphi 0, %s46
    %s64 = sphi 0, %s64
    %s66 = sphi 0, %s64
    %s67 = sphi 0, %s66
    %s81 = sphi 0, %s67
    %s87 = sphi 0, %s89
    %s90 = sphi 0, %s87
    %s91 = sphi 0, %s90
    %s107 = sphi 0, %s91
  $region4: #{spp_forward.3} parent=0 // loop_header_branch
    %12 = sbr.rel (%p10) target = $region8
  $region5: #{spp_forward.3} parent=0 // loop_body
    %s14 = ssub.s32 %s9, 1
    %s15 = ssub.s32 %s9, 2
    %s16 = sadd.s32 %s9, 1
    %s17 = ssub.s32 %s9, %s16
    %p18 = scmp.eq.s32.totalorder %s17, 0
    %s20 = sadd.s32 %s19, 1
    %s21 = scalar_select %p18, %s19, %s20
    %p24 = pneg %p18
    %p25 = scmp.eq.s32.totalorder %s9, 1
    %p26 = por %p24, %p25
    %p27 = scmp.ne.s32.totalorder %s19, %s22
    %p28 = scmp.eq.s32.totalorder %s9, 0
    %p29 = por %p27, %p28
    %p30 = scmp.ne.s32.totalorder %s19, %s22
    %p31 = scmp.eq.s32.totalorder %s14, 1
    %p32 = por %p30, %p31
    %p33 = scmp.ne.s32.totalorder %s22, %s23
    %p34 = scmp.eq.s32.totalorder %s14, 0
    %p35 = por %p33, %p34
    %p36 = scmp.ne.s32.totalorder %s22, %s23
    %p37 = scmp.eq.s32.totalorder %s15, 1
    %p38 = por %p36, %p37
    %p40 = scmp.ne.s32.totalorder %s23, %s39
    %p41 = scmp.eq.s32.totalorder %s15, 0
    %p42 = por %p40, %p41
    %s44 = sadd.s32 %s43, 1
    %p47 = scmp.eq.s32.totalorder %s9, 1
    %p48 = scmp.ne.s32.totalorder %s43, %s45
    %p49 = scmp.eq.s32.totalorder %s9, 0
    %p50 = por %p48, %p49
    %p51 = scmp.ne.s32.totalorder %s43, %s45
    %p52 = scmp.eq.s32.totalorder %s14, 1
    %p53 = por %p51, %p52
    %p54 = scmp.ne.s32.totalorder %s45, %s46
    %p55 = scmp.eq.s32.totalorder %s14, 0
    %p56 = por %p54, %p55
    %p57 = scmp.ne.s32.totalorder %s45, %s46
    %p58 = scmp.eq.s32.totalorder %s15, 1
    %p59 = por %p57, %p58
    %p61 = scmp.ne.s32.totalorder %s46, %s60
    %p62 = scmp.eq.s32.totalorder %s15, 0
    %p63 = por %p61, %p62
    %s65 = sadd.s32 %s64, 1
    %p68 = scmp.eq.s32.totalorder %s9, 1
    %p69 = scmp.ne.s32.totalorder %s64, %s66
    %p70 = scmp.eq.s32.totalorder %s9, 0
    %p71 = por %p69, %p70
    %p72 = scmp.ne.s32.totalorder %s64, %s66
    %p73 = scmp.eq.s32.totalorder %s14, 1
    %p74 = por %p72, %p73
    %p75 = scmp.ne.s32.totalorder %s66, %s67
    %p76 = scmp.eq.s32.totalorder %s14, 0
    %p77 = por %p75, %p76
    %p78 = scmp.ne.s32.totalorder %s66, %s67
    %p79 = scmp.eq.s32.totalorder %s15, 1
    %p80 = por %p78, %p79
    %p82 = scmp.ne.s32.totalorder %s67, %s81
    %p83 = scmp.eq.s32.totalorder %s15, 0
    %p84 = por %p82, %p83
    %s85 = ssub.s32 %s9, %s16
    %p86 = scmp.eq.s32.totalorder %s85, 0
    %s88 = sadd.s32 %s87, 1
    %s89 = scalar_select %p86, %s87, %s88
    %p92 = pneg %p86
    %p93 = scmp.eq.s32.totalorder %s9, 1
    %p94 = por %p92, %p93
    %p95 = scmp.ne.s32.totalorder %s87, %s90
    %p96 = scmp.eq.s32.totalorder %s9, 0
    %p97 = por %p95, %p96
    %p98 = scmp.ne.s32.totalorder %s87, %s90
    %p99 = scmp.eq.s32.totalorder %s14, 1
    %p100 = por %p98, %p99
    %p101 = scmp.ne.s32.totalorder %s90, %s91
    %p102 = scmp.eq.s32.totalorder %s14, 0
    %p103 = por %p101, %p102
    %p104 = scmp.ne.s32.totalorder %s90, %s91
    %p105 = scmp.eq.s32.totalorder %s15, 1
    %p106 = por %p104, %p105
    %p108 = scmp.ne.s32.totalorder %s91, %s107
    %p109 = scmp.eq.s32.totalorder %s15, 0
    %p110 = por %p108, %p109
    %p111 = scmp.le.s32.totalorder 1, %s9
    %p112 = scmp.lt.s32.totalorder %s9, 3
    %p113 = pnand %p111, %p112
    %p114 = pneg %p113
    // Predicated region
    $region9: #{spp_forward.3} parent=5 // pred_check
      _
    $region10: #{spp_forward.3} parent=5 // pred_check_branch
      %116 = sbr.rel (%p113) target = $region12
    $region11: #{spp_forward.3} parent=5 // pred_region
      %s117 = ssub.s32 %s9, 1
      // Predicated region
      $region13: #{spp_forward.3} parent=11 // pred_check
        %p118 = pneg %p56
      $region14: #{spp_forward.3} parent=11 // pred_check_branch
        %120 = sbr.rel (%p118) target = $region16
      $region15: #{spp_forward.3} parent=11 // pred_region
        _
      $region16: #{spp_forward.3} parent=11 // pred_fallthru
        _
      // Predicated region
      $region17: #{spp_forward.3} parent=11 // pred_check
        %p121 = pneg %p77
      $region18: #{spp_forward.3} parent=11 // pred_check_branch
        %123 = sbr.rel (%p121) target = $region20
      $region19: #{spp_forward.3} parent=11 // pred_region
        _
      $region20: #{spp_forward.3} parent=11 // pred_fallthru
        _
    $region12: #{spp_forward.3} parent=5 // pred_fallthru
      _
    %p124 = scmp.lt.s32.totalorder %s9, 2
    // Predicated region
    $region21: #{spp_forward.3} parent=5 // pred_check
      %p125 = pneg %p124
    $region22: #{spp_forward.3} parent=5 // pred_check_branch
      %127 = sbr.rel (%p125) target = $region24
    $region23: #{spp_forward.3} parent=5 // pred_region
      // Predicated region
      $region25: #{spp_forward.3} parent=23 // pred_check
        %p128 = pneg %p29
      $region26: #{spp_forward.3} parent=23 // pred_check_branch
        %130 = sbr.rel (%p128) target = $region28
      $region27: #{spp_forward.3} parent=23 // pred_region
        %p131 = scmp.lt.s32.totalorder %s9, 1
        %s132 = scalar_select %p131, %s9, 1
        %s133 = smul.addr %s132, 32
        %s134 = smul.addr %s133, 4
        %s135 = scalar_lea.vmem %s0, %s134
      $region28: #{spp_forward.3} parent=23 // pred_fallthru
        _
    $region24: #{spp_forward.3} parent=5 // pred_fallthru
      _
    %p136 = scmp.le.s32.totalorder 1, %s9
    %p137 = scmp.lt.s32.totalorder %s9, 3
    %p138 = pnand %p136, %p137
    %p139 = pneg %p138
    // Predicated region
    $region29: #{spp_forward.3} parent=5 // pred_check
      _
    $region30: #{spp_forward.3} parent=5 // pred_check_branch
      %141 = sbr.rel (%p138) target = $region32
    $region31: #{spp_forward.3} parent=5 // pred_region
      %s142 = ssub.s32 %s9, 1
      %p143 = scmp.lt.s32.totalorder %s14, 1
      %s144 = scalar_select %p143, %s14, 1
      %s145 = smul.addr %s144, 32
      %s146 = smul.addr %s145, 4
      %s147 = scalar_lea.vmem %s0, %s146
      %p148 = pneg %p35
      %p149 = pneg %p32
      %p150 = pneg %p56
      %p151 = pneg %p53
      %p152 = pneg %p77
      %p153 = pneg %p74
      %p154 = pneg %p103
      %p155 = pneg %p100
      %p156 = scmp.lt.s32.totalorder %s14, 1
      %s157 = scalar_select %p156, %s14, 1
      %s158 = smul.addr %s157, 32
      %s159 = smul.addr %s158, 8
      %s160 = scalar_lea.vmem %s3, %s159
      %p161 = scmp.lt.s32.totalorder %s14, 1
      %s162 = scalar_select %p161, %s14, 1
      %s163 = smul.addr %s162, 32
      %s164 = smul.addr %s163, 4
      %s165 = scalar_lea.vmem %s0, %s164
      %p166 = scmp.lt.s32.totalorder %s14, 1
      %s167 = scalar_select %p166, %s14, 1
      %s168 = smul.addr %s167, 32
      %s169 = smul.addr %s168, 8
      %s170 = scalar_lea.vmem %s3, %s169
      %v171 = vld [vmem:[%s165] sm:$0xf]
      %v172 = vld [vmem:[%s165 + $0x4] sm:$0xf]
      %v173 = vld [vmem:[%s165 + $0x8] sm:$0xf]
      %v174 = vld [vmem:[%s165 + $0xc] sm:$0xf]
      %v175 = vld [vmem:[%s165 + $0x10] sm:$0xf]
      %v176 = vld [vmem:[%s165 + $0x14] sm:$0xf]
      %v177 = vld [vmem:[%s165 + $0x18] sm:$0xf]
      %v178 = vld [vmem:[%s165 + $0x1c] sm:$0xf]
      %v179 = vld [vmem:[%s165 + $0x20] sm:$0xf]
      %v180 = vld [vmem:[%s165 + $0x24] sm:$0xf]
      %v181 = vld [vmem:[%s165 + $0x28] sm:$0xf]
      %v182 = vld [vmem:[%s165 + $0x2c] sm:$0xf]
      %v183 = vld [vmem:[%s165 + $0x30] sm:$0xf]
      %v184 = vld [vmem:[%s165 + $0x34] sm:$0xf]
      %v185 = vld [vmem:[%s165 + $0x38] sm:$0xf]
      %v186 = vld [vmem:[%s165 + $0x3c] sm:$0xf]
      %v187 = vld [vmem:[%s165 + $0x40] sm:$0xf]
      %v188 = vld [vmem:[%s165 + $0x44] sm:$0xf]
      %v189 = vld [vmem:[%s165 + $0x48] sm:$0xf]
      %v190 = vld [vmem:[%s165 + $0x4c] sm:$0xf]
      %v191 = vld [vmem:[%s165 + $0x50] sm:$0xf]
      %v192 = vld [vmem:[%s165 + $0x54] sm:$0xf]
      %v193 = vld [vmem:[%s165 + $0x58] sm:$0xf]
      %v194 = vld [vmem:[%s165 + $0x5c] sm:$0xf]
      %v195 = vld [vmem:[%s165 + $0x60] sm:$0xf]
      %v196 = vld [vmem:[%s165 + $0x64] sm:$0xf]
      %v197 = vld [vmem:[%s165 + $0x68] sm:$0xf]
      %v198 = vld [vmem:[%s165 + $0x6c] sm:$0xf]
      %v199 = vld [vmem:[%s165 + $0x70] sm:$0xf]
      %v200 = vld [vmem:[%s165 + $0x74] sm:$0xf]
      %v201 = vld [vmem:[%s165 + $0x78] sm:$0xf]
      %v202 = vld [vmem:[%s165 + $0x7c] sm:$0xf]
      %v203 = vunpack.c.l.bf16 %v171
      %v204 = vunpack.c.l.bf16 %v172
      %v205 = vunpack.c.l.bf16 %v173
      %v206 = vunpack.c.l.bf16 %v174
      %v207 = vunpack.c.l.bf16 %v175
      %v208 = vunpack.c.l.bf16 %v176
      %v209 = vunpack.c.l.bf16 %v177
      %v210 = vunpack.c.l.bf16 %v178
      %v211 = vunpack.c.l.bf16 %v179
      %v212 = vunpack.c.l.bf16 %v180
      %v213 = vunpack.c.l.bf16 %v181
      %v214 = vunpack.c.l.bf16 %v182
      %v215 = vunpack.c.l.bf16 %v183
      %v216 = vunpack.c.l.bf16 %v184
      %v217 = vunpack.c.l.bf16 %v185
      %v218 = vunpack.c.l.bf16 %v186
      %v219 = vunpack.c.l.bf16 %v187
      %v220 = vunpack.c.l.bf16 %v188
      %v221 = vunpack.c.l.bf16 %v189
      %v222 = vunpack.c.l.bf16 %v190
      %v223 = vunpack.c.l.bf16 %v191
      %v224 = vunpack.c.l.bf16 %v192
      %v225 = vunpack.c.l.bf16 %v193
      %v226 = vunpack.c.l.bf16 %v194
      %v227 = vunpack.c.l.bf16 %v195
      %v228 = vunpack.c.l.bf16 %v196
      %v229 = vunpack.c.l.bf16 %v197
      %v230 = vunpack.c.l.bf16 %v198
      %v231 = vunpack.c.l.bf16 %v199
      %v232 = vunpack.c.l.bf16 %v200
      %v233 = vunpack.c.l.bf16 %v201
      %v234 = vunpack.c.l.bf16 %v202
      %v235 = vld [vmem:[%s1] sm:$0x1]
      %v237 = vlaneseq
      %v238 = vshrl.u32 %v237, 7
      %v239 = vsub.s32 0, %v238
      %v240 = vrot.slane %v235, %v239
      %v242 = vmul.f32 %v203, %v240
      %v243 = vmul.f32 %v204, %v240
      %v244 = vmul.f32 %v205, %v240
      %v245 = vmul.f32 %v206, %v240
      %v246 = vmul.f32 %v207, %v240
      %v247 = vmul.f32 %v208, %v240
      %v248 = vmul.f32 %v209, %v240
      %v249 = vmul.f32 %v210, %v240
      %v250 = vmul.f32 %v211, %v240
      %v251 = vmul.f32 %v212, %v240
      %v252 = vmul.f32 %v213, %v240
      %v253 = vmul.f32 %v214, %v240
      %v254 = vmul.f32 %v215, %v240
      %v255 = vmul.f32 %v216, %v240
      %v256 = vmul.f32 %v217, %v240
      %v257 = vmul.f32 %v218, %v240
      %v258 = vmul.f32 %v219, %v240
      %v259 = vmul.f32 %v220, %v240
      %v260 = vmul.f32 %v221, %v240
      %v261 = vmul.f32 %v222, %v240
      %v262 = vmul.f32 %v223, %v240
      %v263 = vmul.f32 %v224, %v240
      %v264 = vmul.f32 %v225, %v240
      %v265 = vmul.f32 %v226, %v240
      %v266 = vmul.f32 %v227, %v240
      %v267 = vmul.f32 %v228, %v240
      %v268 = vmul.f32 %v229, %v240
      %v269 = vmul.f32 %v230, %v240
      %v270 = vmul.f32 %v231, %v240
      %v271 = vmul.f32 %v232, %v240
      %v272 = vmul.f32 %v233, %v240
      %v273 = vmul.f32 %v234, %v240
      %v274 = vld [vmem:[%s2] sm:$0x1]
      %v276 = vlaneseq
      %v277 = vshrl.u32 %v276, 7
      %v278 = vsub.s32 0, %v277
      %v279 = vrot.slane %v274, %v278
      %v281 = vadd.f32 %v242, %v279
      %v282 = vadd.f32 %v243, %v279
      %v283 = vadd.f32 %v244, %v279
      %v284 = vadd.f32 %v245, %v279
      %v285 = vadd.f32 %v246, %v279
      %v286 = vadd.f32 %v247, %v279
      %v287 = vadd.f32 %v248, %v279
      %v288 = vadd.f32 %v249, %v279
      %v289 = vadd.f32 %v250, %v279
      %v290 = vadd.f32 %v251, %v279
      %v291 = vadd.f32 %v252, %v279
      %v292 = vadd.f32 %v253, %v279
      %v293 = vadd.f32 %v254, %v279
      %v294 = vadd.f32 %v255, %v279
      %v295 = vadd.f32 %v256, %v279
      %v296 = vadd.f32 %v257, %v279
      %v297 = vadd.f32 %v258, %v279
      %v298 = vadd.f32 %v259, %v279
      %v299 = vadd.f32 %v260, %v279
      %v300 = vadd.f32 %v261, %v279
      %v301 = vadd.f32 %v262, %v279
      %v302 = vadd.f32 %v263, %v279
      %v303 = vadd.f32 %v264, %v279
      %v304 = vadd.f32 %v265, %v279
      %v305 = vadd.f32 %v266, %v279
      %v306 = vadd.f32 %v267, %v279
      %v307 = vadd.f32 %v268, %v279
      %v308 = vadd.f32 %v269, %v279
      %v309 = vadd.f32 %v270, %v279
      %v310 = vadd.f32 %v271, %v279
      %v311 = vadd.f32 %v272, %v279
      %v312 = vadd.f32 %v273, %v279
      %v313 = vmul.f32 %v281, 1.442695
      %v314 = vpow.pop %v313
      %v315 = vmul.f32 %v282, 1.442695
      %v316 = vpow.pop %v315
      %v317 = vmul.f32 %v283, 1.442695
      %v318 = vpow.pop %v317
      %v319 = vmul.f32 %v284, 1.442695
      %v320 = vpow.pop %v319
      %v321 = vmul.f32 %v285, 1.442695
      %v322 = vpow.pop %v321
      %v323 = vmul.f32 %v286, 1.442695
      %v324 = vpow.pop %v323
      %v325 = vmul.f32 %v287, 1.442695
      %v326 = vpow.pop %v325
      %v327 = vmul.f32 %v288, 1.442695
      %v328 = vpow.pop %v327
      %v329 = vmul.f32 %v289, 1.442695
      %v330 = vpow.pop %v329
      %v331 = vmul.f32 %v290, 1.442695
      %v332 = vpow.pop %v331
      %v333 = vmul.f32 %v291, 1.442695
      %v334 = vpow.pop %v333
      %v335 = vmul.f32 %v292, 1.442695
      %v336 = vpow.pop %v335
      %v337 = vmul.f32 %v293, 1.442695
      %v338 = vpow.pop %v337
      %v339 = vmul.f32 %v294, 1.442695
      %v340 = vpow.pop %v339
      %v341 = vmul.f32 %v295, 1.442695
      %v342 = vpow.pop %v341
      %v343 = vmul.f32 %v296, 1.442695
      %v344 = vpow.pop %v343
      %v345 = vmul.f32 %v297, 1.442695
      %v346 = vpow.pop %v345
      %v347 = vmul.f32 %v298, 1.442695
      %v348 = vpow.pop %v347
      %v349 = vmul.f32 %v299, 1.442695
      %v350 = vpow.pop %v349
      %v351 = vmul.f32 %v300, 1.442695
      %v352 = vpow.pop %v351
      %v353 = vmul.f32 %v301, 1.442695
      %v354 = vpow.pop %v353
      %v355 = vmul.f32 %v302, 1.442695
      %v356 = vpow.pop %v355
      %v357 = vmul.f32 %v303, 1.442695
      %v358 = vpow.pop %v357
      %v359 = vmul.f32 %v304, 1.442695
      %v360 = vpow.pop %v359
      %v361 = vmul.f32 %v305, 1.442695
      %v362 = vpow.pop %v361
      %v363 = vmul.f32 %v306, 1.442695
      %v364 = vpow.pop %v363
      %v365 = vmul.f32 %v307, 1.442695
      %v366 = vpow.pop %v365
      %v367 = vmul.f32 %v308, 1.442695
      %v368 = vpow.pop %v367
      %v369 = vmul.f32 %v309, 1.442695
      %v370 = vpow.pop %v369
      %v371 = vmul.f32 %v310, 1.442695
      %v372 = vpow.pop %v371
      %v373 = vmul.f32 %v311, 1.442695
      %v374 = vpow.pop %v373
      %v375 = vmul.f32 %v312, 1.442695
      %v376 = vpow.pop %v375
      %v377 = vadd.f32 %v314, 1.0
      %v378 = vadd.f32 %v316, 1.0
      %v379 = vadd.f32 %v318, 1.0
      %v380 = vadd.f32 %v320, 1.0
      %v381 = vadd.f32 %v322, 1.0
      %v382 = vadd.f32 %v324, 1.0
      %v383 = vadd.f32 %v326, 1.0
      %v384 = vadd.f32 %v328, 1.0
      %v385 = vadd.f32 %v330, 1.0
      %v386 = vadd.f32 %v332, 1.0
      %v387 = vadd.f32 %v334, 1.0
      %v388 = vadd.f32 %v336, 1.0
      %v389 = vadd.f32 %v338, 1.0
      %v390 = vadd.f32 %v340, 1.0
      %v391 = vadd.f32 %v342, 1.0
      %v392 = vadd.f32 %v344, 1.0
      %v393 = vadd.f32 %v346, 1.0
      %v394 = vadd.f32 %v348, 1.0
      %v395 = vadd.f32 %v350, 1.0
      %v396 = vadd.f32 %v352, 1.0
      %v397 = vadd.f32 %v354, 1.0
      %v398 = vadd.f32 %v356, 1.0
      %v399 = vadd.f32 %v358, 1.0
      %v400 = vadd.f32 %v360, 1.0
      %v401 = vadd.f32 %v362, 1.0
      %v402 = vadd.f32 %v364, 1.0
      %v403 = vadd.f32 %v366, 1.0
      %v404 = vadd.f32 %v368, 1.0
      %v405 = vadd.f32 %v370, 1.0
      %v406 = vadd.f32 %v372, 1.0
      %v407 = vadd.f32 %v374, 1.0
      %v408 = vadd.f32 %v376, 1.0
      %v409 = vmul.f32 %v377, %v377
      %v410 = vmul.f32 %v378, %v378
      %v411 = vmul.f32 %v379, %v379
      %v412 = vmul.f32 %v380, %v380
      %v413 = vmul.f32 %v381, %v381
      %v414 = vmul.f32 %v382, %v382
      %v415 = vmul.f32 %v383, %v383
      %v416 = vmul.f32 %v384, %v384
      %v417 = vmul.f32 %v385, %v385
      %v418 = vmul.f32 %v386, %v386
      %v419 = vmul.f32 %v387, %v387
      %v420 = vmul.f32 %v388, %v388
      %v421 = vmul.f32 %v389, %v389
      %v422 = vmul.f32 %v390, %v390
      %v423 = vmul.f32 %v391, %v391
      %v424 = vmul.f32 %v392, %v392
      %v425 = vmul.f32 %v393, %v393
      %v426 = vmul.f32 %v394, %v394
      %v427 = vmul.f32 %v395, %v395
      %v428 = vmul.f32 %v396, %v396
      %v429 = vmul.f32 %v397, %v397
      %v430 = vmul.f32 %v398, %v398
      %v431 = vmul.f32 %v399, %v399
      %v432 = vmul.f32 %v400, %v400
      %v433 = vmul.f32 %v401, %v401
      %v434 = vmul.f32 %v402, %v402
      %v435 = vmul.f32 %v403, %v403
      %v436 = vmul.f32 %v404, %v404
      %v437 = vmul.f32 %v405, %v405
      %v438 = vmul.f32 %v406, %v406
      %v439 = vmul.f32 %v407, %v407
      %v440 = vmul.f32 %v408, %v408
      %v441 = vadd.f32 %v409, 1.0
      %v442 = vadd.f32 %v410, 1.0
      %v443 = vadd.f32 %v411, 1.0
      %v444 = vadd.f32 %v412, 1.0
      %v445 = vadd.f32 %v413, 1.0
      %v446 = vadd.f32 %v414, 1.0
      %v447 = vadd.f32 %v415, 1.0
      %v448 = vadd.f32 %v416, 1.0
      %v449 = vadd.f32 %v417, 1.0
      %v450 = vadd.f32 %v418, 1.0
      %v451 = vadd.f32 %v419, 1.0
      %v452 = vadd.f32 %v420, 1.0
      %v453 = vadd.f32 %v421, 1.0
      %v454 = vadd.f32 %v422, 1.0
      %v455 = vadd.f32 %v423, 1.0
      %v456 = vadd.f32 %v424, 1.0
      %v457 = vadd.f32 %v425, 1.0
      %v458 = vadd.f32 %v426, 1.0
      %v459 = vadd.f32 %v427, 1.0
      %v460 = vadd.f32 %v428, 1.0
      %v461 = vadd.f32 %v429, 1.0
      %v462 = vadd.f32 %v430, 1.0
      %v463 = vadd.f32 %v431, 1.0
      %v464 = vadd.f32 %v432, 1.0
      %v465 = vadd.f32 %v433, 1.0
      %v466 = vadd.f32 %v434, 1.0
      %v467 = vadd.f32 %v435, 1.0
      %v468 = vadd.f32 %v436, 1.0
      %v469 = vadd.f32 %v437, 1.0
      %v470 = vadd.f32 %v438, 1.0
      %v471 = vadd.f32 %v439, 1.0
      %v472 = vadd.f32 %v440, 1.0
      %v473 = vmul.f32 %v281, 2.0
      %v474 = vmul.f32 %v282, 2.0
      %v475 = vmul.f32 %v283, 2.0
      %v476 = vmul.f32 %v284, 2.0
      %v477 = vmul.f32 %v285, 2.0
      %v478 = vmul.f32 %v286, 2.0
      %v479 = vmul.f32 %v287, 2.0
      %v480 = vmul.f32 %v288, 2.0
      %v481 = vmul.f32 %v289, 2.0
      %v482 = vmul.f32 %v290, 2.0
      %v483 = vmul.f32 %v291, 2.0
      %v484 = vmul.f32 %v292, 2.0
      %v485 = vmul.f32 %v293, 2.0
      %v486 = vmul.f32 %v294, 2.0
      %v487 = vmul.f32 %v295, 2.0
      %v488 = vmul.f32 %v296, 2.0
      %v489 = vmul.f32 %v297, 2.0
      %v490 = vmul.f32 %v298, 2.0
      %v491 = vmul.f32 %v299, 2.0
      %v492 = vmul.f32 %v300, 2.0
      %v493 = vmul.f32 %v301, 2.0
      %v494 = vmul.f32 %v302, 2.0
      %v495 = vmul.f32 %v303, 2.0
      %v496 = vmul.f32 %v304, 2.0
      %v497 = vmul.f32 %v305, 2.0
      %v498 = vmul.f32 %v306, 2.0
      %v499 = vmul.f32 %v307, 2.0
      %v500 = vmul.f32 %v308, 2.0
      %v501 = vmul.f32 %v309, 2.0
      %v502 = vmul.f32 %v310, 2.0
      %v503 = vmul.f32 %v311, 2.0
      %v504 = vmul.f32 %v312, 2.0
      %v505 = vrcp.pop %v441
      %v506 = vrcp.pop %v442
      %v507 = vrcp.pop %v443
      %v508 = vrcp.pop %v444
      %v509 = vrcp.pop %v445
      %v510 = vrcp.pop %v446
      %v511 = vrcp.pop %v447
      %v512 = vrcp.pop %v448
      %v513 = vrcp.pop %v449
      %v514 = vrcp.pop %v450
      %v515 = vrcp.pop %v451
      %v516 = vrcp.pop %v452
      %v517 = vrcp.pop %v453
      %v518 = vrcp.pop %v454
      %v519 = vrcp.pop %v455
      %v520 = vrcp.pop %v456
      %v521 = vrcp.pop %v457
      %v522 = vrcp.pop %v458
      %v523 = vrcp.pop %v459
      %v524 = vrcp.pop %v460
      %v525 = vrcp.pop %v461
      %v526 = vrcp.pop %v462
      %v527 = vrcp.pop %v463
      %v528 = vrcp.pop %v464
      %v529 = vrcp.pop %v465
      %v530 = vrcp.pop %v466
      %v531 = vrcp.pop %v467
      %v532 = vrcp.pop %v468
      %v533 = vrcp.pop %v469
      %v534 = vrcp.pop %v470
      %v535 = vrcp.pop %v471
      %v536 = vrcp.pop %v472
      %v537 = vmul.f32 %v473, %v505
      %v538 = vmul.f32 %v474, %v506
      %v539 = vmul.f32 %v475, %v507
      %v540 = vmul.f32 %v476, %v508
      %v541 = vmul.f32 %v477, %v509
      %v542 = vmul.f32 %v478, %v510
      %v543 = vmul.f32 %v479, %v511
      %v544 = vmul.f32 %v480, %v512
      %v545 = vmul.f32 %v481, %v513
      %v546 = vmul.f32 %v482, %v514
      %v547 = vmul.f32 %v483, %v515
      %v548 = vmul.f32 %v484, %v516
      %v549 = vmul.f32 %v485, %v517
      %v550 = vmul.f32 %v486, %v518
      %v551 = vmul.f32 %v487, %v519
      %v552 = vmul.f32 %v488, %v520
      %v553 = vmul.f32 %v489, %v521
      %v554 = vmul.f32 %v490, %v522
      %v555 = vmul.f32 %v491, %v523
      %v556 = vmul.f32 %v492, %v524
      %v557 = vmul.f32 %v493, %v525
      %v558 = vmul.f32 %v494, %v526
      %v559 = vmul.f32 %v495, %v527
      %v560 = vmul.f32 %v496, %v528
      %v561 = vmul.f32 %v497, %v529
      %v562 = vmul.f32 %v498, %v530
      %v563 = vmul.f32 %v499, %v531
      %v564 = vmul.f32 %v500, %v532
      %v565 = vmul.f32 %v501, %v533
      %v566 = vmul.f32 %v502, %v534
      %v567 = vmul.f32 %v503, %v535
      %v568 = vmul.f32 %v504, %v536
      %v569 = vsub.f32 %v281, %v537
      %v570 = vsub.f32 %v282, %v538
      %v571 = vsub.f32 %v283, %v539
      %v572 = vsub.f32 %v284, %v540
      %v573 = vsub.f32 %v285, %v541
      %v574 = vsub.f32 %v286, %v542
      %v575 = vsub.f32 %v287, %v543
      %v576 = vsub.f32 %v288, %v544
      %v577 = vsub.f32 %v289, %v545
      %v578 = vsub.f32 %v290, %v546
      %v579 = vsub.f32 %v291, %v547
      %v580 = vsub.f32 %v292, %v548
      %v581 = vsub.f32 %v293, %v549
      %v582 = vsub.f32 %v294, %v550
      %v583 = vsub.f32 %v295, %v551
      %v584 = vsub.f32 %v296, %v552
      %v585 = vsub.f32 %v297, %v553
      %v586 = vsub.f32 %v298, %v554
      %v587 = vsub.f32 %v299, %v555
      %v588 = vsub.f32 %v300, %v556
      %v589 = vsub.f32 %v301, %v557
      %v590 = vsub.f32 %v302, %v558
      %v591 = vsub.f32 %v303, %v559
      %v592 = vsub.f32 %v304, %v560
      %v593 = vsub.f32 %v305, %v561
      %v594 = vsub.f32 %v306, %v562
      %v595 = vsub.f32 %v307, %v563
      %v596 = vsub.f32 %v308, %v564
      %v597 = vsub.f32 %v309, %v565
      %v598 = vsub.f32 %v310, %v566
      %v599 = vsub.f32 %v311, %v567
      %v600 = vsub.f32 %v312, %v568
      %vm601 = vcmask 31744
      %602 = vst.msk [vmem:[%s170] sm:$0xff] %vm601, %v569
      %603 = vst.msk [vmem:[%s170 + $0x8] sm:$0xff] %vm601, %v570
      %604 = vst.msk [vmem:[%s170 + $0x10] sm:$0xff] %vm601, %v571
      %605 = vst.msk [vmem:[%s170 + $0x18] sm:$0xff] %vm601, %v572
      %606 = vst.msk [vmem:[%s170 + $0x20] sm:$0xff] %vm601, %v573
      %607 = vst.msk [vmem:[%s170 + $0x28] sm:$0xff] %vm601, %v574
      %608 = vst.msk [vmem:[%s170 + $0x30] sm:$0xff] %vm601, %v575
      %609 = vst.msk [vmem:[%s170 + $0x38] sm:$0xff] %vm601, %v576
      %610 = vst.msk [vmem:[%s170 + $0x40] sm:$0xff] %vm601, %v577
      %611 = vst.msk [vmem:[%s170 + $0x48] sm:$0xff] %vm601, %v578
      %612 = vst.msk [vmem:[%s170 + $0x50] sm:$0xff] %vm601, %v579
      %613 = vst.msk [vmem:[%s170 + $0x58] sm:$0xff] %vm601, %v580
      %614 = vst.msk [vmem:[%s170 + $0x60] sm:$0xff] %vm601, %v581
      %615 = vst.msk [vmem:[%s170 + $0x68] sm:$0xff] %vm601, %v582
      %616 = vst.msk [vmem:[%s170 + $0x70] sm:$0xff] %vm601, %v583
      %617 = vst.msk [vmem:[%s170 + $0x78] sm:$0xff] %vm601, %v584
      %618 = vst.msk [vmem:[%s170 + $0x80] sm:$0xff] %vm601, %v585
      %619 = vst.msk [vmem:[%s170 + $0x88] sm:$0xff] %vm601, %v586
      %620 = vst.msk [vmem:[%s170 + $0x90] sm:$0xff] %vm601, %v587
      %621 = vst.msk [vmem:[%s170 + $0x98] sm:$0xff] %vm601, %v588
      %622 = vst.msk [vmem:[%s170 + $0xa0] sm:$0xff] %vm601, %v589
      %623 = vst.msk [vmem:[%s170 + $0xa8] sm:$0xff] %vm601, %v590
      %624 = vst.msk [vmem:[%s170 + $0xb0] sm:$0xff] %vm601, %v591
      %625 = vst.msk [vmem:[%s170 + $0xb8] sm:$0xff] %vm601, %v592
      %626 = vst.msk [vmem:[%s170 + $0xc0] sm:$0xff] %vm601, %v593
      %627 = vst.msk [vmem:[%s170 + $0xc8] sm:$0xff] %vm601, %v594
      %628 = vst.msk [vmem:[%s170 + $0xd0] sm:$0xff] %vm601, %v595
      %629 = vst.msk [vmem:[%s170 + $0xd8] sm:$0xff] %vm601, %v596
      %630 = vst.msk [vmem:[%s170 + $0xe0] sm:$0xff] %vm601, %v597
      %631 = vst.msk [vmem:[%s170 + $0xe8] sm:$0xff] %vm601, %v598
      %632 = vst.msk [vmem:[%s170 + $0xf0] sm:$0xff] %vm601, %v599
      %633 = vst.msk [vmem:[%s170 + $0xf8] sm:$0xff] %vm601, %v600
      %p634 = scmp.lt.s32.totalorder %s14, 1
      %s635 = scalar_select %p634, %s14, 1
      %s636 = smul.addr %s635, 32
      %s637 = smul.addr %s636, 8
      %s638 = scalar_lea.vmem %s3, %s637
      // Predicated region
      $region33: #{spp_forward.3} parent=31 // pred_check
        %p639 = pneg %p100
      $region34: #{spp_forward.3} parent=31 // pred_check_branch
        %641 = sbr.rel (%p639) target = $region36
      $region35: #{spp_forward.3} parent=31 // pred_region
        _
      $region36: #{spp_forward.3} parent=31 // pred_fallthru
        _
    $region32: #{spp_forward.3} parent=5 // pred_fallthru
      _
    %p642 = scmp.le.s32.totalorder 2, %s9
    // Predicated region
    $region37: #{spp_forward.3} parent=5 // pred_check
      %p643 = pneg %p642
    $region38: #{spp_forward.3} parent=5 // pred_check_branch
      %645 = sbr.rel (%p643) target = $region40
    $region39: #{spp_forward.3} parent=5 // pred_region
      %s646 = ssub.s32 %s9, 2
      // Predicated region
      $region41: #{spp_forward.3} parent=39 // pred_check
        %p647 = pneg %p106
      $region42: #{spp_forward.3} parent=39 // pred_check_branch
        %649 = sbr.rel (%p647) target = $region44
      $region43: #{spp_forward.3} parent=39 // pred_region
        %p650 = scmp.lt.s32.totalorder %s15, 1
        %s651 = scalar_select %p650, %s15, 1
        %s652 = smul.addr %s651, 32
        %s653 = smul.addr %s652, 8
        %s654 = scalar_lea.vmem %s3, %s653
      $region44: #{spp_forward.3} parent=39 // pred_fallthru
        _
    $region40: #{spp_forward.3} parent=5 // pred_fallthru
      _
  $region6: #{spp_forward.3} parent=0 // loop_footer
    %s13 = sadd.s32 1, %s9
  $region7: #{spp_forward.3} parent=0 // loop_footer_branch
    %8 = sbr.rel target = $region3
  $region8: #{spp_forward.3} parent=0 // loop_exit
    _

// kernel: spp_forward.2
$region0: #{spp_forward.2}
  #allocation0 [shape = 'u32[]', space=smem, size = 0x4, offset = 0x4, fixed_abs, tag = 'smem constant byte address 0x4 - core index']
  #allocation1 [shape = 'u32[144,128]{1,0:T(1,128)}', space=vmem, size = 0x12000, scoped, tag = 'internal scratch']
  #allocation2 [shape = 'f32[20,16,4]{2,1,0:T(8,128)}', space=vmem, size = 0x28000, scoped, tag = 'scratch operand']
  #allocation3 [shape = 'f32[256,4]{1,0:T(8,128)}', space=vmem, size = 0x20000, scoped, tag = 'scratch operand']
  %s0 = inlined_call_operand.vmem [shape: bf16[2,16,16,4], index: 0, kind: input, shape index: {}]
  %s1 = inlined_call_operand.vmem [shape: bf16[4,4,4], index: 1, kind: input, shape index: {}]
  %s2 = inlined_call_operand.vmem [shape: f32[1,4], index: 2, kind: input, shape index: {}]
  %s3 = inlined_call_operand.vmem [shape: bf16[2,256,4], index: 3, kind: output, shape index: {0}]
  %s4 = inlined_call_operand.vmem [shape: f32[2,1,4], index: 4, kind: output, shape index: {1}]
  %s5 = inlined_call_operand.vmem [shape: f32[2,1,4], index: 5, kind: output, shape index: {2}]
  %6 = xla_tuple %s3, %s4, %s5
  %s7 = sld [smem:[#allocation0]]
  $region61: #{spp_forward.2} parent=0
    _
  %s9 = ssub.s32 1, %s7
  %s10 = scalar_select 0, %s9, %s7
  loop: start=0, step=1, limit=4
  $region2: #{spp_forward.2} parent=0 // loop_pre_header
    _
  $region3: #{spp_forward.2} parent=0 // loop_header
    %s12 = sphi 0, %s16
    %p13 = scmp.ge.s32.totalorder %s12, 4
    %s22 = sphi 0, %s24
    %s25 = sphi 0, %s22
    %s26 = sphi 0, %s25
    %s42 = sphi 0, %s26
    %s46 = sphi 0, %s46
    %s48 = sphi 0, %s46
    %s49 = sphi 0, %s48
    %s63 = sphi 0, %s49
    %s67 = sphi 0, %s67
    %s69 = sphi 0, %s67
    %s70 = sphi 0, %s69
    %s84 = sphi 0, %s70
    %s90 = sphi 0, %s92
    %s93 = sphi 0, %s90
    %s94 = sphi 0, %s93
    %s110 = sphi 0, %s94
    %s116 = sphi 0, %s118
    %s119 = sphi 0, %s116
    %s120 = sphi 0, %s119
    %s136 = sphi 0, %s120
    %s142 = sphi 0, %s144
    %s145 = sphi 0, %s142
    %s146 = sphi 0, %s145
    %s162 = sphi 0, %s146
  $region4: #{spp_forward.2} parent=0 // loop_header_branch
    %15 = sbr.rel (%p13) target = $region8
  $region5: #{spp_forward.2} parent=0 // loop_body
    %s17 = ssub.s32 %s12, 1
    %s18 = ssub.s32 %s12, 2
    %s19 = sadd.s32 %s12, 1
    %s20 = ssub.s32 %s12, %s19
    %p21 = scmp.eq.s32.totalorder %s20, 0
    %s23 = sadd.s32 %s22, 1
    %s24 = scalar_select %p21, %s22, %s23
    %p27 = pneg %p21
    %p28 = scmp.eq.s32.totalorder %s12, 1
    %p29 = por %p27, %p28
    %p30 = scmp.ne.s32.totalorder %s22, %s25
    %p31 = scmp.eq.s32.totalorder %s12, 0
    %p32 = por %p30, %p31
    %p33 = scmp.ne.s32.totalorder %s22, %s25
    %p34 = scmp.eq.s32.totalorder %s17, 1
    %p35 = por %p33, %p34
    %p36 = scmp.ne.s32.totalorder %s25, %s26
    %p37 = scmp.eq.s32.totalorder %s17, 0
    %p38 = por %p36, %p37
    %p39 = scmp.ne.s32.totalorder %s25, %s26
    %p40 = scmp.eq.s32.totalorder %s18, 1
    %p41 = por %p39, %p40
    %p43 = scmp.ne.s32.totalorder %s26, %s42
    %p44 = scmp.eq.s32.totalorder %s18, 0
    %p45 = por %p43, %p44
    %s47 = sadd.s32 %s46, 1
    %p50 = scmp.eq.s32.totalorder %s12, 1
    %p51 = scmp.ne.s32.totalorder %s46, %s48
    %p52 = scmp.eq.s32.totalorder %s12, 0
    %p53 = por %p51, %p52
    %p54 = scmp.ne.s32.totalorder %s46, %s48
    %p55 = scmp.eq.s32.totalorder %s17, 1
    %p56 = por %p54, %p55
    %p57 = scmp.ne.s32.totalorder %s48, %s49
    %p58 = scmp.eq.s32.totalorder %s17, 0
    %p59 = por %p57, %p58
    %p60 = scmp.ne.s32.totalorder %s48, %s49
    %p61 = scmp.eq.s32.totalorder %s18, 1
    %p62 = por %p60, %p61
    %p64 = scmp.ne.s32.totalorder %s49, %s63
    %p65 = scmp.eq.s32.totalorder %s18, 0
    %p66 = por %p64, %p65
    %s68 = sadd.s32 %s67, 1
    %p71 = scmp.eq.s32.totalorder %s12, 1
    %p72 = scmp.ne.s32.totalorder %s67, %s69
    %p73 = scmp.eq.s32.totalorder %s12, 0
    %p74 = por %p72, %p73
    %p75 = scmp.ne.s32.totalorder %s67, %s69
    %p76 = scmp.eq.s32.totalorder %s17, 1
    %p77 = por %p75, %p76
    %p78 = scmp.ne.s32.totalorder %s69, %s70
    %p79 = scmp.eq.s32.totalorder %s17, 0
    %p80 = por %p78, %p79
    %p81 = scmp.ne.s32.totalorder %s69, %s70
    %p82 = scmp.eq.s32.totalorder %s18, 1
    %p83 = por %p81, %p82
    %p85 = scmp.ne.s32.totalorder %s70, %s84
    %p86 = scmp.eq.s32.totalorder %s18, 0
    %p87 = por %p85, %p86
    %s88 = ssub.s32 %s12, %s19
    %p89 = scmp.eq.s32.totalorder %s88, 0
    %s91 = sadd.s32 %s90, 1
    %s92 = scalar_select %p89, %s90, %s91
    %p95 = pneg %p89
    %p96 = scmp.eq.s32.totalorder %s12, 1
    %p97 = por %p95, %p96
    %p98 = scmp.ne.s32.totalorder %s90, %s93
    %p99 = scmp.eq.s32.totalorder %s12, 0
    %p100 = por %p98, %p99
    %p101 = scmp.ne.s32.totalorder %s90, %s93
    %p102 = scmp.eq.s32.totalorder %s17, 1
    %p103 = por %p101, %p102
    %p104 = scmp.ne.s32.totalorder %s93, %s94
    %p105 = scmp.eq.s32.totalorder %s17, 0
    %p106 = por %p104, %p105
    %p107 = scmp.ne.s32.totalorder %s93, %s94
    %p108 = scmp.eq.s32.totalorder %s18, 1
    %p109 = por %p107, %p108
    %p111 = scmp.ne.s32.totalorder %s94, %s110
    %p112 = scmp.eq.s32.totalorder %s18, 0
    %p113 = por %p111, %p112
    %s114 = ssub.s32 %s12, %s19
    %p115 = scmp.eq.s32.totalorder %s114, 0
    %s117 = sadd.s32 %s116, 1
    %s118 = scalar_select %p115, %s116, %s117
    %p121 = pneg %p115
    %p122 = scmp.eq.s32.totalorder %s12, 1
    %p123 = por %p121, %p122
    %p124 = scmp.ne.s32.totalorder %s116, %s119
    %p125 = scmp.eq.s32.totalorder %s12, 0
    %p126 = por %p124, %p125
    %p127 = scmp.ne.s32.totalorder %s116, %s119
    %p128 = scmp.eq.s32.totalorder %s17, 1
    %p129 = por %p127, %p128
    %p130 = scmp.ne.s32.totalorder %s119, %s120
    %p131 = scmp.eq.s32.totalorder %s17, 0
    %p132 = por %p130, %p131
    %p133 = scmp.ne.s32.totalorder %s119, %s120
    %p134 = scmp.eq.s32.totalorder %s18, 1
    %p135 = por %p133, %p134
    %p137 = scmp.ne.s32.totalorder %s120, %s136
    %p138 = scmp.eq.s32.totalorder %s18, 0
    %p139 = por %p137, %p138
    %s140 = ssub.s32 %s12, %s19
    %p141 = scmp.eq.s32.totalorder %s140, 0
    %s143 = sadd.s32 %s142, 1
    %s144 = scalar_select %p141, %s142, %s143
    %p147 = pneg %p141
    %p148 = scmp.eq.s32.totalorder %s12, 1
    %p149 = por %p147, %p148
    %p150 = scmp.ne.s32.totalorder %s142, %s145
    %p151 = scmp.eq.s32.totalorder %s12, 0
    %p152 = por %p150, %p151
    %p153 = scmp.ne.s32.totalorder %s142, %s145
    %p154 = scmp.eq.s32.totalorder %s17, 1
    %p155 = por %p153, %p154
    %p156 = scmp.ne.s32.totalorder %s145, %s146
    %p157 = scmp.eq.s32.totalorder %s17, 0
    %p158 = por %p156, %p157
    %p159 = scmp.ne.s32.totalorder %s145, %s146
    %p160 = scmp.eq.s32.totalorder %s18, 1
    %p161 = por %p159, %p160
    %p163 = scmp.ne.s32.totalorder %s146, %s162
    %p164 = scmp.eq.s32.totalorder %s18, 0
    %p165 = por %p163, %p164
    %p166 = scmp.le.s32.totalorder 1, %s12
    %p167 = scmp.lt.s32.totalorder %s12, 3
    %p168 = pnand %p166, %p167
    %p169 = pneg %p168
    // Predicated region
    $region9: #{spp_forward.2} parent=5 // pred_check
      _
    $region10: #{spp_forward.2} parent=5 // pred_check_branch
      %171 = sbr.rel (%p168) target = $region12
    $region11: #{spp_forward.2} parent=5 // pred_region
      %s172 = ssub.s32 %s12, 1
      // Predicated region
      $region13: #{spp_forward.2} parent=11 // pred_check
        %p173 = pneg %p59
      $region14: #{spp_forward.2} parent=11 // pred_check_branch
        %175 = sbr.rel (%p173) target = $region16
      $region15: #{spp_forward.2} parent=11 // pred_region
        _
      $region16: #{spp_forward.2} parent=11 // pred_fallthru
        _
      // Predicated region
      $region17: #{spp_forward.2} parent=11 // pred_check
        %p176 = pneg %p80
      $region18: #{spp_forward.2} parent=11 // pred_check_branch
        %178 = sbr.rel (%p176) target = $region20
      $region19: #{spp_forward.2} parent=11 // pred_region
        _
      $region20: #{spp_forward.2} parent=11 // pred_fallthru
        _
    $region12: #{spp_forward.2} parent=5 // pred_fallthru
      _
    %p179 = scmp.lt.s32.totalorder %s12, 2
    // Predicated region
    $region21: #{spp_forward.2} parent=5 // pred_check
      %p180 = pneg %p179
    $region22: #{spp_forward.2} parent=5 // pred_check_branch
      %182 = sbr.rel (%p180) target = $region24
    $region23: #{spp_forward.2} parent=5 // pred_region
      // Predicated region
      $region25: #{spp_forward.2} parent=23 // pred_check
        %p183 = pneg %p32
      $region26: #{spp_forward.2} parent=23 // pred_check_branch
        %185 = sbr.rel (%p183) target = $region28
      $region27: #{spp_forward.2} parent=23 // pred_region
        %p186 = scmp.lt.s32.totalorder %s12, 1
        %s187 = scalar_select %p186, %s12, 1
        %s188 = smul.addr %s187, 32
        %s189 = smul.addr %s188, 4
        %s190 = scalar_lea.vmem %s0, %s189
      $region28: #{spp_forward.2} parent=23 // pred_fallthru
        _
    $region24: #{spp_forward.2} parent=5 // pred_fallthru
      _
    %p191 = scmp.le.s32.totalorder 1, %s12
    %p192 = scmp.lt.s32.totalorder %s12, 3
    %p193 = pnand %p191, %p192
    %p194 = pneg %p193
    // Predicated region
    $region29: #{spp_forward.2} parent=5 // pred_check
      _
    $region30: #{spp_forward.2} parent=5 // pred_check_branch
      %196 = sbr.rel (%p193) target = $region32
    $region31: #{spp_forward.2} parent=5 // pred_region
      %s197 = ssub.s32 %s12, 1
      %p198 = scmp.lt.s32.totalorder %s17, 1
      %s199 = scalar_select %p198, %s17, 1
      %s200 = smul.addr %s199, 32
      %s201 = smul.addr %s200, 4
      %s202 = scalar_lea.vmem %s0, %s201
      %p203 = pneg %p38
      %p204 = pneg %p35
      %p205 = pneg %p59
      %p206 = pneg %p56
      %p207 = pneg %p80
      %p208 = pneg %p77
      %p209 = pneg %p106
      %p210 = pneg %p103
      %p211 = scmp.lt.s32.totalorder %s17, 1
      %s212 = scalar_select %p211, %s17, 1
      %s213 = smul.addr %s212, 32
      %s214 = smul.addr %s213, 4
      %s215 = scalar_lea.vmem %s3, %s214
      %p216 = pneg %p132
      %p217 = pneg %p129
      %p218 = scmp.lt.s32.totalorder %s17, 1
      %s219 = scalar_select %p218, %s17, 1
      %s220 = scalar_lea.vmem %s4, %s219
      %p221 = pneg %p158
      %p222 = pneg %p155
      %p223 = scmp.lt.s32.totalorder %s17, 1
      %s224 = scalar_select %p223, %s17, 1
      %s225 = scalar_lea.vmem %s5, %s224
      %p226 = scmp.lt.s32.totalorder %s17, 1
      %s227 = scalar_select %p226, %s17, 1
      %s228 = smul.addr %s227, 32
      %s229 = smul.addr %s228, 4
      %s230 = scalar_lea.vmem %s0, %s229
      %p231 = scmp.lt.s32.totalorder %s17, 1
      %s232 = scalar_select %p231, %s17, 1
      %s233 = smul.addr %s232, 32
      %s234 = smul.addr %s233, 4
      %s235 = scalar_lea.vmem %s3, %s234
      %p236 = scmp.lt.s32.totalorder %s17, 1
      %s237 = scalar_select %p236, %s17, 1
      %s238 = scalar_lea.vmem %s4, %s237
      %p239 = scmp.lt.s32.totalorder %s17, 1
      %s240 = scalar_select %p239, %s17, 1
      %s241 = scalar_lea.vmem %s5, %s240
      %vm243 = vcmask 31744
      %244 = vst.msk [vmem:[#allocation2] sm:$0xff] %vm243, -inf
      %245 = vst.msk [vmem:[#allocation2 + $0x8] sm:$0xff] %vm243, -inf
      %246 = vst.msk [vmem:[#allocation2 + $0x10] sm:$0xff] %vm243, -inf
      %247 = vst.msk [vmem:[#allocation2 + $0x18] sm:$0xff] %vm243, -inf
      %s248 = scalar_lea.vmem [#allocation2], 288
      %249 = vst.msk [vmem:[%s248] sm:$0xff] %vm243, -inf
      %250 = vst.msk [vmem:[%s248 + $0x8] sm:$0xff] %vm243, -inf
      %251 = vst.msk [vmem:[%s248 + $0x10] sm:$0xff] %vm243, -inf
      %252 = vst.msk [vmem:[%s248 + $0x18] sm:$0xff] %vm243, -inf
      %v253 = vlaneseq
      %v254 = vshrl.u32 %v253, 7
      %v255 = vadd.s32 %v254, 8
      %v256 = vld [vmem:[%s230] sm:$0xf]
      %v257 = vld [vmem:[%s230 + $0x4] sm:$0xf]
      %v258 = vld [vmem:[%s230 + $0x8] sm:$0xf]
      %v259 = vld [vmem:[%s230 + $0xc] sm:$0xf]
      %v260 = vld [vmem:[%s230 + $0x10] sm:$0xf]
      %v261 = vld [vmem:[%s230 + $0x14] sm:$0xf]
      %v262 = vld [vmem:[%s230 + $0x18] sm:$0xf]
      %v263 = vld [vmem:[%s230 + $0x1c] sm:$0xf]
      %v264 = vld [vmem:[%s230 + $0x20] sm:$0xf]
      %v265 = vld [vmem:[%s230 + $0x24] sm:$0xf]
      %v266 = vld [vmem:[%s230 + $0x28] sm:$0xf]
      %v267 = vld [vmem:[%s230 + $0x2c] sm:$0xf]
      %v268 = vld [vmem:[%s230 + $0x30] sm:$0xf]
      %v269 = vld [vmem:[%s230 + $0x34] sm:$0xf]
      %v270 = vld [vmem:[%s230 + $0x38] sm:$0xf]
      %v271 = vld [vmem:[%s230 + $0x3c] sm:$0xf]
      %v272 = vld [vmem:[%s230 + $0x40] sm:$0xf]
      %v273 = vld [vmem:[%s230 + $0x44] sm:$0xf]
      %v274 = vld [vmem:[%s230 + $0x48] sm:$0xf]
      %v275 = vld [vmem:[%s230 + $0x4c] sm:$0xf]
      %v276 = vld [vmem:[%s230 + $0x50] sm:$0xf]
      %v277 = vld [vmem:[%s230 + $0x54] sm:$0xf]
      %v278 = vld [vmem:[%s230 + $0x58] sm:$0xf]
      %v279 = vld [vmem:[%s230 + $0x5c] sm:$0xf]
      %v280 = vld [vmem:[%s230 + $0x60] sm:$0xf]
      %v281 = vld [vmem:[%s230 + $0x64] sm:$0xf]
      %v282 = vld [vmem:[%s230 + $0x68] sm:$0xf]
      %v283 = vld [vmem:[%s230 + $0x6c] sm:$0xf]
      %v284 = vld [vmem:[%s230 + $0x70] sm:$0xf]
      %v285 = vld [vmem:[%s230 + $0x74] sm:$0xf]
      %v286 = vld [vmem:[%s230 + $0x78] sm:$0xf]
      %v287 = vld [vmem:[%s230 + $0x7c] sm:$0xf]
      %v288 = vunpack.c.l.bf16 %v256
      %v289 = vunpack.c.l.bf16 %v257
      %v290 = vunpack.c.l.bf16 %v258
      %v291 = vunpack.c.l.bf16 %v259
      %v292 = vunpack.c.l.bf16 %v260
      %v293 = vunpack.c.l.bf16 %v261
      %v294 = vunpack.c.l.bf16 %v262
      %v295 = vunpack.c.l.bf16 %v263
      %v296 = vunpack.c.l.bf16 %v264
      %v297 = vunpack.c.l.bf16 %v265
      %v298 = vunpack.c.l.bf16 %v266
      %v299 = vunpack.c.l.bf16 %v267
      %v300 = vunpack.c.l.bf16 %v268
      %v301 = vunpack.c.l.bf16 %v269
      %v302 = vunpack.c.l.bf16 %v270
      %v303 = vunpack.c.l.bf16 %v271
      %v304 = vunpack.c.l.bf16 %v272
      %v305 = vunpack.c.l.bf16 %v273
      %v306 = vunpack.c.l.bf16 %v274
      %v307 = vunpack.c.l.bf16 %v275
      %v308 = vunpack.c.l.bf16 %v276
      %v309 = vunpack.c.l.bf16 %v277
      %v310 = vunpack.c.l.bf16 %v278
      %v311 = vunpack.c.l.bf16 %v279
      %v312 = vunpack.c.l.bf16 %v280
      %v313 = vunpack.c.l.bf16 %v281
      %v314 = vunpack.c.l.bf16 %v282
      %v315 = vunpack.c.l.bf16 %v283
      %v316 = vunpack.c.l.bf16 %v284
      %v317 = vunpack.c.l.bf16 %v285
      %v318 = vunpack.c.l.bf16 %v286
      %v319 = vunpack.c.l.bf16 %v287
      %v320 = vpack.c.bf16 %v289, %v288
      %v321 = vpack.c.bf16 %v291, %v290
      %v322 = vpack.c.bf16 %v293, %v292
      %v323 = vpack.c.bf16 %v295, %v294
      %v324 = vpack.c.bf16 %v297, %v296
      %v325 = vpack.c.bf16 %v299, %v298
      %v326 = vpack.c.bf16 %v301, %v300
      %v327 = vpack.c.bf16 %v303, %v302
      %v328 = vpack.c.bf16 %v305, %v304
      %v329 = vpack.c.bf16 %v307, %v306
      %v330 = vpack.c.bf16 %v309, %v308
      %v331 = vpack.c.bf16 %v311, %v310
      %v332 = vpack.c.bf16 %v313, %v312
      %v333 = vpack.c.bf16 %v315, %v314
      %v334 = vpack.c.bf16 %v317, %v316
      %v335 = vpack.c.bf16 %v319, %v318
      %v336 = vld [vmem:[%s1] sm:$0x3]
      %v338 = vsel %vm243, %v320, 0
      %v341 = vsel %vm243, %v321, 0
      %v344 = vsel %vm243, %v322, 0
      %v347 = vsel %vm243, %v323, 0
      %v350 = vsel %vm243, %v324, 0
      %v353 = vsel %vm243, %v325, 0
      %v356 = vsel %vm243, %v326, 0
      %v359 = vsel %vm243, %v327, 0
      %v362 = vsel %vm243, %v328, 0
      %v365 = vsel %vm243, %v329, 0
      %v368 = vsel %vm243, %v330, 0
      %v371 = vsel %vm243, %v331, 0
      %v374 = vsel %vm243, %v332, 0
      %v377 = vsel %vm243, %v333, 0
      %v380 = vsel %vm243, %v334, 0
      %v383 = vsel %vm243, %v335, 0
      %vm385 = vcmask 1041408
      %v387 = vsel %vm385, %v336, 0
      %389 = vmatprep.subr.bf16.mxu0 0
      %390 = vmatpush1.bf16.msra.mxu0 %v387
      %391 = vmatprep.subr.bf16.mxu0 0
      %392 = vmatpush1.bf16.msra.mxu0 0
      %393 = vmatprep.subr.bf16.mxu0 0
      %394 = vmatpush1.bf16.msra.mxu0 0
      %395 = vmatprep.subr.bf16.mxu0 0
      %396 = vmatpush1.bf16.msra.mxu0 0
      %397 = vmatprep.subr.bf16.mxu0 0
      %398 = vmatpush1.bf16.msra.mxu0 0
      %399 = vmatprep.subr.bf16.mxu0 0
      %400 = vmatpush1.bf16.msra.mxu0 0
      %401 = vmatprep.subr.bf16.mxu0 0
      %402 = vmatpush1.bf16.msra.mxu0 0
      %403 = vmatprep.subr.bf16.mxu0 0
      %404 = vmatpush1.bf16.msra.mxu0 0
      %405 = vmatprep.subr.bf16.mxu0 0
      %406 = vmatpush1.bf16.msra.mxu0 0
      %407 = vmatprep.subr.bf16.mxu0 0
      %408 = vmatpush1.bf16.msra.mxu0 0
      %409 = vmatprep.subr.bf16.mxu0 0
      %410 = vmatpush1.bf16.msra.mxu0 0
      %411 = vmatprep.subr.bf16.mxu0 0
      %412 = vmatpush1.bf16.msra.mxu0 0
      %413 = vmatprep.subr.bf16.mxu0 0
      %414 = vmatpush1.bf16.msra.mxu0 0
      %415 = vmatprep.subr.bf16.mxu0 0
      %416 = vmatpush1.bf16.msra.mxu0 0
      %417 = vmatprep.subr.bf16.mxu0 0
      %418 = vmatpush1.bf16.msra.mxu0 0
      %419 = vmatprep.subr.bf16.mxu0 0
      %420 = vmatpush1.bf16.msra.mxu0 0
      %421 = vmatprep.mubr.bf16.mxu0 0
      %422 = vmatmul.mubr.bf16.gmra.mrb[0].mxu0 %v338
      %v423 = vpop.f32.mrb[0].mxu0
      %v424 = vadd.f32 0.0, %v423
      %v425 = vpop.f32.mrb[0].mxu0
      %v426 = vpop.f32.mrb[0].mxu0
      %v427 = vadd.f32 0.0, %v426
      %v428 = vpop.f32.mrb[0].mxu0
      %429 = vmatprep.mubr.bf16.mxu0 0
      %430 = vmatmul.mubr.bf16.gmra.mrb[0].mxu0 %v341
      %v431 = vpop.f32.mrb[0].mxu0
      %v432 = vadd.f32 0.0, %v431
      %v433 = vpop.f32.mrb[0].mxu0
      %v434 = vpop.f32.mrb[0].mxu0
      %v435 = vadd.f32 0.0, %v434
      %v436 = vpop.f32.mrb[0].mxu0
      %437 = vmatprep.mubr.bf16.mxu0 0
      %438 = vmatmul.mubr.bf16.gmra.mrb[0].mxu0 %v344
      %v439 = vpop.f32.mrb[0].mxu0
      %v440 = vadd.f32 0.0, %v439
      %v441 = vpop.f32.mrb[0].mxu0
      %v442 = vpop.f32.mrb[0].mxu0
      %v443 = vadd.f32 0.0, %v442
      %v444 = vpop.f32.mrb[0].mxu0
      %445 = vmatprep.mubr.bf16.mxu0 0
      %446 = vmatmul.mubr.bf16.gmra.mrb[0].mxu0 %v347
      %v447 = vpop.f32.mrb[0].mxu0
      %v448 = vadd.f32 0.0, %v447
      %v449 = vpop.f32.mrb[0].mxu0
      %v450 = vpop.f32.mrb[0].mxu0
      %v451 = vadd.f32 0.0, %v450
      %v452 = vpop.f32.mrb[0].mxu0
      %453 = vmatprep.mubr.bf16.mxu0 0
      %454 = vmatmul.mubr.bf16.gmra.mrb[0].mxu0 %v350
      %v455 = vpop.f32.mrb[0].mxu0
      %v456 = vadd.f32 0.0, %v455
      %v457 = vpop.f32.mrb[0].mxu0
      %v458 = vpop.f32.mrb[0].mxu0
      %v459 = vadd.f32 0.0, %v458
      %v460 = vpop.f32.mrb[0].mxu0
      %461 = vmatprep.mubr.bf16.mxu0 0
      %462 = vmatmul.mubr.bf16.gmra.mrb[0].mxu0 %v353
      %v463 = vpop.f32.mrb[0].mxu0
      %v464 = vadd.f32 0.0, %v463
      %v465 = vpop.f32.mrb[0].mxu0
      %v466 = vpop.f32.mrb[0].mxu0
      %v467 = vadd.f32 0.0, %v466
      %v468 = vpop.f32.mrb[0].mxu0
      %469 = vmatprep.mubr.bf16.mxu0 0
      %470 = vmatmul.mubr.bf16.gmra.mrb[0].mxu0 %v356
      %v471 = vpop.f32.mrb[0].mxu0
      %v472 = vadd.f32 0.0, %v471
      %v473 = vpop.f32.mrb[0].mxu0
      %v474 = vpop.f32.mrb[0].mxu0
      %v475 = vadd.f32 0.0, %v474
      %v476 = vpop.f32.mrb[0].mxu0
      %477 = vmatprep.mubr.bf16.mxu0 0
      %478 = vmatmul.mubr.bf16.gmra.mrb[0].mxu0 %v359
      %v479 = vpop.f32.mrb[0].mxu0
      %v480 = vadd.f32 0.0, %v479
      %v481 = vpop.f32.mrb[0].mxu0
      %v482 = vpop.f32.mrb[0].mxu0
      %v483 = vadd.f32 0.0, %v482
      %v484 = vpop.f32.mrb[0].mxu0
      %485 = vmatprep.mubr.bf16.mxu0 0
      %486 = vmatmul.mubr.bf16.gmra.mrb[0].mxu0 %v362
      %v487 = vpop.f32.mrb[0].mxu0
      %v488 = vadd.f32 0.0, %v487
      %v489 = vpop.f32.mrb[0].mxu0
      %v490 = vpop.f32.mrb[0].mxu0
      %v491 = vadd.f32 0.0, %v490
      %v492 = vpop.f32.mrb[0].mxu0
      %493 = vmatprep.mubr.bf16.mxu0 0
      %494 = vmatmul.mubr.bf16.gmra.mrb[0].mxu0 %v365
      %v495 = vpop.f32.mrb[0].mxu0
      %v496 = vadd.f32 0.0, %v495
      %v497 = vpop.f32.mrb[0].mxu0
      %v498 = vpop.f32.mrb[0].mxu0
      %v499 = vadd.f32 0.0, %v498
      %v500 = vpop.f32.mrb[0].mxu0
      %501 = vmatprep.mubr.bf16.mxu0 0
      %502 = vmatmul.mubr.bf16.gmra.mrb[0].mxu0 %v368
      %v503 = vpop.f32.mrb[0].mxu0
      %v504 = vadd.f32 0.0, %v503
      %v505 = vpop.f32.mrb[0].mxu0
      %v506 = vpop.f32.mrb[0].mxu0
      %v507 = vadd.f32 0.0, %v506
      %v508 = vpop.f32.mrb[0].mxu0
      %509 = vmatprep.mubr.bf16.mxu0 0
      %510 = vmatmul.mubr.bf16.gmra.mrb[0].mxu0 %v371
      %v511 = vpop.f32.mrb[0].mxu0
      %v512 = vadd.f32 0.0, %v511
      %v513 = vpop.f32.mrb[0].mxu0
      %v514 = vpop.f32.mrb[0].mxu0
      %v515 = vadd.f32 0.0, %v514
      %v516 = vpop.f32.mrb[0].mxu0
      %517 = vmatprep.mubr.bf16.mxu0 0
      %518 = vmatmul.mubr.bf16.gmra.mrb[0].mxu0 %v374
      %v519 = vpop.f32.mrb[0].mxu0
      %v520 = vadd.f32 0.0, %v519
      %v521 = vpop.f32.mrb[0].mxu0
      %v522 = vpop.f32.mrb[0].mxu0
      %v523 = vadd.f32 0.0, %v522
      %v524 = vpop.f32.mrb[0].mxu0
      %525 = vmatprep.mubr.bf16.mxu0 0
      %526 = vmatmul.mubr.bf16.gmra.mrb[0].mxu0 %v377
      %v527 = vpop.f32.mrb[0].mxu0
      %v528 = vadd.f32 0.0, %v527
      %v529 = vpop.f32.mrb[0].mxu0
      %v530 = vpop.f32.mrb[0].mxu0
      %v531 = vadd.f32 0.0, %v530
      %v532 = vpop.f32.mrb[0].mxu0
      %533 = vmatprep.mubr.bf16.mxu0 0
      %534 = vmatmul.mubr.bf16.gmra.mrb[0].mxu0 %v380
      %v535 = vpop.f32.mrb[0].mxu0
      %v536 = vadd.f32 0.0, %v535
      %v537 = vpop.f32.mrb[0].mxu0
      %v538 = vpop.f32.mrb[0].mxu0
      %v539 = vadd.f32 0.0, %v538
      %v540 = vpop.f32.mrb[0].mxu0
      %541 = vmatprep.mubr.bf16.mxu0 0
      %542 = vmatmul.mubr.bf16.gmra.mrb[0].mxu0 %v383
      %v543 = vpop.f32.mrb[0].mxu0
      %v544 = vadd.f32 0.0, %v543
      %v545 = vpop.f32.mrb[0].mxu0
      %v546 = vpop.f32.mrb[0].mxu0
      %v547 = vadd.f32 0.0, %v546
      %v548 = vpop.f32.mrb[0].mxu0
      %549 = vdwg.mxu0
      %550 = vst.msk [vmem:[#allocation3] sm:$0xff] %vm243, %v424
      %551 = vst.msk [vmem:[#allocation3 + $0x8] sm:$0xff] %vm243, %v427
      %552 = vst.msk [vmem:[#allocation3 + $0x10] sm:$0xff] %vm243, %v432
      %553 = vst.msk [vmem:[#allocation3 + $0x18] sm:$0xff] %vm243, %v435
      %554 = vst.msk [vmem:[#allocation3 + $0x20] sm:$0xff] %vm243, %v440
      %555 = vst.msk [vmem:[#allocation3 + $0x28] sm:$0xff] %vm243, %v443
      %556 = vst.msk [vmem:[#allocation3 + $0x30] sm:$0xff] %vm243, %v448
      %557 = vst.msk [vmem:[#allocation3 + $0x38] sm:$0xff] %vm243, %v451
      %558 = vst.msk [vmem:[#allocation3 + $0x40] sm:$0xff] %vm243, %v456
      %559 = vst.msk [vmem:[#allocation3 + $0x48] sm:$0xff] %vm243, %v459
      %560 = vst.msk [vmem:[#allocation3 + $0x50] sm:$0xff] %vm243, %v464
      %561 = vst.msk [vmem:[#allocation3 + $0x58] sm:$0xff] %vm243, %v467
      %562 = vst.msk [vmem:[#allocation3 + $0x60] sm:$0xff] %vm243, %v472
      %563 = vst.msk [vmem:[#allocation3 + $0x68] sm:$0xff] %vm243, %v475
      %564 = vst.msk [vmem:[#allocation3 + $0x70] sm:$0xff] %vm243, %v480
      %565 = vst.msk [vmem:[#allocation3 + $0x78] sm:$0xff] %vm243, %v483
      %566 = vst.msk [vmem:[#allocation3 + $0x80] sm:$0xff] %vm243, %v488
      %567 = vst.msk [vmem:[#allocation3 + $0x88] sm:$0xff] %vm243, %v491
      %568 = vst.msk [vmem:[#allocation3 + $0x90] sm:$0xff] %vm243, %v496
      %569 = vst.msk [vmem:[#allocation3 + $0x98] sm:$0xff] %vm243, %v499
      %570 = vst.msk [vmem:[#allocation3 + $0xa0] sm:$0xff] %vm243, %v504
      %571 = vst.msk [vmem:[#allocation3 + $0xa8] sm:$0xff] %vm243, %v507
      %572 = vst.msk [vmem:[#allocation3 + $0xb0] sm:$0xff] %vm243, %v512
      %573 = vst.msk [vmem:[#allocation3 + $0xb8] sm:$0xff] %vm243, %v515
      %574 = vst.msk [vmem:[#allocation3 + $0xc0] sm:$0xff] %vm243, %v520
      %575 = vst.msk [vmem:[#allocation3 + $0xc8] sm:$0xff] %vm243, %v523
      %576 = vst.msk [vmem:[#allocation3 + $0xd0] sm:$0xff] %vm243, %v528
      %577 = vst.msk [vmem:[#allocation3 + $0xd8] sm:$0xff] %vm243, %v531
      %578 = vst.msk [vmem:[#allocation3 + $0xe0] sm:$0xff] %vm243, %v536
      %579 = vst.msk [vmem:[#allocation3 + $0xe8] sm:$0xff] %vm243, %v539
      %580 = vst.msk [vmem:[#allocation3 + $0xf0] sm:$0xff] %vm243, %v544
      %581 = vst.msk [vmem:[#allocation3 + $0xf8] sm:$0xff] %vm243, %v547
      %s582 = scalar_lea.vmem [#allocation2], 32
      %583 = vst.msk [vmem:[%s582] sm:$0xff] %vm243, %v288
      %584 = vst.msk [vmem:[%s582 + $0x8] sm:$0xff] %vm243, %v289
      %585 = vst.msk [vmem:[%s582 + $0x10] sm:$0xff] %vm243, %v290
      %586 = vst.msk [vmem:[%s582 + $0x18] sm:$0xff] %vm243, %v291
      %587 = vst.msk [vmem:[%s582 + $0x20] sm:$0xff] %vm243, %v292
      %588 = vst.msk [vmem:[%s582 + $0x28] sm:$0xff] %vm243, %v293
      %589 = vst.msk [vmem:[%s582 + $0x30] sm:$0xff] %vm243, %v294
      %590 = vst.msk [vmem:[%s582 + $0x38] sm:$0xff] %vm243, %v295
      %591 = vst.msk [vmem:[%s582 + $0x40] sm:$0xff] %vm243, %v296
      %592 = vst.msk [vmem:[%s582 + $0x48] sm:$0xff] %vm243, %v297
      %593 = vst.msk [vmem:[%s582 + $0x50] sm:$0xff] %vm243, %v298
      %594 = vst.msk [vmem:[%s582 + $0x58] sm:$0xff] %vm243, %v299
      %595 = vst.msk [vmem:[%s582 + $0x60] sm:$0xff] %vm243, %v300
      %596 = vst.msk [vmem:[%s582 + $0x68] sm:$0xff] %vm243, %v301
      %597 = vst.msk [vmem:[%s582 + $0x70] sm:$0xff] %vm243, %v302
      %598 = vst.msk [vmem:[%s582 + $0x78] sm:$0xff] %vm243, %v303
      %599 = vst.msk [vmem:[%s582 + $0x80] sm:$0xff] %vm243, %v304
      %600 = vst.msk [vmem:[%s582 + $0x88] sm:$0xff] %vm243, %v305
      %601 = vst.msk [vmem:[%s582 + $0x90] sm:$0xff] %vm243, %v306
      %602 = vst.msk [vmem:[%s582 + $0x98] sm:$0xff] %vm243, %v307
      %603 = vst.msk [vmem:[%s582 + $0xa0] sm:$0xff] %vm243, %v308
      %604 = vst.msk [vmem:[%s582 + $0xa8] sm:$0xff] %vm243, %v309
      %605 = vst.msk [vmem:[%s582 + $0xb0] sm:$0xff] %vm243, %v310
      %606 = vst.msk [vmem:[%s582 + $0xb8] sm:$0xff] %vm243, %v311
      %607 = vst.msk [vmem:[%s582 + $0xc0] sm:$0xff] %vm243, %v312
      %608 = vst.msk [vmem:[%s582 + $0xc8] sm:$0xff] %vm243, %v313
      %609 = vst.msk [vmem:[%s582 + $0xd0] sm:$0xff] %vm243, %v314
      %610 = vst.msk [vmem:[%s582 + $0xd8] sm:$0xff] %vm243, %v315
      %611 = vst.msk [vmem:[%s582 + $0xe0] sm:$0xff] %vm243, %v316
      %612 = vst.msk [vmem:[%s582 + $0xe8] sm:$0xff] %vm243, %v317
      %613 = vst.msk [vmem:[%s582 + $0xf0] sm:$0xff] %vm243, %v318
      %614 = vst.msk [vmem:[%s582 + $0xf8] sm:$0xff] %vm243, %v319
      %v615 = vld [vmem:[#allocation2] sm:$0xff]
      %v616 = vld [vmem:[#allocation2 + $0x8] sm:$0xff]
      %v617 = vld [vmem:[#allocation2 + $0x10] sm:$0xff]
      %v618 = vld [vmem:[#allocation2 + $0x18] sm:$0xff]
      %v619 = vld [vmem:[#allocation2 + $0x20] sm:$0xff]
      %v620 = vld [vmem:[#allocation2 + $0x28] sm:$0xff]
      %v621 = vld [vmem:[#allocation2 + $0x30] sm:$0xff]
      %v622 = vld [vmem:[#allocation2 + $0x38] sm:$0xff]
      %v623 = vld [vmem:[#allocation2 + $0x40] sm:$0xff]
      %v624 = vld [vmem:[#allocation2 + $0x48] sm:$0xff]
      %v625 = vld [vmem:[#allocation2 + $0x50] sm:$0xff]
      %v626 = vld [vmem:[#allocation2 + $0x58] sm:$0xff]
      %v627 = vld [vmem:[#allocation2 + $0x60] sm:$0xff]
      %v628 = vld [vmem:[#allocation2 + $0x68] sm:$0xff]
      %v629 = vld [vmem:[#allocation2 + $0x70] sm:$0xff]
      %v630 = vld [vmem:[#allocation2 + $0x78] sm:$0xff]
      %v631 = vld [vmem:[#allocation2 + $0x80] sm:$0xff]
      %v632 = vld [vmem:[#allocation2 + $0x88] sm:$0xff]
      %v633 = vld [vmem:[#allocation2 + $0x90] sm:$0xff]
      %v634 = vld [vmem:[#allocation2 + $0x98] sm:$0xff]
      %v635 = vld [vmem:[#allocation2 + $0xa0] sm:$0xff]
      %v636 = vld [vmem:[#allocation2 + $0xa8] sm:$0xff]
      %v637 = vld [vmem:[#allocation2 + $0xb0] sm:$0xff]
      %v638 = vld [vmem:[#allocation2 + $0xb8] sm:$0xff]
      %v639 = vld [vmem:[#allocation2 + $0xc0] sm:$0xff]
      %v640 = vld [vmem:[#allocation2 + $0xc8] sm:$0xff]
      %v641 = vld [vmem:[#allocation2 + $0xd0] sm:$0xff]
      %v642 = vld [vmem:[#allocation2 + $0xd8] sm:$0xff]
      %v643 = vld [vmem:[#allocation2 + $0xe0] sm:$0xff]
      %v644 = vld [vmem:[#allocation2 + $0xe8] sm:$0xff]
      %v645 = vld [vmem:[#allocation2 + $0xf0] sm:$0xff]
      %v646 = vld [vmem:[#allocation2 + $0xf8] sm:$0xff]
      %s647 = scalar_lea.vmem [#allocation2], 16
      %v648 = vld [vmem:[%s647] sm:$0xff]
      %v649 = vld [vmem:[%s647 + $0x8] sm:$0xff]
      %v650 = vld [vmem:[%s647 + $0x10] sm:$0xff]
      %v651 = vld [vmem:[%s647 + $0x18] sm:$0xff]
      %v652 = vld [vmem:[%s647 + $0x20] sm:$0xff]
      %v653 = vld [vmem:[%s647 + $0x28] sm:$0xff]
      %v654 = vld [vmem:[%s647 + $0x30] sm:$0xff]
      %v655 = vld [vmem:[%s647 + $0x38] sm:$0xff]
      %v656 = vld [vmem:[%s647 + $0x40] sm:$0xff]
      %v657 = vld [vmem:[%s647 + $0x48] sm:$0xff]
      %v658 = vld [vmem:[%s647 + $0x50] sm:$0xff]
      %v659 = vld [vmem:[%s647 + $0x58] sm:$0xff]
      %v660 = vld [vmem:[%s647 + $0x60] sm:$0xff]
      %v661 = vld [vmem:[%s647 + $0x68] sm:$0xff]
      %v662 = vld [vmem:[%s647 + $0x70] sm:$0xff]
      %v663 = vld [vmem:[%s647 + $0x78] sm:$0xff]
      %v664 = vld [vmem:[%s647 + $0x80] sm:$0xff]
      %v665 = vld [vmem:[%s647 + $0x88] sm:$0xff]
      %v666 = vld [vmem:[%s647 + $0x90] sm:$0xff]
      %v667 = vld [vmem:[%s647 + $0x98] sm:$0xff]
      %v668 = vld [vmem:[%s647 + $0xa0] sm:$0xff]
      %v669 = vld [vmem:[%s647 + $0xa8] sm:$0xff]
      %v670 = vld [vmem:[%s647 + $0xb0] sm:$0xff]
      %v671 = vld [vmem:[%s647 + $0xb8] sm:$0xff]
      %v672 = vld [vmem:[%s647 + $0xc0] sm:$0xff]
      %v673 = vld [vmem:[%s647 + $0xc8] sm:$0xff]
      %v674 = vld [vmem:[%s647 + $0xd0] sm:$0xff]
      %v675 = vld [vmem:[%s647 + $0xd8] sm:$0xff]
      %v676 = vld [vmem:[%s647 + $0xe0] sm:$0xff]
      %v677 = vld [vmem:[%s647 + $0xe8] sm:$0xff]
      %v678 = vld [vmem:[%s647 + $0xf0] sm:$0xff]
      %v679 = vld [vmem:[%s647 + $0xf8] sm:$0xff]
      %v680 = vmax.f32 %v615, %v648
      %v681 = vmax.f32 %v616, %v649
      %v682 = vmax.f32 %v617, %v650
      %v683 = vmax.f32 %v618, %v651
      %v684 = vmax.f32 %v619, %v652
      %v685 = vmax.f32 %v620, %v653
      %v686 = vmax.f32 %v621, %v654
      %v687 = vmax.f32 %v622, %v655
      %v688 = vmax.f32 %v623, %v656
      %v689 = vmax.f32 %v624, %v657
      %v690 = vmax.f32 %v625, %v658
      %v691 = vmax.f32 %v626, %v659
      %v692 = vmax.f32 %v627, %v660
      %v693 = vmax.f32 %v628, %v661
      %v694 = vmax.f32 %v629, %v662
      %v695 = vmax.f32 %v630, %v663
      %v696 = vmax.f32 %v631, %v664
      %v697 = vmax.f32 %v632, %v665
      %v698 = vmax.f32 %v633, %v666
      %v699 = vmax.f32 %v634, %v667
      %v700 = vmax.f32 %v635, %v668
      %v701 = vmax.f32 %v636, %v669
      %v702 = vmax.f32 %v637, %v670
      %v703 = vmax.f32 %v638, %v671
      %v704 = vmax.f32 %v639, %v672
      %v705 = vmax.f32 %v640, %v673
      %v706 = vmax.f32 %v641, %v674
      %v707 = vmax.f32 %v642, %v675
      %v708 = vmax.f32 %v643, %v676
      %v709 = vmax.f32 %v644, %v677
      %v710 = vmax.f32 %v645, %v678
      %v711 = vmax.f32 %v646, %v679
      %v712 = vld [vmem:[%s582] sm:$0xff]
      %v713 = vld [vmem:[%s582 + $0x8] sm:$0xff]
      %v714 = vld [vmem:[%s582 + $0x10] sm:$0xff]
      %v715 = vld [vmem:[%s582 + $0x18] sm:$0xff]
      %v716 = vld [vmem:[%s582 + $0x20] sm:$0xff]
      %v717 = vld [vmem:[%s582 + $0x28] sm:$0xff]
      %v718 = vld [vmem:[%s582 + $0x30] sm:$0xff]
      %v719 = vld [vmem:[%s582 + $0x38] sm:$0xff]
      %v720 = vld [vmem:[%s582 + $0x40] sm:$0xff]
      %v721 = vld [vmem:[%s582 + $0x48] sm:$0xff]
      %v722 = vld [vmem:[%s582 + $0x50] sm:$0xff]
      %v723 = vld [vmem:[%s582 + $0x58] sm:$0xff]
      %v724 = vld [vmem:[%s582 + $0x60] sm:$0xff]
      %v725 = vld [vmem:[%s582 + $0x68] sm:$0xff]
      %v726 = vld [vmem:[%s582 + $0x70] sm:$0xff]
      %v727 = vld [vmem:[%s582 + $0x78] sm:$0xff]
      %v728 = vld [vmem:[%s582 + $0x80] sm:$0xff]
      %v729 = vld [vmem:[%s582 + $0x88] sm:$0xff]
      %v730 = vld [vmem:[%s582 + $0x90] sm:$0xff]
      %v731 = vld [vmem:[%s582 + $0x98] sm:$0xff]
      %v732 = vld [vmem:[%s582 + $0xa0] sm:$0xff]
      %v733 = vld [vmem:[%s582 + $0xa8] sm:$0xff]
      %v734 = vld [vmem:[%s582 + $0xb0] sm:$0xff]
      %v735 = vld [vmem:[%s582 + $0xb8] sm:$0xff]
      %v736 = vld [vmem:[%s582 + $0xc0] sm:$0xff]
      %v737 = vld [vmem:[%s582 + $0xc8] sm:$0xff]
      %v738 = vld [vmem:[%s582 + $0xd0] sm:$0xff]
      %v739 = vld [vmem:[%s582 + $0xd8] sm:$0xff]
      %v740 = vld [vmem:[%s582 + $0xe0] sm:$0xff]
      %v741 = vld [vmem:[%s582 + $0xe8] sm:$0xff]
      %v742 = vld [vmem:[%s582 + $0xf0] sm:$0xff]
      %v743 = vld [vmem:[%s582 + $0xf8] sm:$0xff]
      %v744 = vmax.f32 %v680, %v712
      %v745 = vmax.f32 %v681, %v713
      %v746 = vmax.f32 %v682, %v714
      %v747 = vmax.f32 %v683, %v715
      %v748 = vmax.f32 %v684, %v716
      %v749 = vmax.f32 %v685, %v717
      %v750 = vmax.f32 %v686, %v718
      %v751 = vmax.f32 %v687, %v719
      %v752 = vmax.f32 %v688, %v720
      %v753 = vmax.f32 %v689, %v721
      %v754 = vmax.f32 %v690, %v722
      %v755 = vmax.f32 %v691, %v723
      %v756 = vmax.f32 %v692, %v724
      %v757 = vmax.f32 %v693, %v725
      %v758 = vmax.f32 %v694, %v726
      %v759 = vmax.f32 %v695, %v727
      %v760 = vmax.f32 %v696, %v728
      %v761 = vmax.f32 %v697, %v729
      %v762 = vmax.f32 %v698, %v730
      %v763 = vmax.f32 %v699, %v731
      %v764 = vmax.f32 %v700, %v732
      %v765 = vmax.f32 %v701, %v733
      %v766 = vmax.f32 %v702, %v734
      %v767 = vmax.f32 %v703, %v735
      %v768 = vmax.f32 %v704, %v736
      %v769 = vmax.f32 %v705, %v737
      %v770 = vmax.f32 %v706, %v738
      %v771 = vmax.f32 %v707, %v739
      %v772 = vmax.f32 %v708, %v740
      %v773 = vmax.f32 %v709, %v741
      %v774 = vmax.f32 %v710, %v742
      %v775 = vmax.f32 %v711, %v743
      %s776 = scalar_lea.vmem [#allocation2], 48
      %v777 = vld [vmem:[%s776] sm:$0xff]
      %v778 = vld [vmem:[%s776 + $0x8] sm:$0xff]
      %v779 = vld [vmem:[%s776 + $0x10] sm:$0xff]
      %v780 = vld [vmem:[%s776 + $0x18] sm:$0xff]
      %v781 = vld [vmem:[%s776 + $0x20] sm:$0xff]
      %v782 = vld [vmem:[%s776 + $0x28] sm:$0xff]
      %v783 = vld [vmem:[%s776 + $0x30] sm:$0xff]
      %v784 = vld [vmem:[%s776 + $0x38] sm:$0xff]
      %v785 = vld [vmem:[%s776 + $0x40] sm:$0xff]
      %v786 = vld [vmem:[%s776 + $0x48] sm:$0xff]
      %v787 = vld [vmem:[%s776 + $0x50] sm:$0xff]
      %v788 = vld [vmem:[%s776 + $0x58] sm:$0xff]
      %v789 = vld [vmem:[%s776 + $0x60] sm:$0xff]
      %v790 = vld [vmem:[%s776 + $0x68] sm:$0xff]
      %v791 = vld [vmem:[%s776 + $0x70] sm:$0xff]
      %v792 = vld [vmem:[%s776 + $0x78] sm:$0xff]
      %v793 = vld [vmem:[%s776 + $0x80] sm:$0xff]
      %v794 = vld [vmem:[%s776 + $0x88] sm:$0xff]
      %v795 = vld [vmem:[%s776 + $0x90] sm:$0xff]
      %v796 = vld [vmem:[%s776 + $0x98] sm:$0xff]
      %v797 = vld [vmem:[%s776 + $0xa0] sm:$0xff]
      %v798 = vld [vmem:[%s776 + $0xa8] sm:$0xff]
      %v799 = vld [vmem:[%s776 + $0xb0] sm:$0xff]
      %v800 = vld [vmem:[%s776 + $0xb8] sm:$0xff]
      %v801 = vld [vmem:[%s776 + $0xc0] sm:$0xff]
      %v802 = vld [vmem:[%s776 + $0xc8] sm:$0xff]
      %v803 = vld [vmem:[%s776 + $0xd0] sm:$0xff]
      %v804 = vld [vmem:[%s776 + $0xd8] sm:$0xff]
      %v805 = vld [vmem:[%s776 + $0xe0] sm:$0xff]
      %v806 = vld [vmem:[%s776 + $0xe8] sm:$0xff]
      %v807 = vld [vmem:[%s776 + $0xf0] sm:$0xff]
      %v808 = vld [vmem:[%s776 + $0xf8] sm:$0xff]
      %v809 = vmax.f32 %v744, %v777
      %v810 = vmax.f32 %v745, %v778
      %v811 = vmax.f32 %v746, %v779
      %v812 = vmax.f32 %v747, %v780
      %v813 = vmax.f32 %v748, %v781
      %v814 = vmax.f32 %v749, %v782
      %v815 = vmax.f32 %v750, %v783
      %v816 = vmax.f32 %v751, %v784
      %v817 = vmax.f32 %v752, %v785
      %v818 = vmax.f32 %v753, %v786
      %v819 = vmax.f32 %v754, %v787
      %v820 = vmax.f32 %v755, %v788
      %v821 = vmax.f32 %v756, %v789
      %v822 = vmax.f32 %v757, %v790
      %v823 = vmax.f32 %v758, %v791
      %v824 = vmax.f32 %v759, %v792
      %v825 = vmax.f32 %v760, %v793
      %v826 = vmax.f32 %v761, %v794
      %v827 = vmax.f32 %v762, %v795
      %v828 = vmax.f32 %v763, %v796
      %v829 = vmax.f32 %v764, %v797
      %v830 = vmax.f32 %v765, %v798
      %v831 = vmax.f32 %v766, %v799
      %v832 = vmax.f32 %v767, %v800
      %v833 = vmax.f32 %v768, %v801
      %v834 = vmax.f32 %v769, %v802
      %v835 = vmax.f32 %v770, %v803
      %v836 = vmax.f32 %v771, %v804
      %v837 = vmax.f32 %v772, %v805
      %v838 = vmax.f32 %v773, %v806
      %v839 = vmax.f32 %v774, %v807
      %v840 = vmax.f32 %v775, %v808
      %s841 = scalar_lea.vmem [#allocation2], 64
      %v842 = vld [vmem:[%s841] sm:$0xff]
      %v843 = vld [vmem:[%s841 + $0x8] sm:$0xff]
      %v844 = vld [vmem:[%s841 + $0x10] sm:$0xff]
      %v845 = vld [vmem:[%s841 + $0x18] sm:$0xff]
      %v846 = vld [vmem:[%s841 + $0x20] sm:$0xff]
      %v847 = vld [vmem:[%s841 + $0x28] sm:$0xff]
      %v848 = vld [vmem:[%s841 + $0x30] sm:$0xff]
      %v849 = vld [vmem:[%s841 + $0x38] sm:$0xff]
      %v850 = vld [vmem:[%s841 + $0x40] sm:$0xff]
      %v851 = vld [vmem:[%s841 + $0x48] sm:$0xff]
      %v852 = vld [vmem:[%s841 + $0x50] sm:$0xff]
      %v853 = vld [vmem:[%s841 + $0x58] sm:$0xff]
      %v854 = vld [vmem:[%s841 + $0x60] sm:$0xff]
      %v855 = vld [vmem:[%s841 + $0x68] sm:$0xff]
      %v856 = vld [vmem:[%s841 + $0x70] sm:$0xff]
      %v857 = vld [vmem:[%s841 + $0x78] sm:$0xff]
      %v858 = vld [vmem:[%s841 + $0x80] sm:$0xff]
      %v859 = vld [vmem:[%s841 + $0x88] sm:$0xff]
      %v860 = vld [vmem:[%s841 + $0x90] sm:$0xff]
      %v861 = vld [vmem:[%s841 + $0x98] sm:$0xff]
      %v862 = vld [vmem:[%s841 + $0xa0] sm:$0xff]
      %v863 = vld [vmem:[%s841 + $0xa8] sm:$0xff]
      %v864 = vld [vmem:[%s841 + $0xb0] sm:$0xff]
      %v865 = vld [vmem:[%s841 + $0xb8] sm:$0xff]
      %v866 = vld [vmem:[%s841 + $0xc0] sm:$0xff]
      %v867 = vld [vmem:[%s841 + $0xc8] sm:$0xff]
      %v868 = vld [vmem:[%s841 + $0xd0] sm:$0xff]
      %v869 = vld [vmem:[%s841 + $0xd8] sm:$0xff]
      %v870 = vld [vmem:[%s841 + $0xe0] sm:$0xff]
      %v871 = vld [vmem:[%s841 + $0xe8] sm:$0xff]
      %v872 = vld [vmem:[%s841 + $0xf0] sm:$0xff]
      %v873 = vld [vmem:[%s841 + $0xf8] sm:$0xff]
      %v874 = vmax.f32 %v809, %v842
      %v875 = vmax.f32 %v810, %v843
      %v876 = vmax.f32 %v811, %v844
      %v877 = vmax.f32 %v812, %v845
      %v878 = vmax.f32 %v813, %v846
      %v879 = vmax.f32 %v814, %v847
      %v880 = vmax.f32 %v815, %v848
      %v881 = vmax.f32 %v816, %v849
      %v882 = vmax.f32 %v817, %v850
      %v883 = vmax.f32 %v818, %v851
      %v884 = vmax.f32 %v819, %v852
      %v885 = vmax.f32 %v820, %v853
      %v886 = vmax.f32 %v821, %v854
      %v887 = vmax.f32 %v822, %v855
      %v888 = vmax.f32 %v823, %v856
      %v889 = vmax.f32 %v824, %v857
      %v890 = vmax.f32 %v825, %v858
      %v891 = vmax.f32 %v826, %v859
      %v892 = vmax.f32 %v827, %v860
      %v893 = vmax.f32 %v828, %v861
      %v894 = vmax.f32 %v829, %v862
      %v895 = vmax.f32 %v830, %v863
      %v896 = vmax.f32 %v831, %v864
      %v897 = vmax.f32 %v832, %v865
      %v898 = vmax.f32 %v833, %v866
      %v899 = vmax.f32 %v834, %v867
      %v900 = vmax.f32 %v835, %v868
      %v901 = vmax.f32 %v836, %v869
      %v902 = vmax.f32 %v837, %v870
      %v903 = vmax.f32 %v838, %v871
      %v904 = vmax.f32 %v839, %v872
      %v905 = vmax.f32 %v840, %v873
      %v906 = vrot.slane %v874, 1
      %v907 = vrot.slane %v876, 1
      %v908 = vrot.slane %v878, 1
      %v909 = vrot.slane %v880, 1
      %v910 = vrot.slane %v882, 1
      %v911 = vrot.slane %v884, 1
      %v912 = vrot.slane %v886, 1
      %v913 = vrot.slane %v888, 1
      %v914 = vrot.slane %v890, 1
      %v915 = vrot.slane %v892, 1
      %v916 = vrot.slane %v894, 1
      %v917 = vrot.slane %v896, 1
      %v918 = vrot.slane %v898, 1
      %v919 = vrot.slane %v900, 1
      %v920 = vrot.slane %v902, 1
      %v921 = vrot.slane %v904, 1
      %v922 = vrot.slane %v875, 1
      %v923 = vrot.slane %v877, 1
      %v924 = vrot.slane %v879, 1
      %v925 = vrot.slane %v881, 1
      %v926 = vrot.slane %v883, 1
      %v927 = vrot.slane %v885, 1
      %v928 = vrot.slane %v887, 1
      %v929 = vrot.slane %v889, 1
      %v930 = vrot.slane %v891, 1
      %v931 = vrot.slane %v893, 1
      %v932 = vrot.slane %v895, 1
      %v933 = vrot.slane %v897, 1
      %v934 = vrot.slane %v899, 1
      %v935 = vrot.slane %v901, 1
      %v936 = vrot.slane %v903, 1
      %v937 = vrot.slane %v905, 1
      %vm938 = vcmp.lt.s32.totalorder %v254, 7
      %v939 = vsel %vm938, %v906, %v922
      %v940 = vsel %vm938, %v907, %v923
      %v941 = vsel %vm938, %v908, %v924
      %v942 = vsel %vm938, %v909, %v925
      %v943 = vsel %vm938, %v910, %v926
      %v944 = vsel %vm938, %v911, %v927
      %v945 = vsel %vm938, %v912, %v928
      %v946 = vsel %vm938, %v913, %v929
      %v947 = vsel %vm938, %v914, %v930
      %v948 = vsel %vm938, %v915, %v931
      %v949 = vsel %vm938, %v916, %v932
      %v950 = vsel %vm938, %v917, %v933
      %v951 = vsel %vm938, %v918, %v934
      %v952 = vsel %vm938, %v919, %v935
      %v953 = vsel %vm938, %v920, %v936
      %v954 = vsel %vm938, %v921, %v937
      %v955 = vsel %vm938, %v922, %v906
      %v956 = vsel %vm938, %v923, %v907
      %v957 = vsel %vm938, %v924, %v908
      %v958 = vsel %vm938, %v925, %v909
      %v959 = vsel %vm938, %v926, %v910
      %v960 = vsel %vm938, %v927, %v911
      %v961 = vsel %vm938, %v928, %v912
      %v962 = vsel %vm938, %v929, %v913
      %v963 = vsel %vm938, %v930, %v914
      %v964 = vsel %vm938, %v931, %v915
      %v965 = vsel %vm938, %v932, %v916
      %v966 = vsel %vm938, %v933, %v917
      %v967 = vsel %vm938, %v934, %v918
      %v968 = vsel %vm938, %v935, %v919
      %v969 = vsel %vm938, %v936, %v920
      %v970 = vsel %vm938, %v937, %v921
      %vm971 = vcmp.lt.s32.totalorder %v254, 15
      %vm972 = vcmp.lt.s32.totalorder %v255, 15
      %v973 = vsel %vm971, 1, 0
      %v974 = vsel %vm972, 1, 0
      %vm975 = vcmp.eq.s32.totalorder %v973, 1
      %vm976 = vcmp.eq.s32.totalorder %v974, 1
      %v977 = vsel %vm975, %v939, -inf
      %v978 = vsel %vm976, %v955, -inf
      %v979 = vsel %vm975, %v940, -inf
      %v980 = vsel %vm976, %v956, -inf
      %v981 = vsel %vm975, %v941, -inf
      %v982 = vsel %vm976, %v957, -inf
      %v983 = vsel %vm975, %v942, -inf
      %v984 = vsel %vm976, %v958, -inf
      %v985 = vsel %vm975, %v943, -inf
      %v986 = vsel %vm976, %v959, -inf
      %v987 = vsel %vm975, %v944, -inf
      %v988 = vsel %vm976, %v960, -inf
      %v989 = vsel %vm975, %v945, -inf
      %v990 = vsel %vm976, %v961, -inf
      %v991 = vsel %vm975, %v946, -inf
      %v992 = vsel %vm976, %v962, -inf
      %v993 = vsel %vm975, %v947, -inf
      %v994 = vsel %vm976, %v963, -inf
      %v995 = vsel %vm975, %v948, -inf
      %v996 = vsel %vm976, %v964, -inf
      %v997 = vsel %vm975, %v949, -inf
      %v998 = vsel %vm976, %v965, -inf
      %v999 = vsel %vm975, %v950, -inf
      %v1000 = vsel %vm976, %v966, -inf
      %v1001 = vsel %vm975, %v951, -inf
      %v1002 = vsel %vm976, %v967, -inf
      %v1003 = vsel %vm975, %v952, -inf
      %v1004 = vsel %vm976, %v968, -inf
      %v1005 = vsel %vm975, %v953, -inf
      %v1006 = vsel %vm976, %v969, -inf
      %v1007 = vsel %vm975, %v954, -inf
      %v1008 = vsel %vm976, %v970, -inf
      %v1009 = vmax.f32 %v874, %v977
      %v1010 = vmax.f32 %v875, %v978
      %v1011 = vmax.f32 %v876, %v979
      %v1012 = vmax.f32 %v877, %v980
      %v1013 = vmax.f32 %v878, %v981
      %v1014 = vmax.f32 %v879, %v982
      %v1015 = vmax.f32 %v880, %v983
      %v1016 = vmax.f32 %v881, %v984
      %v1017 = vmax.f32 %v882, %v985
      %v1018 = vmax.f32 %v883, %v986
      %v1019 = vmax.f32 %v884, %v987
      %v1020 = vmax.f32 %v885, %v988
      %v1021 = vmax.f32 %v886, %v989
      %v1022 = vmax.f32 %v887, %v990
      %v1023 = vmax.f32 %v888, %v991
      %v1024 = vmax.f32 %v889, %v992
      %v1025 = vmax.f32 %v890, %v993
      %v1026 = vmax.f32 %v891, %v994
      %v1027 = vmax.f32 %v892, %v995
      %v1028 = vmax.f32 %v893, %v996
      %v1029 = vmax.f32 %v894, %v997
      %v1030 = vmax.f32 %v895, %v998
      %v1031 = vmax.f32 %v896, %v999
      %v1032 = vmax.f32 %v897, %v1000
      %v1033 = vmax.f32 %v898, %v1001
      %v1034 = vmax.f32 %v899, %v1002
      %v1035 = vmax.f32 %v900, %v1003
      %v1036 = vmax.f32 %v901, %v1004
      %v1037 = vmax.f32 %v902, %v1005
      %v1038 = vmax.f32 %v903, %v1006
      %v1039 = vmax.f32 %v904, %v1007
      %v1040 = vmax.f32 %v905, %v1008
      %v1041 = vrot.slane %v874, 7
      %v1042 = vrot.slane %v876, 7
      %v1043 = vrot.slane %v878, 7
      %v1044 = vrot.slane %v880, 7
      %v1045 = vrot.slane %v882, 7
      %v1046 = vrot.slane %v884, 7
      %v1047 = vrot.slane %v886, 7
      %v1048 = vrot.slane %v888, 7
      %v1049 = vrot.slane %v890, 7
      %v1050 = vrot.slane %v892, 7
      %v1051 = vrot.slane %v894, 7
      %v1052 = vrot.slane %v896, 7
      %v1053 = vrot.slane %v898, 7
      %v1054 = vrot.slane %v900, 7
      %v1055 = vrot.slane %v902, 7
      %v1056 = vrot.slane %v904, 7
      %v1057 = vrot.slane %v875, 7
      %v1058 = vrot.slane %v877, 7
      %v1059 = vrot.slane %v879, 7
      %v1060 = vrot.slane %v881, 7
      %v1061 = vrot.slane %v883, 7
      %v1062 = vrot.slane %v885, 7
      %v1063 = vrot.slane %v887, 7
      %v1064 = vrot.slane %v889, 7
      %v1065 = vrot.slane %v891, 7
      %v1066 = vrot.slane %v893, 7
      %v1067 = vrot.slane %v895, 7
      %v1068 = vrot.slane %v897, 7
      %v1069 = vrot.slane %v899, 7
      %v1070 = vrot.slane %v901, 7
      %v1071 = vrot.slane %v903, 7
      %v1072 = vrot.slane %v905, 7
      %vm1073 = vcmp.lt.s32.totalorder %v254, 1
      %v1074 = vsel %vm1073, %v1041, %v1057
      %v1075 = vsel %vm1073, %v1042, %v1058
      %v1076 = vsel %vm1073, %v1043, %v1059
      %v1077 = vsel %vm1073, %v1044, %v1060
      %v1078 = vsel %vm1073, %v1045, %v1061
      %v1079 = vsel %vm1073, %v1046, %v1062
      %v1080 = vsel %vm1073, %v1047, %v1063
      %v1081 = vsel %vm1073, %v1048, %v1064
      %v1082 = vsel %vm1073, %v1049, %v1065
      %v1083 = vsel %vm1073, %v1050, %v1066
      %v1084 = vsel %vm1073, %v1051, %v1067
      %v1085 = vsel %vm1073, %v1052, %v1068
      %v1086 = vsel %vm1073, %v1053, %v1069
      %v1087 = vsel %vm1073, %v1054, %v1070
      %v1088 = vsel %vm1073, %v1055, %v1071
      %v1089 = vsel %vm1073, %v1056, %v1072
      %v1090 = vsel %vm1073, %v1057, %v1041
      %v1091 = vsel %vm1073, %v1058, %v1042
      %v1092 = vsel %vm1073, %v1059, %v1043
      %v1093 = vsel %vm1073, %v1060, %v1044
      %v1094 = vsel %vm1073, %v1061, %v1045
      %v1095 = vsel %vm1073, %v1062, %v1046
      %v1096 = vsel %vm1073, %v1063, %v1047
      %v1097 = vsel %vm1073, %v1064, %v1048
      %v1098 = vsel %vm1073, %v1065, %v1049
      %v1099 = vsel %vm1073, %v1066, %v1050
      %v1100 = vsel %vm1073, %v1067, %v1051
      %v1101 = vsel %vm1073, %v1068, %v1052
      %v1102 = vsel %vm1073, %v1069, %v1053
      %v1103 = vsel %vm1073, %v1070, %v1054
      %v1104 = vsel %vm1073, %v1071, %v1055
      %v1105 = vsel %vm1073, %v1072, %v1056
      %vm1106 = vcmp.ge.s32.totalorder %v254, 1
      %vm1107 = vcmp.ge.s32.totalorder %v255, 1
      %v1108 = vsel %vm1106, 1, 0
      %v1109 = vsel %vm1107, 1, 0
      %vm1110 = vcmp.eq.s32.totalorder %v1108, 1
      %vm1111 = vcmp.eq.s32.totalorder %v1109, 1
      %v1112 = vsel %vm1110, %v1090, -inf
      %v1113 = vsel %vm1111, %v1074, -inf
      %v1114 = vsel %vm1110, %v1091, -inf
      %v1115 = vsel %vm1111, %v1075, -inf
      %v1116 = vsel %vm1110, %v1092, -inf
      %v1117 = vsel %vm1111, %v1076, -inf
      %v1118 = vsel %vm1110, %v1093, -inf
      %v1119 = vsel %vm1111, %v1077, -inf
      %v1120 = vsel %vm1110, %v1094, -inf
      %v1121 = vsel %vm1111, %v1078, -inf
      %v1122 = vsel %vm1110, %v1095, -inf
      %v1123 = vsel %vm1111, %v1079, -inf
      %v1124 = vsel %vm1110, %v1096, -inf
      %v1125 = vsel %vm1111, %v1080, -inf
      %v1126 = vsel %vm1110, %v1097, -inf
      %v1127 = vsel %vm1111, %v1081, -inf
      %v1128 = vsel %vm1110, %v1098, -inf
      %v1129 = vsel %vm1111, %v1082, -inf
      %v1130 = vsel %vm1110, %v1099, -inf
      %v1131 = vsel %vm1111, %v1083, -inf
      %v1132 = vsel %vm1110, %v1100, -inf
      %v1133 = vsel %vm1111, %v1084, -inf
      %v1134 = vsel %vm1110, %v1101, -inf
      %v1135 = vsel %vm1111, %v1085, -inf
      %v1136 = vsel %vm1110, %v1102, -inf
      %v1137 = vsel %vm1111, %v1086, -inf
      %v1138 = vsel %vm1110, %v1103, -inf
      %v1139 = vsel %vm1111, %v1087, -inf
      %v1140 = vsel %vm1110, %v1104, -inf
      %v1141 = vsel %vm1111, %v1088, -inf
      %v1142 = vsel %vm1110, %v1105, -inf
      %v1143 = vsel %vm1111, %v1089, -inf
      %v1144 = vmax.f32 %v1009, %v1112
      %v1145 = vmax.f32 %v1010, %v1113
      %v1146 = vmax.f32 %v1011, %v1114
      %v1147 = vmax.f32 %v1012, %v1115
      %v1148 = vmax.f32 %v1013, %v1116
      %v1149 = vmax.f32 %v1014, %v1117
      %v1150 = vmax.f32 %v1015, %v1118
      %v1151 = vmax.f32 %v1016, %v1119
      %v1152 = vmax.f32 %v1017, %v1120
      %v1153 = vmax.f32 %v1018, %v1121
      %v1154 = vmax.f32 %v1019, %v1122
      %v1155 = vmax.f32 %v1020, %v1123
      %v1156 = vmax.f32 %v1021, %v1124
      %v1157 = vmax.f32 %v1022, %v1125
      %v1158 = vmax.f32 %v1023, %v1126
      %v1159 = vmax.f32 %v1024, %v1127
      %v1160 = vmax.f32 %v1025, %v1128
      %v1161 = vmax.f32 %v1026, %v1129
      %v1162 = vmax.f32 %v1027, %v1130
      %v1163 = vmax.f32 %v1028, %v1131
      %v1164 = vmax.f32 %v1029, %v1132
      %v1165 = vmax.f32 %v1030, %v1133
      %v1166 = vmax.f32 %v1031, %v1134
      %v1167 = vmax.f32 %v1032, %v1135
      %v1168 = vmax.f32 %v1033, %v1136
      %v1169 = vmax.f32 %v1034, %v1137
      %v1170 = vmax.f32 %v1035, %v1138
      %v1171 = vmax.f32 %v1036, %v1139
      %v1172 = vmax.f32 %v1037, %v1140
      %v1173 = vmax.f32 %v1038, %v1141
      %v1174 = vmax.f32 %v1039, %v1142
      %v1175 = vmax.f32 %v1040, %v1143
      %v1176 = vrot.slane %v874, 2
      %v1177 = vrot.slane %v876, 2
      %v1178 = vrot.slane %v878, 2
      %v1179 = vrot.slane %v880, 2
      %v1180 = vrot.slane %v882, 2
      %v1181 = vrot.slane %v884, 2
      %v1182 = vrot.slane %v886, 2
      %v1183 = vrot.slane %v888, 2
      %v1184 = vrot.slane %v890, 2
      %v1185 = vrot.slane %v892, 2
      %v1186 = vrot.slane %v894, 2
      %v1187 = vrot.slane %v896, 2
      %v1188 = vrot.slane %v898, 2
      %v1189 = vrot.slane %v900, 2
      %v1190 = vrot.slane %v902, 2
      %v1191 = vrot.slane %v904, 2
      %v1192 = vrot.slane %v875, 2
      %v1193 = vrot.slane %v877, 2
      %v1194 = vrot.slane %v879, 2
      %v1195 = vrot.slane %v881, 2
      %v1196 = vrot.slane %v883, 2
      %v1197 = vrot.slane %v885, 2
      %v1198 = vrot.slane %v887, 2
      %v1199 = vrot.slane %v889, 2
      %v1200 = vrot.slane %v891, 2
      %v1201 = vrot.slane %v893, 2
      %v1202 = vrot.slane %v895, 2
      %v1203 = vrot.slane %v897, 2
      %v1204 = vrot.slane %v899, 2
      %v1205 = vrot.slane %v901, 2
      %v1206 = vrot.slane %v903, 2
      %v1207 = vrot.slane %v905, 2
      %vm1208 = vcmp.lt.s32.totalorder %v254, 6
      %v1209 = vsel %vm1208, %v1176, %v1192
      %v1210 = vsel %vm1208, %v1177, %v1193
      %v1211 = vsel %vm1208, %v1178, %v1194
      %v1212 = vsel %vm1208, %v1179, %v1195
      %v1213 = vsel %vm1208, %v1180, %v1196
      %v1214 = vsel %vm1208, %v1181, %v1197
      %v1215 = vsel %vm1208, %v1182, %v1198
      %v1216 = vsel %vm1208, %v1183, %v1199
      %v1217 = vsel %vm1208, %v1184, %v1200
      %v1218 = vsel %vm1208, %v1185, %v1201
      %v1219 = vsel %vm1208, %v1186, %v1202
      %v1220 = vsel %vm1208, %v1187, %v1203
      %v1221 = vsel %vm1208, %v1188, %v1204
      %v1222 = vsel %vm1208, %v1189, %v1205
      %v1223 = vsel %vm1208, %v1190, %v1206
      %v1224 = vsel %vm1208, %v1191, %v1207
      %v1225 = vsel %vm1208, %v1192, %v1176
      %v1226 = vsel %vm1208, %v1193, %v1177
      %v1227 = vsel %vm1208, %v1194, %v1178
      %v1228 = vsel %vm1208, %v1195, %v1179
      %v1229 = vsel %vm1208, %v1196, %v1180
      %v1230 = vsel %vm1208, %v1197, %v1181
      %v1231 = vsel %vm1208, %v1198, %v1182
      %v1232 = vsel %vm1208, %v1199, %v1183
      %v1233 = vsel %vm1208, %v1200, %v1184
      %v1234 = vsel %vm1208, %v1201, %v1185
      %v1235 = vsel %vm1208, %v1202, %v1186
      %v1236 = vsel %vm1208, %v1203, %v1187
      %v1237 = vsel %vm1208, %v1204, %v1188
      %v1238 = vsel %vm1208, %v1205, %v1189
      %v1239 = vsel %vm1208, %v1206, %v1190
      %v1240 = vsel %vm1208, %v1207, %v1191
      %vm1241 = vcmp.lt.s32.totalorder %v254, 14
      %vm1242 = vcmp.lt.s32.totalorder %v255, 14
      %v1243 = vsel %vm1241, 1, 0
      %v1244 = vsel %vm1242, 1, 0
      %vm1245 = vcmp.eq.s32.totalorder %v1243, 1
      %vm1246 = vcmp.eq.s32.totalorder %v1244, 1
      %v1247 = vsel %vm1245, %v1209, -inf
      %v1248 = vsel %vm1246, %v1225, -inf
      %v1249 = vsel %vm1245, %v1210, -inf
      %v1250 = vsel %vm1246, %v1226, -inf
      %v1251 = vsel %vm1245, %v1211, -inf
      %v1252 = vsel %vm1246, %v1227, -inf
      %v1253 = vsel %vm1245, %v1212, -inf
      %v1254 = vsel %vm1246, %v1228, -inf
      %v1255 = vsel %vm1245, %v1213, -inf
      %v1256 = vsel %vm1246, %v1229, -inf
      %v1257 = vsel %vm1245, %v1214, -inf
      %v1258 = vsel %vm1246, %v1230, -inf
      %v1259 = vsel %vm1245, %v1215, -inf
      %v1260 = vsel %vm1246, %v1231, -inf
      %v1261 = vsel %vm1245, %v1216, -inf
      %v1262 = vsel %vm1246, %v1232, -inf
      %v1263 = vsel %vm1245, %v1217, -inf
      %v1264 = vsel %vm1246, %v1233, -inf
      %v1265 = vsel %vm1245, %v1218, -inf
      %v1266 = vsel %vm1246, %v1234, -inf
      %v1267 = vsel %vm1245, %v1219, -inf
      %v1268 = vsel %vm1246, %v1235, -inf
      %v1269 = vsel %vm1245, %v1220, -inf
      %v1270 = vsel %vm1246, %v1236, -inf
      %v1271 = vsel %vm1245, %v1221, -inf
      %v1272 = vsel %vm1246, %v1237, -inf
      %v1273 = vsel %vm1245, %v1222, -inf
      %v1274 = vsel %vm1246, %v1238, -inf
      %v1275 = vsel %vm1245, %v1223, -inf
      %v1276 = vsel %vm1246, %v1239, -inf
      %v1277 = vsel %vm1245, %v1224, -inf
      %v1278 = vsel %vm1246, %v1240, -inf
      %v1279 = vmax.f32 %v1144, %v1247
      %v1280 = vmax.f32 %v1145, %v1248
      %v1281 = vmax.f32 %v1146, %v1249
      %v1282 = vmax.f32 %v1147, %v1250
      %v1283 = vmax.f32 %v1148, %v1251
      %v1284 = vmax.f32 %v1149, %v1252
      %v1285 = vmax.f32 %v1150, %v1253
      %v1286 = vmax.f32 %v1151, %v1254
      %v1287 = vmax.f32 %v1152, %v1255
      %v1288 = vmax.f32 %v1153, %v1256
      %v1289 = vmax.f32 %v1154, %v1257
      %v1290 = vmax.f32 %v1155, %v1258
      %v1291 = vmax.f32 %v1156, %v1259
      %v1292 = vmax.f32 %v1157, %v1260
      %v1293 = vmax.f32 %v1158, %v1261
      %v1294 = vmax.f32 %v1159, %v1262
      %v1295 = vmax.f32 %v1160, %v1263
      %v1296 = vmax.f32 %v1161, %v1264
      %v1297 = vmax.f32 %v1162, %v1265
      %v1298 = vmax.f32 %v1163, %v1266
      %v1299 = vmax.f32 %v1164, %v1267
      %v1300 = vmax.f32 %v1165, %v1268
      %v1301 = vmax.f32 %v1166, %v1269
      %v1302 = vmax.f32 %v1167, %v1270
      %v1303 = vmax.f32 %v1168, %v1271
      %v1304 = vmax.f32 %v1169, %v1272
      %v1305 = vmax.f32 %v1170, %v1273
      %v1306 = vmax.f32 %v1171, %v1274
      %v1307 = vmax.f32 %v1172, %v1275
      %v1308 = vmax.f32 %v1173, %v1276
      %v1309 = vmax.f32 %v1174, %v1277
      %v1310 = vmax.f32 %v1175, %v1278
      %v1311 = vrot.slane %v874, 6
      %v1312 = vrot.slane %v876, 6
      %v1313 = vrot.slane %v878, 6
      %v1314 = vrot.slane %v880, 6
      %v1315 = vrot.slane %v882, 6
      %v1316 = vrot.slane %v884, 6
      %v1317 = vrot.slane %v886, 6
      %v1318 = vrot.slane %v888, 6
      %v1319 = vrot.slane %v890, 6
      %v1320 = vrot.slane %v892, 6
      %v1321 = vrot.slane %v894, 6
      %v1322 = vrot.slane %v896, 6
      %v1323 = vrot.slane %v898, 6
      %v1324 = vrot.slane %v900, 6
      %v1325 = vrot.slane %v902, 6
      %v1326 = vrot.slane %v904, 6
      %v1327 = vrot.slane %v875, 6
      %v1328 = vrot.slane %v877, 6
      %v1329 = vrot.slane %v879, 6
      %v1330 = vrot.slane %v881, 6
      %v1331 = vrot.slane %v883, 6
      %v1332 = vrot.slane %v885, 6
      %v1333 = vrot.slane %v887, 6
      %v1334 = vrot.slane %v889, 6
      %v1335 = vrot.slane %v891, 6
      %v1336 = vrot.slane %v893, 6
      %v1337 = vrot.slane %v895, 6
      %v1338 = vrot.slane %v897, 6
      %v1339 = vrot.slane %v899, 6
      %v1340 = vrot.slane %v901, 6
      %v1341 = vrot.slane %v903, 6
      %v1342 = vrot.slane %v905, 6
      %vm1343 = vcmp.lt.s32.totalorder %v254, 2
      %v1344 = vsel %vm1343, %v1311, %v1327
      %v1345 = vsel %vm1343, %v1312, %v1328
      %v1346 = vsel %vm1343, %v1313, %v1329
      %v1347 = vsel %vm1343, %v1314, %v1330
      %v1348 = vsel %vm1343, %v1315, %v1331
      %v1349 = vsel %vm1343, %v1316, %v1332
      %v1350 = vsel %vm1343, %v1317, %v1333
      %v1351 = vsel %vm1343, %v1318, %v1334
      %v1352 = vsel %vm1343, %v1319, %v1335
      %v1353 = vsel %vm1343, %v1320, %v1336
      %v1354 = vsel %vm1343, %v1321, %v1337
      %v1355 = vsel %vm1343, %v1322, %v1338
      %v1356 = vsel %vm1343, %v1323, %v1339
      %v1357 = vsel %vm1343, %v1324, %v1340
      %v1358 = vsel %vm1343, %v1325, %v1341
      %v1359 = vsel %vm1343, %v1326, %v1342
      %v1360 = vsel %vm1343, %v1327, %v1311
      %v1361 = vsel %vm1343, %v1328, %v1312
      %v1362 = vsel %vm1343, %v1329, %v1313
      %v1363 = vsel %vm1343, %v1330, %v1314
      %v1364 = vsel %vm1343, %v1331, %v1315
      %v1365 = vsel %vm1343, %v1332, %v1316
      %v1366 = vsel %vm1343, %v1333, %v1317
      %v1367 = vsel %vm1343, %v1334, %v1318
      %v1368 = vsel %vm1343, %v1335, %v1319
      %v1369 = vsel %vm1343, %v1336, %v1320
      %v1370 = vsel %vm1343, %v1337, %v1321
      %v1371 = vsel %vm1343, %v1338, %v1322
      %v1372 = vsel %vm1343, %v1339, %v1323
      %v1373 = vsel %vm1343, %v1340, %v1324
      %v1374 = vsel %vm1343, %v1341, %v1325
      %v1375 = vsel %vm1343, %v1342, %v1326
      %vm1376 = vcmp.ge.s32.totalorder %v254, 2
      %vm1377 = vcmp.ge.s32.totalorder %v255, 2
      %v1378 = vsel %vm1376, 1, 0
      %v1379 = vsel %vm1377, 1, 0
      %vm1380 = vcmp.eq.s32.totalorder %v1378, 1
      %vm1381 = vcmp.eq.s32.totalorder %v1379, 1
      %v1382 = vsel %vm1380, %v1360, -inf
      %v1383 = vsel %vm1381, %v1344, -inf
      %v1384 = vsel %vm1380, %v1361, -inf
      %v1385 = vsel %vm1381, %v1345, -inf
      %v1386 = vsel %vm1380, %v1362, -inf
      %v1387 = vsel %vm1381, %v1346, -inf
      %v1388 = vsel %vm1380, %v1363, -inf
      %v1389 = vsel %vm1381, %v1347, -inf
      %v1390 = vsel %vm1380, %v1364, -inf
      %v1391 = vsel %vm1381, %v1348, -inf
      %v1392 = vsel %vm1380, %v1365, -inf
      %v1393 = vsel %vm1381, %v1349, -inf
      %v1394 = vsel %vm1380, %v1366, -inf
      %v1395 = vsel %vm1381, %v1350, -inf
      %v1396 = vsel %vm1380, %v1367, -inf
      %v1397 = vsel %vm1381, %v1351, -inf
      %v1398 = vsel %vm1380, %v1368, -inf
      %v1399 = vsel %vm1381, %v1352, -inf
      %v1400 = vsel %vm1380, %v1369, -inf
      %v1401 = vsel %vm1381, %v1353, -inf
      %v1402 = vsel %vm1380, %v1370, -inf
      %v1403 = vsel %vm1381, %v1354, -inf
      %v1404 = vsel %vm1380, %v1371, -inf
      %v1405 = vsel %vm1381, %v1355, -inf
      %v1406 = vsel %vm1380, %v1372, -inf
      %v1407 = vsel %vm1381, %v1356, -inf
      %v1408 = vsel %vm1380, %v1373, -inf
      %v1409 = vsel %vm1381, %v1357, -inf
      %v1410 = vsel %vm1380, %v1374, -inf
      %v1411 = vsel %vm1381, %v1358, -inf
      %v1412 = vsel %vm1380, %v1375, -inf
      %v1413 = vsel %vm1381, %v1359, -inf
      %v1414 = vmax.f32 %v1279, %v1382
      %v1415 = vmax.f32 %v1280, %v1383
      %v1416 = vmax.f32 %v1281, %v1384
      %v1417 = vmax.f32 %v1282, %v1385
      %v1418 = vmax.f32 %v1283, %v1386
      %v1419 = vmax.f32 %v1284, %v1387
      %v1420 = vmax.f32 %v1285, %v1388
      %v1421 = vmax.f32 %v1286, %v1389
      %v1422 = vmax.f32 %v1287, %v1390
      %v1423 = vmax.f32 %v1288, %v1391
      %v1424 = vmax.f32 %v1289, %v1392
      %v1425 = vmax.f32 %v1290, %v1393
      %v1426 = vmax.f32 %v1291, %v1394
      %v1427 = vmax.f32 %v1292, %v1395
      %v1428 = vmax.f32 %v1293, %v1396
      %v1429 = vmax.f32 %v1294, %v1397
      %v1430 = vmax.f32 %v1295, %v1398
      %v1431 = vmax.f32 %v1296, %v1399
      %v1432 = vmax.f32 %v1297, %v1400
      %v1433 = vmax.f32 %v1298, %v1401
      %v1434 = vmax.f32 %v1299, %v1402
      %v1435 = vmax.f32 %v1300, %v1403
      %v1436 = vmax.f32 %v1301, %v1404
      %v1437 = vmax.f32 %v1302, %v1405
      %v1438 = vmax.f32 %v1303, %v1406
      %v1439 = vmax.f32 %v1304, %v1407
      %v1440 = vmax.f32 %v1305, %v1408
      %v1441 = vmax.f32 %v1306, %v1409
      %v1442 = vmax.f32 %v1307, %v1410
      %v1443 = vmax.f32 %v1308, %v1411
      %v1444 = vmax.f32 %v1309, %v1412
      %v1445 = vmax.f32 %v1310, %v1413
      %v1446 = vpack.c.bf16 %v1415, %v1414
      %v1447 = vpack.c.bf16 %v1417, %v1416
      %v1448 = vpack.c.bf16 %v1419, %v1418
      %v1449 = vpack.c.bf16 %v1421, %v1420
      %v1450 = vpack.c.bf16 %v1423, %v1422
      %v1451 = vpack.c.bf16 %v1425, %v1424
      %v1452 = vpack.c.bf16 %v1427, %v1426
      %v1453 = vpack.c.bf16 %v1429, %v1428
      %v1454 = vpack.c.bf16 %v1431, %v1430
      %v1455 = vpack.c.bf16 %v1433, %v1432
      %v1456 = vpack.c.bf16 %v1435, %v1434
      %v1457 = vpack.c.bf16 %v1437, %v1436
      %v1458 = vpack.c.bf16 %v1439, %v1438
      %v1459 = vpack.c.bf16 %v1441, %v1440
      %v1460 = vpack.c.bf16 %v1443, %v1442
      %v1461 = vpack.c.bf16 %v1445, %v1444
      %s1462 = scalar_lea.vmem %s1, 2
      %v1463 = vld [vmem:[%s1462] sm:$0x3]
      %v1465 = vsel %vm243, %v1446, 0
      %v1468 = vsel %vm243, %v1447, 0
      %v1471 = vsel %vm243, %v1448, 0
      %v1474 = vsel %vm243, %v1449, 0
      %v1477 = vsel %vm243, %v1450, 0
      %v1480 = vsel %vm243, %v1451, 0
      %v1483 = vsel %vm243, %v1452, 0
      %v1486 = vsel %vm243, %v1453, 0
      %v1489 = vsel %vm243, %v1454, 0
      %v1492 = vsel %vm243, %v1455, 0
      %v1495 = vsel %vm243, %v1456, 0
      %v1498 = vsel %vm243, %v1457, 0
      %v1501 = vsel %vm243, %v1458, 0
      %v1504 = vsel %vm243, %v1459, 0
      %v1507 = vsel %vm243, %v1460, 0
      %v1510 = vsel %vm243, %v1461, 0
      %v1513 = vsel %vm385, %v1463, 0
      %1515 = vmatprep.subr.bf16.mxu0 0
      %1516 = vmatpush1.bf16.msra.mxu0 %v1513
      %1517 = vmatprep.subr.bf16.mxu0 0
      %1518 = vmatpush1.bf16.msra.mxu0 0
      %1519 = vmatprep.subr.bf16.mxu0 0
      %1520 = vmatpush1.bf16.msra.mxu0 0
      %1521 = vmatprep.subr.bf16.mxu0 0
      %1522 = vmatpush1.bf16.msra.mxu0 0
      %1523 = vmatprep.subr.bf16.mxu0 0
      %1524 = vmatpush1.bf16.msra.mxu0 0
      %1525 = vmatprep.subr.bf16.mxu0 0
      %1526 = vmatpush1.bf16.msra.mxu0 0
      %1527 = vmatprep.subr.bf16.mxu0 0
      %1528 = vmatpush1.bf16.msra.mxu0 0
      %1529 = vmatprep.subr.bf16.mxu0 0
      %1530 = vmatpush1.bf16.msra.mxu0 0
      %1531 = vmatprep.subr.bf16.mxu0 0
      %1532 = vmatpush1.bf16.msra.mxu0 0
      %1533 = vmatprep.subr.bf16.mxu0 0
      %1534 = vmatpush1.bf16.msra.mxu0 0
      %1535 = vmatprep.subr.bf16.mxu0 0
      %1536 = vmatpush1.bf16.msra.mxu0 0
      %1537 = vmatprep.subr.bf16.mxu0 0
      %1538 = vmatpush1.bf16.msra.mxu0 0
      %1539 = vmatprep.subr.bf16.mxu0 0
      %1540 = vmatpush1.bf16.msra.mxu0 0
      %1541 = vmatprep.subr.bf16.mxu0 0
      %1542 = vmatpush1.bf16.msra.mxu0 0
      %1543 = vmatprep.subr.bf16.mxu0 0
      %1544 = vmatpush1.bf16.msra.mxu0 0
      %1545 = vmatprep.subr.bf16.mxu0 0
      %1546 = vmatpush1.bf16.msra.mxu0 0
      %1547 = vmatprep.mubr.bf16.mxu0 0
      %1548 = vmatmul.mubr.bf16.gmra.mrb[0].mxu0 %v1465
      %v1549 = vpop.f32.mrb[0].mxu0
      %v1550 = vadd.f32 0.0, %v1549
      %v1551 = vpop.f32.mrb[0].mxu0
      %v1552 = vpop.f32.mrb[0].mxu0
      %v1553 = vadd.f32 0.0, %v1552
      %v1554 = vpop.f32.mrb[0].mxu0
      %1555 = vmatprep.mubr.bf16.mxu0 0
      %1556 = vmatmul.mubr.bf16.gmra.mrb[0].mxu0 %v1468
      %v1557 = vpop.f32.mrb[0].mxu0
      %v1558 = vadd.f32 0.0, %v1557
      %v1559 = vpop.f32.mrb[0].mxu0
      %v1560 = vpop.f32.mrb[0].mxu0
      %v1561 = vadd.f32 0.0, %v1560
      %v1562 = vpop.f32.mrb[0].mxu0
      %1563 = vmatprep.mubr.bf16.mxu0 0
      %1564 = vmatmul.mubr.bf16.gmra.mrb[0].mxu0 %v1471
      %v1565 = vpop.f32.mrb[0].mxu0
      %v1566 = vadd.f32 0.0, %v1565
      %v1567 = vpop.f32.mrb[0].mxu0
      %v1568 = vpop.f32.mrb[0].mxu0
      %v1569 = vadd.f32 0.0, %v1568
      %v1570 = vpop.f32.mrb[0].mxu0
      %1571 = vmatprep.mubr.bf16.mxu0 0
      %1572 = vmatmul.mubr.bf16.gmra.mrb[0].mxu0 %v1474
      %v1573 = vpop.f32.mrb[0].mxu0
      %v1574 = vadd.f32 0.0, %v1573
      %v1575 = vpop.f32.mrb[0].mxu0
      %v1576 = vpop.f32.mrb[0].mxu0
      %v1577 = vadd.f32 0.0, %v1576
      %v1578 = vpop.f32.mrb[0].mxu0
      %1579 = vmatprep.mubr.bf16.mxu0 0
      %1580 = vmatmul.mubr.bf16.gmra.mrb[0].mxu0 %v1477
      %v1581 = vpop.f32.mrb[0].mxu0
      %v1582 = vadd.f32 0.0, %v1581
      %v1583 = vpop.f32.mrb[0].mxu0
      %v1584 = vpop.f32.mrb[0].mxu0
      %v1585 = vadd.f32 0.0, %v1584
      %v1586 = vpop.f32.mrb[0].mxu0
      %1587 = vmatprep.mubr.bf16.mxu0 0
      %1588 = vmatmul.mubr.bf16.gmra.mrb[0].mxu0 %v1480
      %v1589 = vpop.f32.mrb[0].mxu0
      %v1590 = vadd.f32 0.0, %v1589
      %v1591 = vpop.f32.mrb[0].mxu0
      %v1592 = vpop.f32.mrb[0].mxu0
      %v1593 = vadd.f32 0.0, %v1592
      %v1594 = vpop.f32.mrb[0].mxu0
      %1595 = vmatprep.mubr.bf16.mxu0 0
      %1596 = vmatmul.mubr.bf16.gmra.mrb[0].mxu0 %v1483
      %v1597 = vpop.f32.mrb[0].mxu0
      %v1598 = vadd.f32 0.0, %v1597
      %v1599 = vpop.f32.mrb[0].mxu0
      %v1600 = vpop.f32.mrb[0].mxu0
      %v1601 = vadd.f32 0.0, %v1600
      %v1602 = vpop.f32.mrb[0].mxu0
      %1603 = vmatprep.mubr.bf16.mxu0 0
      %1604 = vmatmul.mubr.bf16.gmra.mrb[0].mxu0 %v1486
      %v1605 = vpop.f32.mrb[0].mxu0
      %v1606 = vadd.f32 0.0, %v1605
      %v1607 = vpop.f32.mrb[0].mxu0
      %v1608 = vpop.f32.mrb[0].mxu0
      %v1609 = vadd.f32 0.0, %v1608
      %v1610 = vpop.f32.mrb[0].mxu0
      %1611 = vmatprep.mubr.bf16.mxu0 0
      %1612 = vmatmul.mubr.bf16.gmra.mrb[0].mxu0 %v1489
      %v1613 = vpop.f32.mrb[0].mxu0
      %v1614 = vadd.f32 0.0, %v1613
      %v1615 = vpop.f32.mrb[0].mxu0
      %v1616 = vpop.f32.mrb[0].mxu0
      %v1617 = vadd.f32 0.0, %v1616
      %v1618 = vpop.f32.mrb[0].mxu0
      %1619 = vmatprep.mubr.bf16.mxu0 0
      %1620 = vmatmul.mubr.bf16.gmra.mrb[0].mxu0 %v1492
      %v1621 = vpop.f32.mrb[0].mxu0
      %v1622 = vadd.f32 0.0, %v1621
      %v1623 = vpop.f32.mrb[0].mxu0
      %v1624 = vpop.f32.mrb[0].mxu0
      %v1625 = vadd.f32 0.0, %v1624
      %v1626 = vpop.f32.mrb[0].mxu0
      %1627 = vmatprep.mubr.bf16.mxu0 0
      %1628 = vmatmul.mubr.bf16.gmra.mrb[0].mxu0 %v1495
      %v1629 = vpop.f32.mrb[0].mxu0
      %v1630 = vadd.f32 0.0, %v1629
      %v1631 = vpop.f32.mrb[0].mxu0
      %v1632 = vpop.f32.mrb[0].mxu0
      %v1633 = vadd.f32 0.0, %v1632
      %v1634 = vpop.f32.mrb[0].mxu0
      %1635 = vmatprep.mubr.bf16.mxu0 0
      %1636 = vmatmul.mubr.bf16.gmra.mrb[0].mxu0 %v1498
      %v1637 = vpop.f32.mrb[0].mxu0
      %v1638 = vadd.f32 0.0, %v1637
      %v1639 = vpop.f32.mrb[0].mxu0
      %v1640 = vpop.f32.mrb[0].mxu0
      %v1641 = vadd.f32 0.0, %v1640
      %v1642 = vpop.f32.mrb[0].mxu0
      %1643 = vmatprep.mubr.bf16.mxu0 0
      %1644 = vmatmul.mubr.bf16.gmra.mrb[0].mxu0 %v1501
      %v1645 = vpop.f32.mrb[0].mxu0
      %v1646 = vadd.f32 0.0, %v1645
      %v1647 = vpop.f32.mrb[0].mxu0
      %v1648 = vpop.f32.mrb[0].mxu0
      %v1649 = vadd.f32 0.0, %v1648
      %v1650 = vpop.f32.mrb[0].mxu0
      %1651 = vmatprep.mubr.bf16.mxu0 0
      %1652 = vmatmul.mubr.bf16.gmra.mrb[0].mxu0 %v1504
      %v1653 = vpop.f32.mrb[0].mxu0
      %v1654 = vadd.f32 0.0, %v1653
      %v1655 = vpop.f32.mrb[0].mxu0
      %v1656 = vpop.f32.mrb[0].mxu0
      %v1657 = vadd.f32 0.0, %v1656
      %v1658 = vpop.f32.mrb[0].mxu0
      %1659 = vmatprep.mubr.bf16.mxu0 0
      %1660 = vmatmul.mubr.bf16.gmra.mrb[0].mxu0 %v1507
      %v1661 = vpop.f32.mrb[0].mxu0
      %v1662 = vadd.f32 0.0, %v1661
      %v1663 = vpop.f32.mrb[0].mxu0
      %v1664 = vpop.f32.mrb[0].mxu0
      %v1665 = vadd.f32 0.0, %v1664
      %v1666 = vpop.f32.mrb[0].mxu0
      %1667 = vmatprep.mubr.bf16.mxu0 0
      %1668 = vmatmul.mubr.bf16.gmra.mrb[0].mxu0 %v1510
      %v1669 = vpop.f32.mrb[0].mxu0
      %v1670 = vadd.f32 0.0, %v1669
      %v1671 = vpop.f32.mrb[0].mxu0
      %v1672 = vpop.f32.mrb[0].mxu0
      %v1673 = vadd.f32 0.0, %v1672
      %v1674 = vpop.f32.mrb[0].mxu0
      %1675 = vdwg.mxu0
      %v1676 = vld [vmem:[#allocation3] sm:$0xff]
      %v1677 = vld [vmem:[#allocation3 + $0x8] sm:$0xff]
      %v1678 = vld [vmem:[#allocation3 + $0x10] sm:$0xff]
      %v1679 = vld [vmem:[#allocation3 + $0x18] sm:$0xff]
      %v1680 = vld [vmem:[#allocation3 + $0x20] sm:$0xff]
      %v1681 = vld [vmem:[#allocation3 + $0x28] sm:$0xff]
      %v1682 = vld [vmem:[#allocation3 + $0x30] sm:$0xff]
      %v1683 = vld [vmem:[#allocation3 + $0x38] sm:$0xff]
      %v1684 = vld [vmem:[#allocation3 + $0x40] sm:$0xff]
      %v1685 = vld [vmem:[#allocation3 + $0x48] sm:$0xff]
      %v1686 = vld [vmem:[#allocation3 + $0x50] sm:$0xff]
      %v1687 = vld [vmem:[#allocation3 + $0x58] sm:$0xff]
      %v1688 = vld [vmem:[#allocation3 + $0x60] sm:$0xff]
      %v1689 = vld [vmem:[#allocation3 + $0x68] sm:$0xff]
      %v1690 = vld [vmem:[#allocation3 + $0x70] sm:$0xff]
      %v1691 = vld [vmem:[#allocation3 + $0x78] sm:$0xff]
      %v1692 = vld [vmem:[#allocation3 + $0x80] sm:$0xff]
      %v1693 = vld [vmem:[#allocation3 + $0x88] sm:$0xff]
      %v1694 = vld [vmem:[#allocation3 + $0x90] sm:$0xff]
      %v1695 = vld [vmem:[#allocation3 + $0x98] sm:$0xff]
      %v1696 = vld [vmem:[#allocation3 + $0xa0] sm:$0xff]
      %v1697 = vld [vmem:[#allocation3 + $0xa8] sm:$0xff]
      %v1698 = vld [vmem:[#allocation3 + $0xb0] sm:$0xff]
      %v1699 = vld [vmem:[#allocation3 + $0xb8] sm:$0xff]
      %v1700 = vld [vmem:[#allocation3 + $0xc0] sm:$0xff]
      %v1701 = vld [vmem:[#allocation3 + $0xc8] sm:$0xff]
      %v1702 = vld [vmem:[#allocation3 + $0xd0] sm:$0xff]
      %v1703 = vld [vmem:[#allocation3 + $0xd8] sm:$0xff]
      %v1704 = vld [vmem:[#allocation3 + $0xe0] sm:$0xff]
      %v1705 = vld [vmem:[#allocation3 + $0xe8] sm:$0xff]
      %v1706 = vld [vmem:[#allocation3 + $0xf0] sm:$0xff]
      %v1707 = vld [vmem:[#allocation3 + $0xf8] sm:$0xff]
      %v1708 = vadd.f32 %v1676, %v1550
      %v1709 = vadd.f32 %v1677, %v1553
      %v1710 = vadd.f32 %v1678, %v1558
      %v1711 = vadd.f32 %v1679, %v1561
      %v1712 = vadd.f32 %v1680, %v1566
      %v1713 = vadd.f32 %v1681, %v1569
      %v1714 = vadd.f32 %v1682, %v1574
      %v1715 = vadd.f32 %v1683, %v1577
      %v1716 = vadd.f32 %v1684, %v1582
      %v1717 = vadd.f32 %v1685, %v1585
      %v1718 = vadd.f32 %v1686, %v1590
      %v1719 = vadd.f32 %v1687, %v1593
      %v1720 = vadd.f32 %v1688, %v1598
      %v1721 = vadd.f32 %v1689, %v1601
      %v1722 = vadd.f32 %v1690, %v1606
      %v1723 = vadd.f32 %v1691, %v1609
      %v1724 = vadd.f32 %v1692, %v1614
      %v1725 = vadd.f32 %v1693, %v1617
      %v1726 = vadd.f32 %v1694, %v1622
      %v1727 = vadd.f32 %v1695, %v1625
      %v1728 = vadd.f32 %v1696, %v1630
      %v1729 = vadd.f32 %v1697, %v1633
      %v1730 = vadd.f32 %v1698, %v1638
      %v1731 = vadd.f32 %v1699, %v1641
      %v1732 = vadd.f32 %v1700, %v1646
      %v1733 = vadd.f32 %v1701, %v1649
      %v1734 = vadd.f32 %v1702, %v1654
      %v1735 = vadd.f32 %v1703, %v1657
      %v1736 = vadd.f32 %v1704, %v1662
      %v1737 = vadd.f32 %v1705, %v1665
      %v1738 = vadd.f32 %v1706, %v1670
      %v1739 = vadd.f32 %v1707, %v1673
      %1740 = vst.msk [vmem:[#allocation3] sm:$0xff] %vm243, %v1708
      %1741 = vst.msk [vmem:[#allocation3 + $0x8] sm:$0xff] %vm243, %v1709
      %1742 = vst.msk [vmem:[#allocation3 + $0x10] sm:$0xff] %vm243, %v1710
      %1743 = vst.msk [vmem:[#allocation3 + $0x18] sm:$0xff] %vm243, %v1711
      %1744 = vst.msk [vmem:[#allocation3 + $0x20] sm:$0xff] %vm243, %v1712
      %1745 = vst.msk [vmem:[#allocation3 + $0x28] sm:$0xff] %vm243, %v1713
      %1746 = vst.msk [vmem:[#allocation3 + $0x30] sm:$0xff] %vm243, %v1714
      %1747 = vst.msk [vmem:[#allocation3 + $0x38] sm:$0xff] %vm243, %v1715
      %1748 = vst.msk [vmem:[#allocation3 + $0x40] sm:$0xff] %vm243, %v1716
      %1749 = vst.msk [vmem:[#allocation3 + $0x48] sm:$0xff] %vm243, %v1717
      %1750 = vst.msk [vmem:[#allocation3 + $0x50] sm:$0xff] %vm243, %v1718
      %1751 = vst.msk [vmem:[#allocation3 + $0x58] sm:$0xff] %vm243, %v1719
      %1752 = vst.msk [vmem:[#allocation3 + $0x60] sm:$0xff] %vm243, %v1720
      %1753 = vst.msk [vmem:[#allocation3 + $0x68] sm:$0xff] %vm243, %v1721
      %1754 = vst.msk [vmem:[#allocation3 + $0x70] sm:$0xff] %vm243, %v1722
      %1755 = vst.msk [vmem:[#allocation3 + $0x78] sm:$0xff] %vm243, %v1723
      %1756 = vst.msk [vmem:[#allocation3 + $0x80] sm:$0xff] %vm243, %v1724
      %1757 = vst.msk [vmem:[#allocation3 + $0x88] sm:$0xff] %vm243, %v1725
      %1758 = vst.msk [vmem:[#allocation3 + $0x90] sm:$0xff] %vm243, %v1726
      %1759 = vst.msk [vmem:[#allocation3 + $0x98] sm:$0xff] %vm243, %v1727
      %1760 = vst.msk [vmem:[#allocation3 + $0xa0] sm:$0xff] %vm243, %v1728
      %1761 = vst.msk [vmem:[#allocation3 + $0xa8] sm:$0xff] %vm243, %v1729
      %1762 = vst.msk [vmem:[#allocation3 + $0xb0] sm:$0xff] %vm243, %v1730
      %1763 = vst.msk [vmem:[#allocation3 + $0xb8] sm:$0xff] %vm243, %v1731
      %1764 = vst.msk [vmem:[#allocation3 + $0xc0] sm:$0xff] %vm243, %v1732
      %1765 = vst.msk [vmem:[#allocation3 + $0xc8] sm:$0xff] %vm243, %v1733
      %1766 = vst.msk [vmem:[#allocation3 + $0xd0] sm:$0xff] %vm243, %v1734
      %1767 = vst.msk [vmem:[#allocation3 + $0xd8] sm:$0xff] %vm243, %v1735
      %1768 = vst.msk [vmem:[#allocation3 + $0xe0] sm:$0xff] %vm243, %v1736
      %1769 = vst.msk [vmem:[#allocation3 + $0xe8] sm:$0xff] %vm243, %v1737
      %1770 = vst.msk [vmem:[#allocation3 + $0xf0] sm:$0xff] %vm243, %v1738
      %1771 = vst.msk [vmem:[#allocation3 + $0xf8] sm:$0xff] %vm243, %v1739
      %1772 = vst.msk [vmem:[%s582] sm:$0xff] %vm243, %v1414
      %1773 = vst.msk [vmem:[%s582 + $0x8] sm:$0xff] %vm243, %v1415
      %1774 = vst.msk [vmem:[%s582 + $0x10] sm:$0xff] %vm243, %v1416
      %1775 = vst.msk [vmem:[%s582 + $0x18] sm:$0xff] %vm243, %v1417
      %1776 = vst.msk [vmem:[%s582 + $0x20] sm:$0xff] %vm243, %v1418
      %1777 = vst.msk [vmem:[%s582 + $0x28] sm:$0xff] %vm243, %v1419
      %1778 = vst.msk [vmem:[%s582 + $0x30] sm:$0xff] %vm243, %v1420
      %1779 = vst.msk [vmem:[%s582 + $0x38] sm:$0xff] %vm243, %v1421
      %1780 = vst.msk [vmem:[%s582 + $0x40] sm:$0xff] %vm243, %v1422
      %1781 = vst.msk [vmem:[%s582 + $0x48] sm:$0xff] %vm243, %v1423
      %1782 = vst.msk [vmem:[%s582 + $0x50] sm:$0xff] %vm243, %v1424
      %1783 = vst.msk [vmem:[%s582 + $0x58] sm:$0xff] %vm243, %v1425
      %1784 = vst.msk [vmem:[%s582 + $0x60] sm:$0xff] %vm243, %v1426
      %1785 = vst.msk [vmem:[%s582 + $0x68] sm:$0xff] %vm243, %v1427
      %1786 = vst.msk [vmem:[%s582 + $0x70] sm:$0xff] %vm243, %v1428
      %1787 = vst.msk [vmem:[%s582 + $0x78] sm:$0xff] %vm243, %v1429
      %1788 = vst.msk [vmem:[%s582 + $0x80] sm:$0xff] %vm243, %v1430
      %1789 = vst.msk [vmem:[%s582 + $0x88] sm:$0xff] %vm243, %v1431
      %1790 = vst.msk [vmem:[%s582 + $0x90] sm:$0xff] %vm243, %v1432
      %1791 = vst.msk [vmem:[%s582 + $0x98] sm:$0xff] %vm243, %v1433
      %1792 = vst.msk [vmem:[%s582 + $0xa0] sm:$0xff] %vm243, %v1434
      %1793 = vst.msk [vmem:[%s582 + $0xa8] sm:$0xff] %vm243, %v1435
      %1794 = vst.msk [vmem:[%s582 + $0xb0] sm:$0xff] %vm243, %v1436
      %1795 = vst.msk [vmem:[%s582 + $0xb8] sm:$0xff] %vm243, %v1437
      %1796 = vst.msk [vmem:[%s582 + $0xc0] sm:$0xff] %vm243, %v1438
      %1797 = vst.msk [vmem:[%s582 + $0xc8] sm:$0xff] %vm243, %v1439
      %1798 = vst.msk [vmem:[%s582 + $0xd0] sm:$0xff] %vm243, %v1440
      %1799 = vst.msk [vmem:[%s582 + $0xd8] sm:$0xff] %vm243, %v1441
      %1800 = vst.msk [vmem:[%s582 + $0xe0] sm:$0xff] %vm243, %v1442
      %1801 = vst.msk [vmem:[%s582 + $0xe8] sm:$0xff] %vm243, %v1443
      %1802 = vst.msk [vmem:[%s582 + $0xf0] sm:$0xff] %vm243, %v1444
      %1803 = vst.msk [vmem:[%s582 + $0xf8] sm:$0xff] %vm243, %v1445
      %v1804 = vld [vmem:[#allocation2] sm:$0xff]
      %v1805 = vld [vmem:[#allocation2 + $0x8] sm:$0xff]
      %v1806 = vld [vmem:[#allocation2 + $0x10] sm:$0xff]
      %v1807 = vld [vmem:[#allocation2 + $0x18] sm:$0xff]
      %v1808 = vld [vmem:[#allocation2 + $0x20] sm:$0xff]
      %v1809 = vld [vmem:[#allocation2 + $0x28] sm:$0xff]
      %v1810 = vld [vmem:[#allocation2 + $0x30] sm:$0xff]
      %v1811 = vld [vmem:[#allocation2 + $0x38] sm:$0xff]
      %v1812 = vld [vmem:[#allocation2 + $0x40] sm:$0xff]
      %v1813 = vld [vmem:[#allocation2 + $0x48] sm:$0xff]
      %v1814 = vld [vmem:[#allocation2 + $0x50] sm:$0xff]
      %v1815 = vld [vmem:[#allocation2 + $0x58] sm:$0xff]
      %v1816 = vld [vmem:[#allocation2 + $0x60] sm:$0xff]
      %v1817 = vld [vmem:[#allocation2 + $0x68] sm:$0xff]
      %v1818 = vld [vmem:[#allocation2 + $0x70] sm:$0xff]
      %v1819 = vld [vmem:[#allocation2 + $0x78] sm:$0xff]
      %v1820 = vld [vmem:[#allocation2 + $0x80] sm:$0xff]
      %v1821 = vld [vmem:[#allocation2 + $0x88] sm:$0xff]
      %v1822 = vld [vmem:[#allocation2 + $0x90] sm:$0xff]
      %v1823 = vld [vmem:[#allocation2 + $0x98] sm:$0xff]
      %v1824 = vld [vmem:[#allocation2 + $0xa0] sm:$0xff]
      %v1825 = vld [vmem:[#allocation2 + $0xa8] sm:$0xff]
      %v1826 = vld [vmem:[#allocation2 + $0xb0] sm:$0xff]
      %v1827 = vld [vmem:[#allocation2 + $0xb8] sm:$0xff]
      %v1828 = vld [vmem:[#allocation2 + $0xc0] sm:$0xff]
      %v1829 = vld [vmem:[#allocation2 + $0xc8] sm:$0xff]
      %v1830 = vld [vmem:[#allocation2 + $0xd0] sm:$0xff]
      %v1831 = vld [vmem:[#allocation2 + $0xd8] sm:$0xff]
      %v1832 = vld [vmem:[#allocation2 + $0xe0] sm:$0xff]
      %v1833 = vld [vmem:[#allocation2 + $0xe8] sm:$0xff]
      %v1834 = vld [vmem:[#allocation2 + $0xf0] sm:$0xff]
      %v1835 = vld [vmem:[#allocation2 + $0xf8] sm:$0xff]
      %v1836 = vld [vmem:[%s647] sm:$0xff]
      %v1837 = vld [vmem:[%s647 + $0x8] sm:$0xff]
      %v1838 = vld [vmem:[%s647 + $0x10] sm:$0xff]
      %v1839 = vld [vmem:[%s647 + $0x18] sm:$0xff]
      %v1840 = vld [vmem:[%s647 + $0x20] sm:$0xff]
      %v1841 = vld [vmem:[%s647 + $0x28] sm:$0xff]
      %v1842 = vld [vmem:[%s647 + $0x30] sm:$0xff]
      %v1843 = vld [vmem:[%s647 + $0x38] sm:$0xff]
      %v1844 = vld [vmem:[%s647 + $0x40] sm:$0xff]
      %v1845 = vld [vmem:[%s647 + $0x48] sm:$0xff]
      %v1846 = vld [vmem:[%s647 + $0x50] sm:$0xff]
      %v1847 = vld [vmem:[%s647 + $0x58] sm:$0xff]
      %v1848 = vld [vmem:[%s647 + $0x60] sm:$0xff]
      %v1849 = vld [vmem:[%s647 + $0x68] sm:$0xff]
      %v1850 = vld [vmem:[%s647 + $0x70] sm:$0xff]
      %v1851 = vld [vmem:[%s647 + $0x78] sm:$0xff]
      %v1852 = vld [vmem:[%s647 + $0x80] sm:$0xff]
      %v1853 = vld [vmem:[%s647 + $0x88] sm:$0xff]
      %v1854 = vld [vmem:[%s647 + $0x90] sm:$0xff]
      %v1855 = vld [vmem:[%s647 + $0x98] sm:$0xff]
      %v1856 = vld [vmem:[%s647 + $0xa0] sm:$0xff]
      %v1857 = vld [vmem:[%s647 + $0xa8] sm:$0xff]
      %v1858 = vld [vmem:[%s647 + $0xb0] sm:$0xff]
      %v1859 = vld [vmem:[%s647 + $0xb8] sm:$0xff]
      %v1860 = vld [vmem:[%s647 + $0xc0] sm:$0xff]
      %v1861 = vld [vmem:[%s647 + $0xc8] sm:$0xff]
      %v1862 = vld [vmem:[%s647 + $0xd0] sm:$0xff]
      %v1863 = vld [vmem:[%s647 + $0xd8] sm:$0xff]
      %v1864 = vld [vmem:[%s647 + $0xe0] sm:$0xff]
      %v1865 = vld [vmem:[%s647 + $0xe8] sm:$0xff]
      %v1866 = vld [vmem:[%s647 + $0xf0] sm:$0xff]
      %v1867 = vld [vmem:[%s647 + $0xf8] sm:$0xff]
      %v1868 = vmax.f32 %v1804, %v1836
      %v1869 = vmax.f32 %v1805, %v1837
      %v1870 = vmax.f32 %v1806, %v1838
      %v1871 = vmax.f32 %v1807, %v1839
      %v1872 = vmax.f32 %v1808, %v1840
      %v1873 = vmax.f32 %v1809, %v1841
      %v1874 = vmax.f32 %v1810, %v1842
      %v1875 = vmax.f32 %v1811, %v1843
      %v1876 = vmax.f32 %v1812, %v1844
      %v1877 = vmax.f32 %v1813, %v1845
      %v1878 = vmax.f32 %v1814, %v1846
      %v1879 = vmax.f32 %v1815, %v1847
      %v1880 = vmax.f32 %v1816, %v1848
      %v1881 = vmax.f32 %v1817, %v1849
      %v1882 = vmax.f32 %v1818, %v1850
      %v1883 = vmax.f32 %v1819, %v1851
      %v1884 = vmax.f32 %v1820, %v1852
      %v1885 = vmax.f32 %v1821, %v1853
      %v1886 = vmax.f32 %v1822, %v1854
      %v1887 = vmax.f32 %v1823, %v1855
      %v1888 = vmax.f32 %v1824, %v1856
      %v1889 = vmax.f32 %v1825, %v1857
      %v1890 = vmax.f32 %v1826, %v1858
      %v1891 = vmax.f32 %v1827, %v1859
      %v1892 = vmax.f32 %v1828, %v1860
      %v1893 = vmax.f32 %v1829, %v1861
      %v1894 = vmax.f32 %v1830, %v1862
      %v1895 = vmax.f32 %v1831, %v1863
      %v1896 = vmax.f32 %v1832, %v1864
      %v1897 = vmax.f32 %v1833, %v1865
      %v1898 = vmax.f32 %v1834, %v1866
      %v1899 = vmax.f32 %v1835, %v1867
      %v1900 = vld [vmem:[%s582] sm:$0xff]
      %v1901 = vld [vmem:[%s582 + $0x8] sm:$0xff]
      %v1902 = vld [vmem:[%s582 + $0x10] sm:$0xff]
      %v1903 = vld [vmem:[%s582 + $0x18] sm:$0xff]
      %v1904 = vld [vmem:[%s582 + $0x20] sm:$0xff]
      %v1905 = vld [vmem:[%s582 + $0x28] sm:$0xff]
      %v1906 = vld [vmem:[%s582 + $0x30] sm:$0xff]
      %v1907 = vld [vmem:[%s582 + $0x38] sm:$0xff]
      %v1908 = vld [vmem:[%s582 + $0x40] sm:$0xff]
      %v1909 = vld [vmem:[%s582 + $0x48] sm:$0xff]
      %v1910 = vld [vmem:[%s582 + $0x50] sm:$0xff]
      %v1911 = vld [vmem:[%s582 + $0x58] sm:$0xff]
      %v1912 = vld [vmem:[%s582 + $0x60] sm:$0xff]
      %v1913 = vld [vmem:[%s582 + $0x68] sm:$0xff]
      %v1914 = vld [vmem:[%s582 + $0x70] sm:$0xff]
      %v1915 = vld [vmem:[%s582 + $0x78] sm:$0xff]
      %v1916 = vld [vmem:[%s582 + $0x80] sm:$0xff]
      %v1917 = vld [vmem:[%s582 + $0x88] sm:$0xff]
      %v1918 = vld [vmem:[%s582 + $0x90] sm:$0xff]
      %v1919 = vld [vmem:[%s582 + $0x98] sm:$0xff]
      %v1920 = vld [vmem:[%s582 + $0xa0] sm:$0xff]
      %v1921 = vld [vmem:[%s582 + $0xa8] sm:$0xff]
      %v1922 = vld [vmem:[%s582 + $0xb0] sm:$0xff]
      %v1923 = vld [vmem:[%s582 + $0xb8] sm:$0xff]
      %v1924 = vld [vmem:[%s582 + $0xc0] sm:$0xff]
      %v1925 = vld [vmem:[%s582 + $0xc8] sm:$0xff]
      %v1926 = vld [vmem:[%s582 + $0xd0] sm:$0xff]
      %v1927 = vld [vmem:[%s582 + $0xd8] sm:$0xff]
      %v1928 = vld [vmem:[%s582 + $0xe0] sm:$0xff]
      %v1929 = vld [vmem:[%s582 + $0xe8] sm:$0xff]
      %v1930 = vld [vmem:[%s582 + $0xf0] sm:$0xff]
      %v1931 = vld [vmem:[%s582 + $0xf8] sm:$0xff]
      %v1932 = vmax.f32 %v1868, %v1900
      %v1933 = vmax.f32 %v1869, %v1901
      %v1934 = vmax.f32 %v1870, %v1902
      %v1935 = vmax.f32 %v1871, %v1903
      %v1936 = vmax.f32 %v1872, %v1904
      %v1937 = vmax.f32 %v1873, %v1905
      %v1938 = vmax.f32 %v1874, %v1906
      %v1939 = vmax.f32 %v1875, %v1907
      %v1940 = vmax.f32 %v1876, %v1908
      %v1941 = vmax.f32 %v1877, %v1909
      %v1942 = vmax.f32 %v1878, %v1910
      %v1943 = vmax.f32 %v1879, %v1911
      %v1944 = vmax.f32 %v1880, %v1912
      %v1945 = vmax.f32 %v1881, %v1913
      %v1946 = vmax.f32 %v1882, %v1914
      %v1947 = vmax.f32 %v1883, %v1915
      %v1948 = vmax.f32 %v1884, %v1916
      %v1949 = vmax.f32 %v1885, %v1917
      %v1950 = vmax.f32 %v1886, %v1918
      %v1951 = vmax.f32 %v1887, %v1919
      %v1952 = vmax.f32 %v1888, %v1920
      %v1953 = vmax.f32 %v1889, %v1921
      %v1954 = vmax.f32 %v1890, %v1922
      %v1955 = vmax.f32 %v1891, %v1923
      %v1956 = vmax.f32 %v1892, %v1924
      %v1957 = vmax.f32 %v1893, %v1925
      %v1958 = vmax.f32 %v1894, %v1926
      %v1959 = vmax.f32 %v1895, %v1927
      %v1960 = vmax.f32 %v1896, %v1928
      %v1961 = vmax.f32 %v1897, %v1929
      %v1962 = vmax.f32 %v1898, %v1930
      %v1963 = vmax.f32 %v1899, %v1931
      %v1964 = vld [vmem:[%s776] sm:$0xff]
      %v1965 = vld [vmem:[%s776 + $0x8] sm:$0xff]
      %v1966 = vld [vmem:[%s776 + $0x10] sm:$0xff]
      %v1967 = vld [vmem:[%s776 + $0x18] sm:$0xff]
      %v1968 = vld [vmem:[%s776 + $0x20] sm:$0xff]
      %v1969 = vld [vmem:[%s776 + $0x28] sm:$0xff]
      %v1970 = vld [vmem:[%s776 + $0x30] sm:$0xff]
      %v1971 = vld [vmem:[%s776 + $0x38] sm:$0xff]
      %v1972 = vld [vmem:[%s776 + $0x40] sm:$0xff]
      %v1973 = vld [vmem:[%s776 + $0x48] sm:$0xff]
      %v1974 = vld [vmem:[%s776 + $0x50] sm:$0xff]
      %v1975 = vld [vmem:[%s776 + $0x58] sm:$0xff]
      %v1976 = vld [vmem:[%s776 + $0x60] sm:$0xff]
      %v1977 = vld [vmem:[%s776 + $0x68] sm:$0xff]
      %v1978 = vld [vmem:[%s776 + $0x70] sm:$0xff]
      %v1979 = vld [vmem:[%s776 + $0x78] sm:$0xff]
      %v1980 = vld [vmem:[%s776 + $0x80] sm:$0xff]
      %v1981 = vld [vmem:[%s776 + $0x88] sm:$0xff]
      %v1982 = vld [vmem:[%s776 + $0x90] sm:$0xff]
      %v1983 = vld [vmem:[%s776 + $0x98] sm:$0xff]
      %v1984 = vld [vmem:[%s776 + $0xa0] sm:$0xff]
      %v1985 = vld [vmem:[%s776 + $0xa8] sm:$0xff]
      %v1986 = vld [vmem:[%s776 + $0xb0] sm:$0xff]
      %v1987 = vld [vmem:[%s776 + $0xb8] sm:$0xff]
      %v1988 = vld [vmem:[%s776 + $0xc0] sm:$0xff]
      %v1989 = vld [vmem:[%s776 + $0xc8] sm:$0xff]
      %v1990 = vld [vmem:[%s776 + $0xd0] sm:$0xff]
      %v1991 = vld [vmem:[%s776 + $0xd8] sm:$0xff]
      %v1992 = vld [vmem:[%s776 + $0xe0] sm:$0xff]
      %v1993 = vld [vmem:[%s776 + $0xe8] sm:$0xff]
      %v1994 = vld [vmem:[%s776 + $0xf0] sm:$0xff]
      %v1995 = vld [vmem:[%s776 + $0xf8] sm:$0xff]
      %v1996 = vmax.f32 %v1932, %v1964
      %v1997 = vmax.f32 %v1933, %v1965
      %v1998 = vmax.f32 %v1934, %v1966
      %v1999 = vmax.f32 %v1935, %v1967
      %v2000 = vmax.f32 %v1936, %v1968
      %v2001 = vmax.f32 %v1937, %v1969
      %v2002 = vmax.f32 %v1938, %v1970
      %v2003 = vmax.f32 %v1939, %v1971
      %v2004 = vmax.f32 %v1940, %v1972
      %v2005 = vmax.f32 %v1941, %v1973
      %v2006 = vmax.f32 %v1942, %v1974
      %v2007 = vmax.f32 %v1943, %v1975
      %v2008 = vmax.f32 %v1944, %v1976
      %v2009 = vmax.f32 %v1945, %v1977
      %v2010 = vmax.f32 %v1946, %v1978
      %v2011 = vmax.f32 %v1947, %v1979
      %v2012 = vmax.f32 %v1948, %v1980
      %v2013 = vmax.f32 %v1949, %v1981
      %v2014 = vmax.f32 %v1950, %v1982
      %v2015 = vmax.f32 %v1951, %v1983
      %v2016 = vmax.f32 %v1952, %v1984
      %v2017 = vmax.f32 %v1953, %v1985
      %v2018 = vmax.f32 %v1954, %v1986
      %v2019 = vmax.f32 %v1955, %v1987
      %v2020 = vmax.f32 %v1956, %v1988
      %v2021 = vmax.f32 %v1957, %v1989
      %v2022 = vmax.f32 %v1958, %v1990
      %v2023 = vmax.f32 %v1959, %v1991
      %v2024 = vmax.f32 %v1960, %v1992
      %v2025 = vmax.f32 %v1961, %v1993
      %v2026 = vmax.f32 %v1962, %v1994
      %v2027 = vmax.f32 %v1963, %v1995
      %v2028 = vld [vmem:[%s841] sm:$0xff]
      %v2029 = vld [vmem:[%s841 + $0x8] sm:$0xff]
      %v2030 = vld [vmem:[%s841 + $0x10] sm:$0xff]
      %v2031 = vld [vmem:[%s841 + $0x18] sm:$0xff]
      %v2032 = vld [vmem:[%s841 + $0x20] sm:$0xff]
      %v2033 = vld [vmem:[%s841 + $0x28] sm:$0xff]
      %v2034 = vld [vmem:[%s841 + $0x30] sm:$0xff]
      %v2035 = vld [vmem:[%s841 + $0x38] sm:$0xff]
      %v2036 = vld [vmem:[%s841 + $0x40] sm:$0xff]
      %v2037 = vld [vmem:[%s841 + $0x48] sm:$0xff]
      %v2038 = vld [vmem:[%s841 + $0x50] sm:$0xff]
      %v2039 = vld [vmem:[%s841 + $0x58] sm:$0xff]
      %v2040 = vld [vmem:[%s841 + $0x60] sm:$0xff]
      %v2041 = vld [vmem:[%s841 + $0x68] sm:$0xff]
      %v2042 = vld [vmem:[%s841 + $0x70] sm:$0xff]
      %v2043 = vld [vmem:[%s841 + $0x78] sm:$0xff]
      %v2044 = vld [vmem:[%s841 + $0x80] sm:$0xff]
      %v2045 = vld [vmem:[%s841 + $0x88] sm:$0xff]
      %v2046 = vld [vmem:[%s841 + $0x90] sm:$0xff]
      %v2047 = vld [vmem:[%s841 + $0x98] sm:$0xff]
      %v2048 = vld [vmem:[%s841 + $0xa0] sm:$0xff]
      %v2049 = vld [vmem:[%s841 + $0xa8] sm:$0xff]
      %v2050 = vld [vmem:[%s841 + $0xb0] sm:$0xff]
      %v2051 = vld [vmem:[%s841 + $0xb8] sm:$0xff]
      %v2052 = vld [vmem:[%s841 + $0xc0] sm:$0xff]
      %v2053 = vld [vmem:[%s841 + $0xc8] sm:$0xff]
      %v2054 = vld [vmem:[%s841 + $0xd0] sm:$0xff]
      %v2055 = vld [vmem:[%s841 + $0xd8] sm:$0xff]
      %v2056 = vld [vmem:[%s841 + $0xe0] sm:$0xff]
      %v2057 = vld [vmem:[%s841 + $0xe8] sm:$0xff]
      %v2058 = vld [vmem:[%s841 + $0xf0] sm:$0xff]
      %v2059 = vld [vmem:[%s841 + $0xf8] sm:$0xff]
      %v2060 = vmax.f32 %v1996, %v2028
      %v2061 = vmax.f32 %v1997, %v2029
      %v2062 = vmax.f32 %v1998, %v2030
      %v2063 = vmax.f32 %v1999, %v2031
      %v2064 = vmax.f32 %v2000, %v2032
      %v2065 = vmax.f32 %v2001, %v2033
      %v2066 = vmax.f32 %v2002, %v2034
      %v2067 = vmax.f32 %v2003, %v2035
      %v2068 = vmax.f32 %v2004, %v2036
      %v2069 = vmax.f32 %v2005, %v2037
      %v2070 = vmax.f32 %v2006, %v2038
      %v2071 = vmax.f32 %v2007, %v2039
      %v2072 = vmax.f32 %v2008, %v2040
      %v2073 = vmax.f32 %v2009, %v2041
      %v2074 = vmax.f32 %v2010, %v2042
      %v2075 = vmax.f32 %v2011, %v2043
      %v2076 = vmax.f32 %v2012, %v2044
      %v2077 = vmax.f32 %v2013, %v2045
      %v2078 = vmax.f32 %v2014, %v2046
      %v2079 = vmax.f32 %v2015, %v2047
      %v2080 = vmax.f32 %v2016, %v2048
      %v2081 = vmax.f32 %v2017, %v2049
      %v2082 = vmax.f32 %v2018, %v2050
      %v2083 = vmax.f32 %v2019, %v2051
      %v2084 = vmax.f32 %v2020, %v2052
      %v2085 = vmax.f32 %v2021, %v2053
      %v2086 = vmax.f32 %v2022, %v2054
      %v2087 = vmax.f32 %v2023, %v2055
      %v2088 = vmax.f32 %v2024, %v2056
      %v2089 = vmax.f32 %v2025, %v2057
      %v2090 = vmax.f32 %v2026, %v2058
      %v2091 = vmax.f32 %v2027, %v2059
      %v2092 = vrot.slane %v2060, 1
      %v2093 = vrot.slane %v2062, 1
      %v2094 = vrot.slane %v2064, 1
      %v2095 = vrot.slane %v2066, 1
      %v2096 = vrot.slane %v2068, 1
      %v2097 = vrot.slane %v2070, 1
      %v2098 = vrot.slane %v2072, 1
      %v2099 = vrot.slane %v2074, 1
      %v2100 = vrot.slane %v2076, 1
      %v2101 = vrot.slane %v2078, 1
      %v2102 = vrot.slane %v2080, 1
      %v2103 = vrot.slane %v2082, 1
      %v2104 = vrot.slane %v2084, 1
      %v2105 = vrot.slane %v2086, 1
      %v2106 = vrot.slane %v2088, 1
      %v2107 = vrot.slane %v2090, 1
      %v2108 = vrot.slane %v2061, 1
      %v2109 = vrot.slane %v2063, 1
      %v2110 = vrot.slane %v2065, 1
      %v2111 = vrot.slane %v2067, 1
      %v2112 = vrot.slane %v2069, 1
      %v2113 = vrot.slane %v2071, 1
      %v2114 = vrot.slane %v2073, 1
      %v2115 = vrot.slane %v2075, 1
      %v2116 = vrot.slane %v2077, 1
      %v2117 = vrot.slane %v2079, 1
      %v2118 = vrot.slane %v2081, 1
      %v2119 = vrot.slane %v2083, 1
      %v2120 = vrot.slane %v2085, 1
      %v2121 = vrot.slane %v2087, 1
      %v2122 = vrot.slane %v2089, 1
      %v2123 = vrot.slane %v2091, 1
      %v2124 = vsel %vm938, %v2092, %v2108
      %v2125 = vsel %vm938, %v2093, %v2109
      %v2126 = vsel %vm938, %v2094, %v2110
      %v2127 = vsel %vm938, %v2095, %v2111
      %v2128 = vsel %vm938, %v2096, %v2112
      %v2129 = vsel %vm938, %v2097, %v2113
      %v2130 = vsel %vm938, %v2098, %v2114
      %v2131 = vsel %vm938, %v2099, %v2115
      %v2132 = vsel %vm938, %v2100, %v2116
      %v2133 = vsel %vm938, %v2101, %v2117
      %v2134 = vsel %vm938, %v2102, %v2118
      %v2135 = vsel %vm938, %v2103, %v2119
      %v2136 = vsel %vm938, %v2104, %v2120
      %v2137 = vsel %vm938, %v2105, %v2121
      %v2138 = vsel %vm938, %v2106, %v2122
      %v2139 = vsel %vm938, %v2107, %v2123
      %v2140 = vsel %vm938, %v2108, %v2092
      %v2141 = vsel %vm938, %v2109, %v2093
      %v2142 = vsel %vm938, %v2110, %v2094
      %v2143 = vsel %vm938, %v2111, %v2095
      %v2144 = vsel %vm938, %v2112, %v2096
      %v2145 = vsel %vm938, %v2113, %v2097
      %v2146 = vsel %vm938, %v2114, %v2098
      %v2147 = vsel %vm938, %v2115, %v2099
      %v2148 = vsel %vm938, %v2116, %v2100
      %v2149 = vsel %vm938, %v2117, %v2101
      %v2150 = vsel %vm938, %v2118, %v2102
      %v2151 = vsel %vm938, %v2119, %v2103
      %v2152 = vsel %vm938, %v2120, %v2104
      %v2153 = vsel %vm938, %v2121, %v2105
      %v2154 = vsel %vm938, %v2122, %v2106
      %v2155 = vsel %vm938, %v2123, %v2107
      %v2156 = vsel %vm975, %v2124, -inf
      %v2157 = vsel %vm976, %v2140, -inf
      %v2158 = vsel %vm975, %v2125, -inf
      %v2159 = vsel %vm976, %v2141, -inf
      %v2160 = vsel %vm975, %v2126, -inf
      %v2161 = vsel %vm976, %v2142, -inf
      %v2162 = vsel %vm975, %v2127, -inf
      %v2163 = vsel %vm976, %v2143, -inf
      %v2164 = vsel %vm975, %v2128, -inf
      %v2165 = vsel %vm976, %v2144, -inf
      %v2166 = vsel %vm975, %v2129, -inf
      %v2167 = vsel %vm976, %v2145, -inf
      %v2168 = vsel %vm975, %v2130, -inf
      %v2169 = vsel %vm976, %v2146, -inf
      %v2170 = vsel %vm975, %v2131, -inf
      %v2171 = vsel %vm976, %v2147, -inf
      %v2172 = vsel %vm975, %v2132, -inf
      %v2173 = vsel %vm976, %v2148, -inf
      %v2174 = vsel %vm975, %v2133, -inf
      %v2175 = vsel %vm976, %v2149, -inf
      %v2176 = vsel %vm975, %v2134, -inf
      %v2177 = vsel %vm976, %v2150, -inf
      %v2178 = vsel %vm975, %v2135, -inf
      %v2179 = vsel %vm976, %v2151, -inf
      %v2180 = vsel %vm975, %v2136, -inf
      %v2181 = vsel %vm976, %v2152, -inf
      %v2182 = vsel %vm975, %v2137, -inf
      %v2183 = vsel %vm976, %v2153, -inf
      %v2184 = vsel %vm975, %v2138, -inf
      %v2185 = vsel %vm976, %v2154, -inf
      %v2186 = vsel %vm975, %v2139, -inf
      %v2187 = vsel %vm976, %v2155, -inf
      %v2188 = vmax.f32 %v2060, %v2156
      %v2189 = vmax.f32 %v2061, %v2157
      %v2190 = vmax.f32 %v2062, %v2158
      %v2191 = vmax.f32 %v2063, %v2159
      %v2192 = vmax.f32 %v2064, %v2160
      %v2193 = vmax.f32 %v2065, %v2161
      %v2194 = vmax.f32 %v2066, %v2162
      %v2195 = vmax.f32 %v2067, %v2163
      %v2196 = vmax.f32 %v2068, %v2164
      %v2197 = vmax.f32 %v2069, %v2165
      %v2198 = vmax.f32 %v2070, %v2166
      %v2199 = vmax.f32 %v2071, %v2167
      %v2200 = vmax.f32 %v2072, %v2168
      %v2201 = vmax.f32 %v2073, %v2169
      %v2202 = vmax.f32 %v2074, %v2170
      %v2203 = vmax.f32 %v2075, %v2171
      %v2204 = vmax.f32 %v2076, %v2172
      %v2205 = vmax.f32 %v2077, %v2173
      %v2206 = vmax.f32 %v2078, %v2174
      %v2207 = vmax.f32 %v2079, %v2175
      %v2208 = vmax.f32 %v2080, %v2176
      %v2209 = vmax.f32 %v2081, %v2177
      %v2210 = vmax.f32 %v2082, %v2178
      %v2211 = vmax.f32 %v2083, %v2179
      %v2212 = vmax.f32 %v2084, %v2180
      %v2213 = vmax.f32 %v2085, %v2181
      %v2214 = vmax.f32 %v2086, %v2182
      %v2215 = vmax.f32 %v2087, %v2183
      %v2216 = vmax.f32 %v2088, %v2184
      %v2217 = vmax.f32 %v2089, %v2185
      %v2218 = vmax.f32 %v2090, %v2186
      %v2219 = vmax.f32 %v2091, %v2187
      %v2220 = vrot.slane %v2060, 7
      %v2221 = vrot.slane %v2062, 7
      %v2222 = vrot.slane %v2064, 7
      %v2223 = vrot.slane %v2066, 7
      %v2224 = vrot.slane %v2068, 7
      %v2225 = vrot.slane %v2070, 7
      %v2226 = vrot.slane %v2072, 7
      %v2227 = vrot.slane %v2074, 7
      %v2228 = vrot.slane %v2076, 7
      %v2229 = vrot.slane %v2078, 7
      %v2230 = vrot.slane %v2080, 7
      %v2231 = vrot.slane %v2082, 7
      %v2232 = vrot.slane %v2084, 7
      %v2233 = vrot.slane %v2086, 7
      %v2234 = vrot.slane %v2088, 7
      %v2235 = vrot.slane %v2090, 7
      %v2236 = vrot.slane %v2061, 7
      %v2237 = vrot.slane %v2063, 7
      %v2238 = vrot.slane %v2065, 7
      %v2239 = vrot.slane %v2067, 7
      %v2240 = vrot.slane %v2069, 7
      %v2241 = vrot.slane %v2071, 7
      %v2242 = vrot.slane %v2073, 7
      %v2243 = vrot.slane %v2075, 7
      %v2244 = vrot.slane %v2077, 7
      %v2245 = vrot.slane %v2079, 7
      %v2246 = vrot.slane %v2081, 7
      %v2247 = vrot.slane %v2083, 7
      %v2248 = vrot.slane %v2085, 7
      %v2249 = vrot.slane %v2087, 7
      %v2250 = vrot.slane %v2089, 7
      %v2251 = vrot.slane %v2091, 7
      %v2252 = vsel %vm1073, %v2220, %v2236
      %v2253 = vsel %vm1073, %v2221, %v2237
      %v2254 = vsel %vm1073, %v2222, %v2238
      %v2255 = vsel %vm1073, %v2223, %v2239
      %v2256 = vsel %vm1073, %v2224, %v2240
      %v2257 = vsel %vm1073, %v2225, %v2241
      %v2258 = vsel %vm1073, %v2226, %v2242
      %v2259 = vsel %vm1073, %v2227, %v2243
      %v2260 = vsel %vm1073, %v2228, %v2244
      %v2261 = vsel %vm1073, %v2229, %v2245
      %v2262 = vsel %vm1073, %v2230, %v2246
      %v2263 = vsel %vm1073, %v2231, %v2247
      %v2264 = vsel %vm1073, %v2232, %v2248
      %v2265 = vsel %vm1073, %v2233, %v2249
      %v2266 = vsel %vm1073, %v2234, %v2250
      %v2267 = vsel %vm1073, %v2235, %v2251
      %v2268 = vsel %vm1073, %v2236, %v2220
      %v2269 = vsel %vm1073, %v2237, %v2221
      %v2270 = vsel %vm1073, %v2238, %v2222
      %v2271 = vsel %vm1073, %v2239, %v2223
      %v2272 = vsel %vm1073, %v2240, %v2224
      %v2273 = vsel %vm1073, %v2241, %v2225
      %v2274 = vsel %vm1073, %v2242, %v2226
      %v2275 = vsel %vm1073, %v2243, %v2227
      %v2276 = vsel %vm1073, %v2244, %v2228
      %v2277 = vsel %vm1073, %v2245, %v2229
      %v2278 = vsel %vm1073, %v2246, %v2230
      %v2279 = vsel %vm1073, %v2247, %v2231
      %v2280 = vsel %vm1073, %v2248, %v2232
      %v2281 = vsel %vm1073, %v2249, %v2233
      %v2282 = vsel %vm1073, %v2250, %v2234
      %v2283 = vsel %vm1073, %v2251, %v2235
      %v2284 = vsel %vm1110, %v2268, -inf
      %v2285 = vsel %vm1111, %v2252, -inf
      %v2286 = vsel %vm1110, %v2269, -inf
      %v2287 = vsel %vm1111, %v2253, -inf
      %v2288 = vsel %vm1110, %v2270, -inf
      %v2289 = vsel %vm1111, %v2254, -inf
      %v2290 = vsel %vm1110, %v2271, -inf
      %v2291 = vsel %vm1111, %v2255, -inf
      %v2292 = vsel %vm1110, %v2272, -inf
      %v2293 = vsel %vm1111, %v2256, -inf
      %v2294 = vsel %vm1110, %v2273, -inf
      %v2295 = vsel %vm1111, %v2257, -inf
      %v2296 = vsel %vm1110, %v2274, -inf
      %v2297 = vsel %vm1111, %v2258, -inf
      %v2298 = vsel %vm1110, %v2275, -inf
      %v2299 = vsel %vm1111, %v2259, -inf
      %v2300 = vsel %vm1110, %v2276, -inf
      %v2301 = vsel %vm1111, %v2260, -inf
      %v2302 = vsel %vm1110, %v2277, -inf
      %v2303 = vsel %vm1111, %v2261, -inf
      %v2304 = vsel %vm1110, %v2278, -inf
      %v2305 = vsel %vm1111, %v2262, -inf
      %v2306 = vsel %vm1110, %v2279, -inf
      %v2307 = vsel %vm1111, %v2263, -inf
      %v2308 = vsel %vm1110, %v2280, -inf
      %v2309 = vsel %vm1111, %v2264, -inf
      %v2310 = vsel %vm1110, %v2281, -inf
      %v2311 = vsel %vm1111, %v2265, -inf
      %v2312 = vsel %vm1110, %v2282, -inf
      %v2313 = vsel %vm1111, %v2266, -inf
      %v2314 = vsel %vm1110, %v2283, -inf
      %v2315 = vsel %vm1111, %v2267, -inf
      %v2316 = vmax.f32 %v2188, %v2284
      %v2317 = vmax.f32 %v2189, %v2285
      %v2318 = vmax.f32 %v2190, %v2286
      %v2319 = vmax.f32 %v2191, %v2287
      %v2320 = vmax.f32 %v2192, %v2288
      %v2321 = vmax.f32 %v2193, %v2289
      %v2322 = vmax.f32 %v2194, %v2290
      %v2323 = vmax.f32 %v2195, %v2291
      %v2324 = vmax.f32 %v2196, %v2292
      %v2325 = vmax.f32 %v2197, %v2293
      %v2326 = vmax.f32 %v2198, %v2294
      %v2327 = vmax.f32 %v2199, %v2295
      %v2328 = vmax.f32 %v2200, %v2296
      %v2329 = vmax.f32 %v2201, %v2297
      %v2330 = vmax.f32 %v2202, %v2298
      %v2331 = vmax.f32 %v2203, %v2299
      %v2332 = vmax.f32 %v2204, %v2300
      %v2333 = vmax.f32 %v2205, %v2301
      %v2334 = vmax.f32 %v2206, %v2302
      %v2335 = vmax.f32 %v2207, %v2303
      %v2336 = vmax.f32 %v2208, %v2304
      %v2337 = vmax.f32 %v2209, %v2305
      %v2338 = vmax.f32 %v2210, %v2306
      %v2339 = vmax.f32 %v2211, %v2307
      %v2340 = vmax.f32 %v2212, %v2308
      %v2341 = vmax.f32 %v2213, %v2309
      %v2342 = vmax.f32 %v2214, %v2310
      %v2343 = vmax.f32 %v2215, %v2311
      %v2344 = vmax.f32 %v2216, %v2312
      %v2345 = vmax.f32 %v2217, %v2313
      %v2346 = vmax.f32 %v2218, %v2314
      %v2347 = vmax.f32 %v2219, %v2315
      %v2348 = vrot.slane %v2060, 2
      %v2349 = vrot.slane %v2062, 2
      %v2350 = vrot.slane %v2064, 2
      %v2351 = vrot.slane %v2066, 2
      %v2352 = vrot.slane %v2068, 2
      %v2353 = vrot.slane %v2070, 2
      %v2354 = vrot.slane %v2072, 2
      %v2355 = vrot.slane %v2074, 2
      %v2356 = vrot.slane %v2076, 2
      %v2357 = vrot.slane %v2078, 2
      %v2358 = vrot.slane %v2080, 2
      %v2359 = vrot.slane %v2082, 2
      %v2360 = vrot.slane %v2084, 2
      %v2361 = vrot.slane %v2086, 2
      %v2362 = vrot.slane %v2088, 2
      %v2363 = vrot.slane %v2090, 2
      %v2364 = vrot.slane %v2061, 2
      %v2365 = vrot.slane %v2063, 2
      %v2366 = vrot.slane %v2065, 2
      %v2367 = vrot.slane %v2067, 2
      %v2368 = vrot.slane %v2069, 2
      %v2369 = vrot.slane %v2071, 2
      %v2370 = vrot.slane %v2073, 2
      %v2371 = vrot.slane %v2075, 2
      %v2372 = vrot.slane %v2077, 2
      %v2373 = vrot.slane %v2079, 2
      %v2374 = vrot.slane %v2081, 2
      %v2375 = vrot.slane %v2083, 2
      %v2376 = vrot.slane %v2085, 2
      %v2377 = vrot.slane %v2087, 2
      %v2378 = vrot.slane %v2089, 2
      %v2379 = vrot.slane %v2091, 2
      %v2380 = vsel %vm1208, %v2348, %v2364
      %v2381 = vsel %vm1208, %v2349, %v2365
      %v2382 = vsel %vm1208, %v2350, %v2366
      %v2383 = vsel %vm1208, %v2351, %v2367
      %v2384 = vsel %vm1208, %v2352, %v2368
      %v2385 = vsel %vm1208, %v2353, %v2369
      %v2386 = vsel %vm1208, %v2354, %v2370
      %v2387 = vsel %vm1208, %v2355, %v2371
      %v2388 = vsel %vm1208, %v2356, %v2372
      %v2389 = vsel %vm1208, %v2357, %v2373
      %v2390 = vsel %vm1208, %v2358, %v2374
      %v2391 = vsel %vm1208, %v2359, %v2375
      %v2392 = vsel %vm1208, %v2360, %v2376
      %v2393 = vsel %vm1208, %v2361, %v2377
      %v2394 = vsel %vm1208, %v2362, %v2378
      %v2395 = vsel %vm1208, %v2363, %v2379
      %v2396 = vsel %vm1208, %v2364, %v2348
      %v2397 = vsel %vm1208, %v2365, %v2349
      %v2398 = vsel %vm1208, %v2366, %v2350
      %v2399 = vsel %vm1208, %v2367, %v2351
      %v2400 = vsel %vm1208, %v2368, %v2352
      %v2401 = vsel %vm1208, %v2369, %v2353
      %v2402 = vsel %vm1208, %v2370, %v2354
      %v2403 = vsel %vm1208, %v2371, %v2355
      %v2404 = vsel %vm1208, %v2372, %v2356
      %v2405 = vsel %vm1208, %v2373, %v2357
      %v2406 = vsel %vm1208, %v2374, %v2358
      %v2407 = vsel %vm1208, %v2375, %v2359
      %v2408 = vsel %vm1208, %v2376, %v2360
      %v2409 = vsel %vm1208, %v2377, %v2361
      %v2410 = vsel %vm1208, %v2378, %v2362
      %v2411 = vsel %vm1208, %v2379, %v2363
      %v2412 = vsel %vm1245, %v2380, -inf
      %v2413 = vsel %vm1246, %v2396, -inf
      %v2414 = vsel %vm1245, %v2381, -inf
      %v2415 = vsel %vm1246, %v2397, -inf
      %v2416 = vsel %vm1245, %v2382, -inf
      %v2417 = vsel %vm1246, %v2398, -inf
      %v2418 = vsel %vm1245, %v2383, -inf
      %v2419 = vsel %vm1246, %v2399, -inf
      %v2420 = vsel %vm1245, %v2384, -inf
      %v2421 = vsel %vm1246, %v2400, -inf
      %v2422 = vsel %vm1245, %v2385, -inf
      %v2423 = vsel %vm1246, %v2401, -inf
      %v2424 = vsel %vm1245, %v2386, -inf
      %v2425 = vsel %vm1246, %v2402, -inf
      %v2426 = vsel %vm1245, %v2387, -inf
      %v2427 = vsel %vm1246, %v2403, -inf
      %v2428 = vsel %vm1245, %v2388, -inf
      %v2429 = vsel %vm1246, %v2404, -inf
      %v2430 = vsel %vm1245, %v2389, -inf
      %v2431 = vsel %vm1246, %v2405, -inf
      %v2432 = vsel %vm1245, %v2390, -inf
      %v2433 = vsel %vm1246, %v2406, -inf
      %v2434 = vsel %vm1245, %v2391, -inf
      %v2435 = vsel %vm1246, %v2407, -inf
      %v2436 = vsel %vm1245, %v2392, -inf
      %v2437 = vsel %vm1246, %v2408, -inf
      %v2438 = vsel %vm1245, %v2393, -inf
      %v2439 = vsel %vm1246, %v2409, -inf
      %v2440 = vsel %vm1245, %v2394, -inf
      %v2441 = vsel %vm1246, %v2410, -inf
      %v2442 = vsel %vm1245, %v2395, -inf
      %v2443 = vsel %vm1246, %v2411, -inf
      %v2444 = vmax.f32 %v2316, %v2412
      %v2445 = vmax.f32 %v2317, %v2413
      %v2446 = vmax.f32 %v2318, %v2414
      %v2447 = vmax.f32 %v2319, %v2415
      %v2448 = vmax.f32 %v2320, %v2416
      %v2449 = vmax.f32 %v2321, %v2417
      %v2450 = vmax.f32 %v2322, %v2418
      %v2451 = vmax.f32 %v2323, %v2419
      %v2452 = vmax.f32 %v2324, %v2420
      %v2453 = vmax.f32 %v2325, %v2421
      %v2454 = vmax.f32 %v2326, %v2422
      %v2455 = vmax.f32 %v2327, %v2423
      %v2456 = vmax.f32 %v2328, %v2424
      %v2457 = vmax.f32 %v2329, %v2425
      %v2458 = vmax.f32 %v2330, %v2426
      %v2459 = vmax.f32 %v2331, %v2427
      %v2460 = vmax.f32 %v2332, %v2428
      %v2461 = vmax.f32 %v2333, %v2429
      %v2462 = vmax.f32 %v2334, %v2430
      %v2463 = vmax.f32 %v2335, %v2431
      %v2464 = vmax.f32 %v2336, %v2432
      %v2465 = vmax.f32 %v2337, %v2433
      %v2466 = vmax.f32 %v2338, %v2434
      %v2467 = vmax.f32 %v2339, %v2435
      %v2468 = vmax.f32 %v2340, %v2436
      %v2469 = vmax.f32 %v2341, %v2437
      %v2470 = vmax.f32 %v2342, %v2438
      %v2471 = vmax.f32 %v2343, %v2439
      %v2472 = vmax.f32 %v2344, %v2440
      %v2473 = vmax.f32 %v2345, %v2441
      %v2474 = vmax.f32 %v2346, %v2442
      %v2475 = vmax.f32 %v2347, %v2443
      %v2476 = vrot.slane %v2060, 6
      %v2477 = vrot.slane %v2062, 6
      %v2478 = vrot.slane %v2064, 6
      %v2479 = vrot.slane %v2066, 6
      %v2480 = vrot.slane %v2068, 6
      %v2481 = vrot.slane %v2070, 6
      %v2482 = vrot.slane %v2072, 6
      %v2483 = vrot.slane %v2074, 6
      %v2484 = vrot.slane %v2076, 6
      %v2485 = vrot.slane %v2078, 6
      %v2486 = vrot.slane %v2080, 6
      %v2487 = vrot.slane %v2082, 6
      %v2488 = vrot.slane %v2084, 6
      %v2489 = vrot.slane %v2086, 6
      %v2490 = vrot.slane %v2088, 6
      %v2491 = vrot.slane %v2090, 6
      %v2492 = vrot.slane %v2061, 6
      %v2493 = vrot.slane %v2063, 6
      %v2494 = vrot.slane %v2065, 6
      %v2495 = vrot.slane %v2067, 6
      %v2496 = vrot.slane %v2069, 6
      %v2497 = vrot.slane %v2071, 6
      %v2498 = vrot.slane %v2073, 6
      %v2499 = vrot.slane %v2075, 6
      %v2500 = vrot.slane %v2077, 6
      %v2501 = vrot.slane %v2079, 6
      %v2502 = vrot.slane %v2081, 6
      %v2503 = vrot.slane %v2083, 6
      %v2504 = vrot.slane %v2085, 6
      %v2505 = vrot.slane %v2087, 6
      %v2506 = vrot.slane %v2089, 6
      %v2507 = vrot.slane %v2091, 6
      %v2508 = vsel %vm1343, %v2476, %v2492
      %v2509 = vsel %vm1343, %v2477, %v2493
      %v2510 = vsel %vm1343, %v2478, %v2494
      %v2511 = vsel %vm1343, %v2479, %v2495
      %v2512 = vsel %vm1343, %v2480, %v2496
      %v2513 = vsel %vm1343, %v2481, %v2497
      %v2514 = vsel %vm1343, %v2482, %v2498
      %v2515 = vsel %vm1343, %v2483, %v2499
      %v2516 = vsel %vm1343, %v2484, %v2500
      %v2517 = vsel %vm1343, %v2485, %v2501
      %v2518 = vsel %vm1343, %v2486, %v2502
      %v2519 = vsel %vm1343, %v2487, %v2503
      %v2520 = vsel %vm1343, %v2488, %v2504
      %v2521 = vsel %vm1343, %v2489, %v2505
      %v2522 = vsel %vm1343, %v2490, %v2506
      %v2523 = vsel %vm1343, %v2491, %v2507
      %v2524 = vsel %vm1343, %v2492, %v2476
      %v2525 = vsel %vm1343, %v2493, %v2477
      %v2526 = vsel %vm1343, %v2494, %v2478
      %v2527 = vsel %vm1343, %v2495, %v2479
      %v2528 = vsel %vm1343, %v2496, %v2480
      %v2529 = vsel %vm1343, %v2497, %v2481
      %v2530 = vsel %vm1343, %v2498, %v2482
      %v2531 = vsel %vm1343, %v2499, %v2483
      %v2532 = vsel %vm1343, %v2500, %v2484
      %v2533 = vsel %vm1343, %v2501, %v2485
      %v2534 = vsel %vm1343, %v2502, %v2486
      %v2535 = vsel %vm1343, %v2503, %v2487
      %v2536 = vsel %vm1343, %v2504, %v2488
      %v2537 = vsel %vm1343, %v2505, %v2489
      %v2538 = vsel %vm1343, %v2506, %v2490
      %v2539 = vsel %vm1343, %v2507, %v2491
      %v2540 = vsel %vm1380, %v2524, -inf
      %v2541 = vsel %vm1381, %v2508, -inf
      %v2542 = vsel %vm1380, %v2525, -inf
      %v2543 = vsel %vm1381, %v2509, -inf
      %v2544 = vsel %vm1380, %v2526, -inf
      %v2545 = vsel %vm1381, %v2510, -inf
      %v2546 = vsel %vm1380, %v2527, -inf
      %v2547 = vsel %vm1381, %v2511, -inf
      %v2548 = vsel %vm1380, %v2528, -inf
      %v2549 = vsel %vm1381, %v2512, -inf
      %v2550 = vsel %vm1380, %v2529, -inf
      %v2551 = vsel %vm1381, %v2513, -inf
      %v2552 = vsel %vm1380, %v2530, -inf
      %v2553 = vsel %vm1381, %v2514, -inf
      %v2554 = vsel %vm1380, %v2531, -inf
      %v2555 = vsel %vm1381, %v2515, -inf
      %v2556 = vsel %vm1380, %v2532, -inf
      %v2557 = vsel %vm1381, %v2516, -inf
      %v2558 = vsel %vm1380, %v2533, -inf
      %v2559 = vsel %vm1381, %v2517, -inf
      %v2560 = vsel %vm1380, %v2534, -inf
      %v2561 = vsel %vm1381, %v2518, -inf
      %v2562 = vsel %vm1380, %v2535, -inf
      %v2563 = vsel %vm1381, %v2519, -inf
      %v2564 = vsel %vm1380, %v2536, -inf
      %v2565 = vsel %vm1381, %v2520, -inf
      %v2566 = vsel %vm1380, %v2537, -inf
      %v2567 = vsel %vm1381, %v2521, -inf
      %v2568 = vsel %vm1380, %v2538, -inf
      %v2569 = vsel %vm1381, %v2522, -inf
      %v2570 = vsel %vm1380, %v2539, -inf
      %v2571 = vsel %vm1381, %v2523, -inf
      %v2572 = vmax.f32 %v2444, %v2540
      %v2573 = vmax.f32 %v2445, %v2541
      %v2574 = vmax.f32 %v2446, %v2542
      %v2575 = vmax.f32 %v2447, %v2543
      %v2576 = vmax.f32 %v2448, %v2544
      %v2577 = vmax.f32 %v2449, %v2545
      %v2578 = vmax.f32 %v2450, %v2546
      %v2579 = vmax.f32 %v2451, %v2547
      %v2580 = vmax.f32 %v2452, %v2548
      %v2581 = vmax.f32 %v2453, %v2549
      %v2582 = vmax.f32 %v2454, %v2550
      %v2583 = vmax.f32 %v2455, %v2551
      %v2584 = vmax.f32 %v2456, %v2552
      %v2585 = vmax.f32 %v2457, %v2553
      %v2586 = vmax.f32 %v2458, %v2554
      %v2587 = vmax.f32 %v2459, %v2555
      %v2588 = vmax.f32 %v2460, %v2556
      %v2589 = vmax.f32 %v2461, %v2557
      %v2590 = vmax.f32 %v2462, %v2558
      %v2591 = vmax.f32 %v2463, %v2559
      %v2592 = vmax.f32 %v2464, %v2560
      %v2593 = vmax.f32 %v2465, %v2561
      %v2594 = vmax.f32 %v2466, %v2562
      %v2595 = vmax.f32 %v2467, %v2563
      %v2596 = vmax.f32 %v2468, %v2564
      %v2597 = vmax.f32 %v2469, %v2565
      %v2598 = vmax.f32 %v2470, %v2566
      %v2599 = vmax.f32 %v2471, %v2567
      %v2600 = vmax.f32 %v2472, %v2568
      %v2601 = vmax.f32 %v2473, %v2569
      %v2602 = vmax.f32 %v2474, %v2570
      %v2603 = vmax.f32 %v2475, %v2571
      %v2604 = vpack.c.bf16 %v2573, %v2572
      %v2605 = vpack.c.bf16 %v2575, %v2574
      %v2606 = vpack.c.bf16 %v2577, %v2576
      %v2607 = vpack.c.bf16 %v2579, %v2578
      %v2608 = vpack.c.bf16 %v2581, %v2580
      %v2609 = vpack.c.bf16 %v2583, %v2582
      %v2610 = vpack.c.bf16 %v2585, %v2584
      %v2611 = vpack.c.bf16 %v2587, %v2586
      %v2612 = vpack.c.bf16 %v2589, %v2588
      %v2613 = vpack.c.bf16 %v2591, %v2590
      %v2614 = vpack.c.bf16 %v2593, %v2592
      %v2615 = vpack.c.bf16 %v2595, %v2594
      %v2616 = vpack.c.bf16 %v2597, %v2596
      %v2617 = vpack.c.bf16 %v2599, %v2598
      %v2618 = vpack.c.bf16 %v2601, %v2600
      %v2619 = vpack.c.bf16 %v2603, %v2602
      %s2620 = scalar_lea.vmem %s1, 4
      %v2621 = vld [vmem:[%s2620] sm:$0x3]
      %v2623 = vsel %vm243, %v2604, 0
      %v2626 = vsel %vm243, %v2605, 0
      %v2629 = vsel %vm243, %v2606, 0
      %v2632 = vsel %vm243, %v2607, 0
      %v2635 = vsel %vm243, %v2608, 0
      %v2638 = vsel %vm243, %v2609, 0
      %v2641 = vsel %vm243, %v2610, 0
      %v2644 = vsel %vm243, %v2611, 0
      %v2647 = vsel %vm243, %v2612, 0
      %v2650 = vsel %vm243, %v2613, 0
      %v2653 = vsel %vm243, %v2614, 0
      %v2656 = vsel %vm243, %v2615, 0
      %v2659 = vsel %vm243, %v2616, 0
      %v2662 = vsel %vm243, %v2617, 0
      %v2665 = vsel %vm243, %v2618, 0
      %v2668 = vsel %vm243, %v2619, 0
      %v2671 = vsel %vm385, %v2621, 0
      %2673 = vmatprep.subr.bf16.mxu0 0
      %2674 = vmatpush1.bf16.msra.mxu0 %v2671
      %2675 = vmatprep.subr.bf16.mxu0 0
      %2676 = vmatpush1.bf16.msra.mxu0 0
      %2677 = vmatprep.subr.bf16.mxu0 0
      %2678 = vmatpush1.bf16.msra.mxu0 0
      %2679 = vmatprep.subr.bf16.mxu0 0
      %2680 = vmatpush1.bf16.msra.mxu0 0
      %2681 = vmatprep.subr.bf16.mxu0 0
      %2682 = vmatpush1.bf16.msra.mxu0 0
      %2683 = vmatprep.subr.bf16.mxu0 0
      %2684 = vmatpush1.bf16.msra.mxu0 0
      %2685 = vmatprep.subr.bf16.mxu0 0
      %2686 = vmatpush1.bf16.msra.mxu0 0
      %2687 = vmatprep.subr.bf16.mxu0 0
      %2688 = vmatpush1.bf16.msra.mxu0 0
      %2689 = vmatprep.subr.bf16.mxu0 0
      %2690 = vmatpush1.bf16.msra.mxu0 0
      %2691 = vmatprep.subr.bf16.mxu0 0
      %2692 = vmatpush1.bf16.msra.mxu0 0
      %2693 = vmatprep.subr.bf16.mxu0 0
      %2694 = vmatpush1.bf16.msra.mxu0 0
      %2695 = vmatprep.subr.bf16.mxu0 0
      %2696 = vmatpush1.bf16.msra.mxu0 0
      %2697 = vmatprep.subr.bf16.mxu0 0
      %2698 = vmatpush1.bf16.msra.mxu0 0
      %2699 = vmatprep.subr.bf16.mxu0 0
      %2700 = vmatpush1.bf16.msra.mxu0 0
      %2701 = vmatprep.subr.bf16.mxu0 0
      %2702 = vmatpush1.bf16.msra.mxu0 0
      %2703 = vmatprep.subr.bf16.mxu0 0
      %2704 = vmatpush1.bf16.msra.mxu0 0
      %2705 = vmatprep.mubr.bf16.mxu0 0
      %2706 = vmatmul.mubr.bf16.gmra.mrb[0].mxu0 %v2623
      %v2707 = vpop.f32.mrb[0].mxu0
      %v2708 = vadd.f32 0.0, %v2707
      %v2709 = vpop.f32.mrb[0].mxu0
      %v2710 = vpop.f32.mrb[0].mxu0
      %v2711 = vadd.f32 0.0, %v2710
      %v2712 = vpop.f32.mrb[0].mxu0
      %2713 = vmatprep.mubr.bf16.mxu0 0
      %2714 = vmatmul.mubr.bf16.gmra.mrb[0].mxu0 %v2626
      %v2715 = vpop.f32.mrb[0].mxu0
      %v2716 = vadd.f32 0.0, %v2715
      %v2717 = vpop.f32.mrb[0].mxu0
      %v2718 = vpop.f32.mrb[0].mxu0
      %v2719 = vadd.f32 0.0, %v2718
      %v2720 = vpop.f32.mrb[0].mxu0
      %2721 = vmatprep.mubr.bf16.mxu0 0
      %2722 = vmatmul.mubr.bf16.gmra.mrb[0].mxu0 %v2629
      %v2723 = vpop.f32.mrb[0].mxu0
      %v2724 = vadd.f32 0.0, %v2723
      %v2725 = vpop.f32.mrb[0].mxu0
      %v2726 = vpop.f32.mrb[0].mxu0
      %v2727 = vadd.f32 0.0, %v2726
      %v2728 = vpop.f32.mrb[0].mxu0
      %2729 = vmatprep.mubr.bf16.mxu0 0
      %2730 = vmatmul.mubr.bf16.gmra.mrb[0].mxu0 %v2632
      %v2731 = vpop.f32.mrb[0].mxu0
      %v2732 = vadd.f32 0.0, %v2731
      %v2733 = vpop.f32.mrb[0].mxu0
      %v2734 = vpop.f32.mrb[0].mxu0
      %v2735 = vadd.f32 0.0, %v2734
      %v2736 = vpop.f32.mrb[0].mxu0
      %2737 = vmatprep.mubr.bf16.mxu0 0
      %2738 = vmatmul.mubr.bf16.gmra.mrb[0].mxu0 %v2635
      %v2739 = vpop.f32.mrb[0].mxu0
      %v2740 = vadd.f32 0.0, %v2739
      %v2741 = vpop.f32.mrb[0].mxu0
      %v2742 = vpop.f32.mrb[0].mxu0
      %v2743 = vadd.f32 0.0, %v2742
      %v2744 = vpop.f32.mrb[0].mxu0
      %2745 = vmatprep.mubr.bf16.mxu0 0
      %2746 = vmatmul.mubr.bf16.gmra.mrb[0].mxu0 %v2638
      %v2747 = vpop.f32.mrb[0].mxu0
      %v2748 = vadd.f32 0.0, %v2747
      %v2749 = vpop.f32.mrb[0].mxu0
      %v2750 = vpop.f32.mrb[0].mxu0
      %v2751 = vadd.f32 0.0, %v2750
      %v2752 = vpop.f32.mrb[0].mxu0
      %2753 = vmatprep.mubr.bf16.mxu0 0
      %2754 = vmatmul.mubr.bf16.gmra.mrb[0].mxu0 %v2641
      %v2755 = vpop.f32.mrb[0].mxu0
      %v2756 = vadd.f32 0.0, %v2755
      %v2757 = vpop.f32.mrb[0].mxu0
      %v2758 = vpop.f32.mrb[0].mxu0
      %v2759 = vadd.f32 0.0, %v2758
      %v2760 = vpop.f32.mrb[0].mxu0
      %2761 = vmatprep.mubr.bf16.mxu0 0
      %2762 = vmatmul.mubr.bf16.gmra.mrb[0].mxu0 %v2644
      %v2763 = vpop.f32.mrb[0].mxu0
      %v2764 = vadd.f32 0.0, %v2763
      %v2765 = vpop.f32.mrb[0].mxu0
      %v2766 = vpop.f32.mrb[0].mxu0
      %v2767 = vadd.f32 0.0, %v2766
      %v2768 = vpop.f32.mrb[0].mxu0
      %2769 = vmatprep.mubr.bf16.mxu0 0
      %2770 = vmatmul.mubr.bf16.gmra.mrb[0].mxu0 %v2647
      %v2771 = vpop.f32.mrb[0].mxu0
      %v2772 = vadd.f32 0.0, %v2771
      %v2773 = vpop.f32.mrb[0].mxu0
      %v2774 = vpop.f32.mrb[0].mxu0
      %v2775 = vadd.f32 0.0, %v2774
      %v2776 = vpop.f32.mrb[0].mxu0
      %2777 = vmatprep.mubr.bf16.mxu0 0
      %2778 = vmatmul.mubr.bf16.gmra.mrb[0].mxu0 %v2650
      %v2779 = vpop.f32.mrb[0].mxu0
      %v2780 = vadd.f32 0.0, %v2779
      %v2781 = vpop.f32.mrb[0].mxu0
      %v2782 = vpop.f32.mrb[0].mxu0
      %v2783 = vadd.f32 0.0, %v2782
      %v2784 = vpop.f32.mrb[0].mxu0
      %2785 = vmatprep.mubr.bf16.mxu0 0
      %2786 = vmatmul.mubr.bf16.gmra.mrb[0].mxu0 %v2653
      %v2787 = vpop.f32.mrb[0].mxu0
      %v2788 = vadd.f32 0.0, %v2787
      %v2789 = vpop.f32.mrb[0].mxu0
      %v2790 = vpop.f32.mrb[0].mxu0
      %v2791 = vadd.f32 0.0, %v2790
      %v2792 = vpop.f32.mrb[0].mxu0
      %2793 = vmatprep.mubr.bf16.mxu0 0
      %2794 = vmatmul.mubr.bf16.gmra.mrb[0].mxu0 %v2656
      %v2795 = vpop.f32.mrb[0].mxu0
      %v2796 = vadd.f32 0.0, %v2795
      %v2797 = vpop.f32.mrb[0].mxu0
      %v2798 = vpop.f32.mrb[0].mxu0
      %v2799 = vadd.f32 0.0, %v2798
      %v2800 = vpop.f32.mrb[0].mxu0
      %2801 = vmatprep.mubr.bf16.mxu0 0
      %2802 = vmatmul.mubr.bf16.gmra.mrb[0].mxu0 %v2659
      %v2803 = vpop.f32.mrb[0].mxu0
      %v2804 = vadd.f32 0.0, %v2803
      %v2805 = vpop.f32.mrb[0].mxu0
      %v2806 = vpop.f32.mrb[0].mxu0
      %v2807 = vadd.f32 0.0, %v2806
      %v2808 = vpop.f32.mrb[0].mxu0
      %2809 = vmatprep.mubr.bf16.mxu0 0
      %2810 = vmatmul.mubr.bf16.gmra.mrb[0].mxu0 %v2662
      %v2811 = vpop.f32.mrb[0].mxu0
      %v2812 = vadd.f32 0.0, %v2811
      %v2813 = vpop.f32.mrb[0].mxu0
      %v2814 = vpop.f32.mrb[0].mxu0
      %v2815 = vadd.f32 0.0, %v2814
      %v2816 = vpop.f32.mrb[0].mxu0
      %2817 = vmatprep.mubr.bf16.mxu0 0
      %2818 = vmatmul.mubr.bf16.gmra.mrb[0].mxu0 %v2665
      %v2819 = vpop.f32.mrb[0].mxu0
      %v2820 = vadd.f32 0.0, %v2819
      %v2821 = vpop.f32.mrb[0].mxu0
      %v2822 = vpop.f32.mrb[0].mxu0
      %v2823 = vadd.f32 0.0, %v2822
      %v2824 = vpop.f32.mrb[0].mxu0
      %2825 = vmatprep.mubr.bf16.mxu0 0
      %2826 = vmatmul.mubr.bf16.gmra.mrb[0].mxu0 %v2668
      %v2827 = vpop.f32.mrb[0].mxu0
      %v2828 = vadd.f32 0.0, %v2827
      %v2829 = vpop.f32.mrb[0].mxu0
      %v2830 = vpop.f32.mrb[0].mxu0
      %v2831 = vadd.f32 0.0, %v2830
      %v2832 = vpop.f32.mrb[0].mxu0
      %2833 = vdwg.mxu0
      %v2834 = vld [vmem:[#allocation3] sm:$0xff]
      %v2835 = vld [vmem:[#allocation3 + $0x8] sm:$0xff]
      %v2836 = vld [vmem:[#allocation3 + $0x10] sm:$0xff]
      %v2837 = vld [vmem:[#allocation3 + $0x18] sm:$0xff]
      %v2838 = vld [vmem:[#allocation3 + $0x20] sm:$0xff]
      %v2839 = vld [vmem:[#allocation3 + $0x28] sm:$0xff]
      %v2840 = vld [vmem:[#allocation3 + $0x30] sm:$0xff]
      %v2841 = vld [vmem:[#allocation3 + $0x38] sm:$0xff]
      %v2842 = vld [vmem:[#allocation3 + $0x40] sm:$0xff]
      %v2843 = vld [vmem:[#allocation3 + $0x48] sm:$0xff]
      %v2844 = vld [vmem:[#allocation3 + $0x50] sm:$0xff]
      %v2845 = vld [vmem:[#allocation3 + $0x58] sm:$0xff]
      %v2846 = vld [vmem:[#allocation3 + $0x60] sm:$0xff]
      %v2847 = vld [vmem:[#allocation3 + $0x68] sm:$0xff]
      %v2848 = vld [vmem:[#allocation3 + $0x70] sm:$0xff]
      %v2849 = vld [vmem:[#allocation3 + $0x78] sm:$0xff]
      %v2850 = vld [vmem:[#allocation3 + $0x80] sm:$0xff]
      %v2851 = vld [vmem:[#allocation3 + $0x88] sm:$0xff]
      %v2852 = vld [vmem:[#allocation3 + $0x90] sm:$0xff]
      %v2853 = vld [vmem:[#allocation3 + $0x98] sm:$0xff]
      %v2854 = vld [vmem:[#allocation3 + $0xa0] sm:$0xff]
      %v2855 = vld [vmem:[#allocation3 + $0xa8] sm:$0xff]
      %v2856 = vld [vmem:[#allocation3 + $0xb0] sm:$0xff]
      %v2857 = vld [vmem:[#allocation3 + $0xb8] sm:$0xff]
      %v2858 = vld [vmem:[#allocation3 + $0xc0] sm:$0xff]
      %v2859 = vld [vmem:[#allocation3 + $0xc8] sm:$0xff]
      %v2860 = vld [vmem:[#allocation3 + $0xd0] sm:$0xff]
      %v2861 = vld [vmem:[#allocation3 + $0xd8] sm:$0xff]
      %v2862 = vld [vmem:[#allocation3 + $0xe0] sm:$0xff]
      %v2863 = vld [vmem:[#allocation3 + $0xe8] sm:$0xff]
      %v2864 = vld [vmem:[#allocation3 + $0xf0] sm:$0xff]
      %v2865 = vld [vmem:[#allocation3 + $0xf8] sm:$0xff]
      %v2866 = vadd.f32 %v2834, %v2708
      %v2867 = vadd.f32 %v2835, %v2711
      %v2868 = vadd.f32 %v2836, %v2716
      %v2869 = vadd.f32 %v2837, %v2719
      %v2870 = vadd.f32 %v2838, %v2724
      %v2871 = vadd.f32 %v2839, %v2727
      %v2872 = vadd.f32 %v2840, %v2732
      %v2873 = vadd.f32 %v2841, %v2735
      %v2874 = vadd.f32 %v2842, %v2740
      %v2875 = vadd.f32 %v2843, %v2743
      %v2876 = vadd.f32 %v2844, %v2748
      %v2877 = vadd.f32 %v2845, %v2751
      %v2878 = vadd.f32 %v2846, %v2756
      %v2879 = vadd.f32 %v2847, %v2759
      %v2880 = vadd.f32 %v2848, %v2764
      %v2881 = vadd.f32 %v2849, %v2767
      %v2882 = vadd.f32 %v2850, %v2772
      %v2883 = vadd.f32 %v2851, %v2775
      %v2884 = vadd.f32 %v2852, %v2780
      %v2885 = vadd.f32 %v2853, %v2783
      %v2886 = vadd.f32 %v2854, %v2788
      %v2887 = vadd.f32 %v2855, %v2791
      %v2888 = vadd.f32 %v2856, %v2796
      %v2889 = vadd.f32 %v2857, %v2799
      %v2890 = vadd.f32 %v2858, %v2804
      %v2891 = vadd.f32 %v2859, %v2807
      %v2892 = vadd.f32 %v2860, %v2812
      %v2893 = vadd.f32 %v2861, %v2815
      %v2894 = vadd.f32 %v2862, %v2820
      %v2895 = vadd.f32 %v2863, %v2823
      %v2896 = vadd.f32 %v2864, %v2828
      %v2897 = vadd.f32 %v2865, %v2831
      %2898 = vst.msk [vmem:[#allocation3] sm:$0xff] %vm243, %v2866
      %2899 = vst.msk [vmem:[#allocation3 + $0x8] sm:$0xff] %vm243, %v2867
      %2900 = vst.msk [vmem:[#allocation3 + $0x10] sm:$0xff] %vm243, %v2868
      %2901 = vst.msk [vmem:[#allocation3 + $0x18] sm:$0xff] %vm243, %v2869
      %2902 = vst.msk [vmem:[#allocation3 + $0x20] sm:$0xff] %vm243, %v2870
      %2903 = vst.msk [vmem:[#allocation3 + $0x28] sm:$0xff] %vm243, %v2871
      %2904 = vst.msk [vmem:[#allocation3 + $0x30] sm:$0xff] %vm243, %v2872
      %2905 = vst.msk [vmem:[#allocation3 + $0x38] sm:$0xff] %vm243, %v2873
      %2906 = vst.msk [vmem:[#allocation3 + $0x40] sm:$0xff] %vm243, %v2874
      %2907 = vst.msk [vmem:[#allocation3 + $0x48] sm:$0xff] %vm243, %v2875
      %2908 = vst.msk [vmem:[#allocation3 + $0x50] sm:$0xff] %vm243, %v2876
      %2909 = vst.msk [vmem:[#allocation3 + $0x58] sm:$0xff] %vm243, %v2877
      %2910 = vst.msk [vmem:[#allocation3 + $0x60] sm:$0xff] %vm243, %v2878
      %2911 = vst.msk [vmem:[#allocation3 + $0x68] sm:$0xff] %vm243, %v2879
      %2912 = vst.msk [vmem:[#allocation3 + $0x70] sm:$0xff] %vm243, %v2880
      %2913 = vst.msk [vmem:[#allocation3 + $0x78] sm:$0xff] %vm243, %v2881
      %2914 = vst.msk [vmem:[#allocation3 + $0x80] sm:$0xff] %vm243, %v2882
      %2915 = vst.msk [vmem:[#allocation3 + $0x88] sm:$0xff] %vm243, %v2883
      %2916 = vst.msk [vmem:[#allocation3 + $0x90] sm:$0xff] %vm243, %v2884
      %2917 = vst.msk [vmem:[#allocation3 + $0x98] sm:$0xff] %vm243, %v2885
      %2918 = vst.msk [vmem:[#allocation3 + $0xa0] sm:$0xff] %vm243, %v2886
      %2919 = vst.msk [vmem:[#allocation3 + $0xa8] sm:$0xff] %vm243, %v2887
      %2920 = vst.msk [vmem:[#allocation3 + $0xb0] sm:$0xff] %vm243, %v2888
      %2921 = vst.msk [vmem:[#allocation3 + $0xb8] sm:$0xff] %vm243, %v2889
      %2922 = vst.msk [vmem:[#allocation3 + $0xc0] sm:$0xff] %vm243, %v2890
      %2923 = vst.msk [vmem:[#allocation3 + $0xc8] sm:$0xff] %vm243, %v2891
      %2924 = vst.msk [vmem:[#allocation3 + $0xd0] sm:$0xff] %vm243, %v2892
      %2925 = vst.msk [vmem:[#allocation3 + $0xd8] sm:$0xff] %vm243, %v2893
      %2926 = vst.msk [vmem:[#allocation3 + $0xe0] sm:$0xff] %vm243, %v2894
      %2927 = vst.msk [vmem:[#allocation3 + $0xe8] sm:$0xff] %vm243, %v2895
      %2928 = vst.msk [vmem:[#allocation3 + $0xf0] sm:$0xff] %vm243, %v2896
      %2929 = vst.msk [vmem:[#allocation3 + $0xf8] sm:$0xff] %vm243, %v2897
      %2930 = vst.msk [vmem:[%s582] sm:$0xff] %vm243, %v2572
      %2931 = vst.msk [vmem:[%s582 + $0x8] sm:$0xff] %vm243, %v2573
      %2932 = vst.msk [vmem:[%s582 + $0x10] sm:$0xff] %vm243, %v2574
      %2933 = vst.msk [vmem:[%s582 + $0x18] sm:$0xff] %vm243, %v2575
      %2934 = vst.msk [vmem:[%s582 + $0x20] sm:$0xff] %vm243, %v2576
      %2935 = vst.msk [vmem:[%s582 + $0x28] sm:$0xff] %vm243, %v2577
      %2936 = vst.msk [vmem:[%s582 + $0x30] sm:$0xff] %vm243, %v2578
      %2937 = vst.msk [vmem:[%s582 + $0x38] sm:$0xff] %vm243, %v2579
      %2938 = vst.msk [vmem:[%s582 + $0x40] sm:$0xff] %vm243, %v2580
      %2939 = vst.msk [vmem:[%s582 + $0x48] sm:$0xff] %vm243, %v2581
      %2940 = vst.msk [vmem:[%s582 + $0x50] sm:$0xff] %vm243, %v2582
      %2941 = vst.msk [vmem:[%s582 + $0x58] sm:$0xff] %vm243, %v2583
      %2942 = vst.msk [vmem:[%s582 + $0x60] sm:$0xff] %vm243, %v2584
      %2943 = vst.msk [vmem:[%s582 + $0x68] sm:$0xff] %vm243, %v2585
      %2944 = vst.msk [vmem:[%s582 + $0x70] sm:$0xff] %vm243, %v2586
      %2945 = vst.msk [vmem:[%s582 + $0x78] sm:$0xff] %vm243, %v2587
      %2946 = vst.msk [vmem:[%s582 + $0x80] sm:$0xff] %vm243, %v2588
      %2947 = vst.msk [vmem:[%s582 + $0x88] sm:$0xff] %vm243, %v2589
      %2948 = vst.msk [vmem:[%s582 + $0x90] sm:$0xff] %vm243, %v2590
      %2949 = vst.msk [vmem:[%s582 + $0x98] sm:$0xff] %vm243, %v2591
      %2950 = vst.msk [vmem:[%s582 + $0xa0] sm:$0xff] %vm243, %v2592
      %2951 = vst.msk [vmem:[%s582 + $0xa8] sm:$0xff] %vm243, %v2593
      %2952 = vst.msk [vmem:[%s582 + $0xb0] sm:$0xff] %vm243, %v2594
      %2953 = vst.msk [vmem:[%s582 + $0xb8] sm:$0xff] %vm243, %v2595
      %2954 = vst.msk [vmem:[%s582 + $0xc0] sm:$0xff] %vm243, %v2596
      %2955 = vst.msk [vmem:[%s582 + $0xc8] sm:$0xff] %vm243, %v2597
      %2956 = vst.msk [vmem:[%s582 + $0xd0] sm:$0xff] %vm243, %v2598
      %2957 = vst.msk [vmem:[%s582 + $0xd8] sm:$0xff] %vm243, %v2599
      %2958 = vst.msk [vmem:[%s582 + $0xe0] sm:$0xff] %vm243, %v2600
      %2959 = vst.msk [vmem:[%s582 + $0xe8] sm:$0xff] %vm243, %v2601
      %2960 = vst.msk [vmem:[%s582 + $0xf0] sm:$0xff] %vm243, %v2602
      %2961 = vst.msk [vmem:[%s582 + $0xf8] sm:$0xff] %vm243, %v2603
      %v2962 = vld [vmem:[#allocation2] sm:$0xff]
      %v2963 = vld [vmem:[#allocation2 + $0x8] sm:$0xff]
      %v2964 = vld [vmem:[#allocation2 + $0x10] sm:$0xff]
      %v2965 = vld [vmem:[#allocation2 + $0x18] sm:$0xff]
      %v2966 = vld [vmem:[#allocation2 + $0x20] sm:$0xff]
      %v2967 = vld [vmem:[#allocation2 + $0x28] sm:$0xff]
      %v2968 = vld [vmem:[#allocation2 + $0x30] sm:$0xff]
      %v2969 = vld [vmem:[#allocation2 + $0x38] sm:$0xff]
      %v2970 = vld [vmem:[#allocation2 + $0x40] sm:$0xff]
      %v2971 = vld [vmem:[#allocation2 + $0x48] sm:$0xff]
      %v2972 = vld [vmem:[#allocation2 + $0x50] sm:$0xff]
      %v2973 = vld [vmem:[#allocation2 + $0x58] sm:$0xff]
      %v2974 = vld [vmem:[#allocation2 + $0x60] sm:$0xff]
      %v2975 = vld [vmem:[#allocation2 + $0x68] sm:$0xff]
      %v2976 = vld [vmem:[#allocation2 + $0x70] sm:$0xff]
      %v2977 = vld [vmem:[#allocation2 + $0x78] sm:$0xff]
      %v2978 = vld [vmem:[#allocation2 + $0x80] sm:$0xff]
      %v2979 = vld [vmem:[#allocation2 + $0x88] sm:$0xff]
      %v2980 = vld [vmem:[#allocation2 + $0x90] sm:$0xff]
      %v2981 = vld [vmem:[#allocation2 + $0x98] sm:$0xff]
      %v2982 = vld [vmem:[#allocation2 + $0xa0] sm:$0xff]
      %v2983 = vld [vmem:[#allocation2 + $0xa8] sm:$0xff]
      %v2984 = vld [vmem:[#allocation2 + $0xb0] sm:$0xff]
      %v2985 = vld [vmem:[#allocation2 + $0xb8] sm:$0xff]
      %v2986 = vld [vmem:[#allocation2 + $0xc0] sm:$0xff]
      %v2987 = vld [vmem:[#allocation2 + $0xc8] sm:$0xff]
      %v2988 = vld [vmem:[#allocation2 + $0xd0] sm:$0xff]
      %v2989 = vld [vmem:[#allocation2 + $0xd8] sm:$0xff]
      %v2990 = vld [vmem:[#allocation2 + $0xe0] sm:$0xff]
      %v2991 = vld [vmem:[#allocation2 + $0xe8] sm:$0xff]
      %v2992 = vld [vmem:[#allocation2 + $0xf0] sm:$0xff]
      %v2993 = vld [vmem:[#allocation2 + $0xf8] sm:$0xff]
      %v2994 = vld [vmem:[%s647] sm:$0xff]
      %v2995 = vld [vmem:[%s647 + $0x8] sm:$0xff]
      %v2996 = vld [vmem:[%s647 + $0x10] sm:$0xff]
      %v2997 = vld [vmem:[%s647 + $0x18] sm:$0xff]
      %v2998 = vld [vmem:[%s647 + $0x20] sm:$0xff]
      %v2999 = vld [vmem:[%s647 + $0x28] sm:$0xff]
      %v3000 = vld [vmem:[%s647 + $0x30] sm:$0xff]
      %v3001 = vld [vmem:[%s647 + $0x38] sm:$0xff]
      %v3002 = vld [vmem:[%s647 + $0x40] sm:$0xff]
      %v3003 = vld [vmem:[%s647 + $0x48] sm:$0xff]
      %v3004 = vld [vmem:[%s647 + $0x50] sm:$0xff]
      %v3005 = vld [vmem:[%s647 + $0x58] sm:$0xff]
      %v3006 = vld [vmem:[%s647 + $0x60] sm:$0xff]
      %v3007 = vld [vmem:[%s647 + $0x68] sm:$0xff]
      %v3008 = vld [vmem:[%s647 + $0x70] sm:$0xff]
      %v3009 = vld [vmem:[%s647 + $0x78] sm:$0xff]
      %v3010 = vld [vmem:[%s647 + $0x80] sm:$0xff]
      %v3011 = vld [vmem:[%s647 + $0x88] sm:$0xff]
      %v3012 = vld [vmem:[%s647 + $0x90] sm:$0xff]
      %v3013 = vld [vmem:[%s647 + $0x98] sm:$0xff]
      %v3014 = vld [vmem:[%s647 + $0xa0] sm:$0xff]
      %v3015 = vld [vmem:[%s647 + $0xa8] sm:$0xff]
      %v3016 = vld [vmem:[%s647 + $0xb0] sm:$0xff]
      %v3017 = vld [vmem:[%s647 + $0xb8] sm:$0xff]
      %v3018 = vld [vmem:[%s647 + $0xc0] sm:$0xff]
      %v3019 = vld [vmem:[%s647 + $0xc8] sm:$0xff]
      %v3020 = vld [vmem:[%s647 + $0xd0] sm:$0xff]
      %v3021 = vld [vmem:[%s647 + $0xd8] sm:$0xff]
      %v3022 = vld [vmem:[%s647 + $0xe0] sm:$0xff]
      %v3023 = vld [vmem:[%s647 + $0xe8] sm:$0xff]
      %v3024 = vld [vmem:[%s647 + $0xf0] sm:$0xff]
      %v3025 = vld [vmem:[%s647 + $0xf8] sm:$0xff]
      %v3026 = vmax.f32 %v2962, %v2994
      %v3027 = vmax.f32 %v2963, %v2995
      %v3028 = vmax.f32 %v2964, %v2996
      %v3029 = vmax.f32 %v2965, %v2997
      %v3030 = vmax.f32 %v2966, %v2998
      %v3031 = vmax.f32 %v2967, %v2999
      %v3032 = vmax.f32 %v2968, %v3000
      %v3033 = vmax.f32 %v2969, %v3001
      %v3034 = vmax.f32 %v2970, %v3002
      %v3035 = vmax.f32 %v2971, %v3003
      %v3036 = vmax.f32 %v2972, %v3004
      %v3037 = vmax.f32 %v2973, %v3005
      %v3038 = vmax.f32 %v2974, %v3006
      %v3039 = vmax.f32 %v2975, %v3007
      %v3040 = vmax.f32 %v2976, %v3008
      %v3041 = vmax.f32 %v2977, %v3009
      %v3042 = vmax.f32 %v2978, %v3010
      %v3043 = vmax.f32 %v2979, %v3011
      %v3044 = vmax.f32 %v2980, %v3012
      %v3045 = vmax.f32 %v2981, %v3013
      %v3046 = vmax.f32 %v2982, %v3014
      %v3047 = vmax.f32 %v2983, %v3015
      %v3048 = vmax.f32 %v2984, %v3016
      %v3049 = vmax.f32 %v2985, %v3017
      %v3050 = vmax.f32 %v2986, %v3018
      %v3051 = vmax.f32 %v2987, %v3019
      %v3052 = vmax.f32 %v2988, %v3020
      %v3053 = vmax.f32 %v2989, %v3021
      %v3054 = vmax.f32 %v2990, %v3022
      %v3055 = vmax.f32 %v2991, %v3023
      %v3056 = vmax.f32 %v2992, %v3024
      %v3057 = vmax.f32 %v2993, %v3025
      %v3058 = vld [vmem:[%s582] sm:$0xff]
      %v3059 = vld [vmem:[%s582 + $0x8] sm:$0xff]
      %v3060 = vld [vmem:[%s582 + $0x10] sm:$0xff]
      %v3061 = vld [vmem:[%s582 + $0x18] sm:$0xff]
      %v3062 = vld [vmem:[%s582 + $0x20] sm:$0xff]
      %v3063 = vld [vmem:[%s582 + $0x28] sm:$0xff]
      %v3064 = vld [vmem:[%s582 + $0x30] sm:$0xff]
      %v3065 = vld [vmem:[%s582 + $0x38] sm:$0xff]
      %v3066 = vld [vmem:[%s582 + $0x40] sm:$0xff]
      %v3067 = vld [vmem:[%s582 + $0x48] sm:$0xff]
      %v3068 = vld [vmem:[%s582 + $0x50] sm:$0xff]
      %v3069 = vld [vmem:[%s582 + $0x58] sm:$0xff]
      %v3070 = vld [vmem:[%s582 + $0x60] sm:$0xff]
      %v3071 = vld [vmem:[%s582 + $0x68] sm:$0xff]
      %v3072 = vld [vmem:[%s582 + $0x70] sm:$0xff]
      %v3073 = vld [vmem:[%s582 + $0x78] sm:$0xff]
      %v3074 = vld [vmem:[%s582 + $0x80] sm:$0xff]
      %v3075 = vld [vmem:[%s582 + $0x88] sm:$0xff]
      %v3076 = vld [vmem:[%s582 + $0x90] sm:$0xff]
      %v3077 = vld [vmem:[%s582 + $0x98] sm:$0xff]
      %v3078 = vld [vmem:[%s582 + $0xa0] sm:$0xff]
      %v3079 = vld [vmem:[%s582 + $0xa8] sm:$0xff]
      %v3080 = vld [vmem:[%s582 + $0xb0] sm:$0xff]
      %v3081 = vld [vmem:[%s582 + $0xb8] sm:$0xff]
      %v3082 = vld [vmem:[%s582 + $0xc0] sm:$0xff]
      %v3083 = vld [vmem:[%s582 + $0xc8] sm:$0xff]
      %v3084 = vld [vmem:[%s582 + $0xd0] sm:$0xff]
      %v3085 = vld [vmem:[%s582 + $0xd8] sm:$0xff]
      %v3086 = vld [vmem:[%s582 + $0xe0] sm:$0xff]
      %v3087 = vld [vmem:[%s582 + $0xe8] sm:$0xff]
      %v3088 = vld [vmem:[%s582 + $0xf0] sm:$0xff]
      %v3089 = vld [vmem:[%s582 + $0xf8] sm:$0xff]
      %v3090 = vmax.f32 %v3026, %v3058
      %v3091 = vmax.f32 %v3027, %v3059
      %v3092 = vmax.f32 %v3028, %v3060
      %v3093 = vmax.f32 %v3029, %v3061
      %v3094 = vmax.f32 %v3030, %v3062
      %v3095 = vmax.f32 %v3031, %v3063
      %v3096 = vmax.f32 %v3032, %v3064
      %v3097 = vmax.f32 %v3033, %v3065
      %v3098 = vmax.f32 %v3034, %v3066
      %v3099 = vmax.f32 %v3035, %v3067
      %v3100 = vmax.f32 %v3036, %v3068
      %v3101 = vmax.f32 %v3037, %v3069
      %v3102 = vmax.f32 %v3038, %v3070
      %v3103 = vmax.f32 %v3039, %v3071
      %v3104 = vmax.f32 %v3040, %v3072
      %v3105 = vmax.f32 %v3041, %v3073
      %v3106 = vmax.f32 %v3042, %v3074
      %v3107 = vmax.f32 %v3043, %v3075
      %v3108 = vmax.f32 %v3044, %v3076
      %v3109 = vmax.f32 %v3045, %v3077
      %v3110 = vmax.f32 %v3046, %v3078
      %v3111 = vmax.f32 %v3047, %v3079
      %v3112 = vmax.f32 %v3048, %v3080
      %v3113 = vmax.f32 %v3049, %v3081
      %v3114 = vmax.f32 %v3050, %v3082
      %v3115 = vmax.f32 %v3051, %v3083
      %v3116 = vmax.f32 %v3052, %v3084
      %v3117 = vmax.f32 %v3053, %v3085
      %v3118 = vmax.f32 %v3054, %v3086
      %v3119 = vmax.f32 %v3055, %v3087
      %v3120 = vmax.f32 %v3056, %v3088
      %v3121 = vmax.f32 %v3057, %v3089
      %v3122 = vld [vmem:[%s776] sm:$0xff]
      %v3123 = vld [vmem:[%s776 + $0x8] sm:$0xff]
      %v3124 = vld [vmem:[%s776 + $0x10] sm:$0xff]
      %v3125 = vld [vmem:[%s776 + $0x18] sm:$0xff]
      %v3126 = vld [vmem:[%s776 + $0x20] sm:$0xff]
      %v3127 = vld [vmem:[%s776 + $0x28] sm:$0xff]
      %v3128 = vld [vmem:[%s776 + $0x30] sm:$0xff]
      %v3129 = vld [vmem:[%s776 + $0x38] sm:$0xff]
      %v3130 = vld [vmem:[%s776 + $0x40] sm:$0xff]
      %v3131 = vld [vmem:[%s776 + $0x48] sm:$0xff]
      %v3132 = vld [vmem:[%s776 + $0x50] sm:$0xff]
      %v3133 = vld [vmem:[%s776 + $0x58] sm:$0xff]
      %v3134 = vld [vmem:[%s776 + $0x60] sm:$0xff]
      %v3135 = vld [vmem:[%s776 + $0x68] sm:$0xff]
      %v3136 = vld [vmem:[%s776 + $0x70] sm:$0xff]
      %v3137 = vld [vmem:[%s776 + $0x78] sm:$0xff]
      %v3138 = vld [vmem:[%s776 + $0x80] sm:$0xff]
      %v3139 = vld [vmem:[%s776 + $0x88] sm:$0xff]
      %v3140 = vld [vmem:[%s776 + $0x90] sm:$0xff]
      %v3141 = vld [vmem:[%s776 + $0x98] sm:$0xff]
      %v3142 = vld [vmem:[%s776 + $0xa0] sm:$0xff]
      %v3143 = vld [vmem:[%s776 + $0xa8] sm:$0xff]
      %v3144 = vld [vmem:[%s776 + $0xb0] sm:$0xff]
      %v3145 = vld [vmem:[%s776 + $0xb8] sm:$0xff]
      %v3146 = vld [vmem:[%s776 + $0xc0] sm:$0xff]
      %v3147 = vld [vmem:[%s776 + $0xc8] sm:$0xff]
      %v3148 = vld [vmem:[%s776 + $0xd0] sm:$0xff]
      %v3149 = vld [vmem:[%s776 + $0xd8] sm:$0xff]
      %v3150 = vld [vmem:[%s776 + $0xe0] sm:$0xff]
      %v3151 = vld [vmem:[%s776 + $0xe8] sm:$0xff]
      %v3152 = vld [vmem:[%s776 + $0xf0] sm:$0xff]
      %v3153 = vld [vmem:[%s776 + $0xf8] sm:$0xff]
      %v3154 = vmax.f32 %v3090, %v3122
      %v3155 = vmax.f32 %v3091, %v3123
      %v3156 = vmax.f32 %v3092, %v3124
      %v3157 = vmax.f32 %v3093, %v3125
      %v3158 = vmax.f32 %v3094, %v3126
      %v3159 = vmax.f32 %v3095, %v3127
      %v3160 = vmax.f32 %v3096, %v3128
      %v3161 = vmax.f32 %v3097, %v3129
      %v3162 = vmax.f32 %v3098, %v3130
      %v3163 = vmax.f32 %v3099, %v3131
      %v3164 = vmax.f32 %v3100, %v3132
      %v3165 = vmax.f32 %v3101, %v3133
      %v3166 = vmax.f32 %v3102, %v3134
      %v3167 = vmax.f32 %v3103, %v3135
      %v3168 = vmax.f32 %v3104, %v3136
      %v3169 = vmax.f32 %v3105, %v3137
      %v3170 = vmax.f32 %v3106, %v3138
      %v3171 = vmax.f32 %v3107, %v3139
      %v3172 = vmax.f32 %v3108, %v3140
      %v3173 = vmax.f32 %v3109, %v3141
      %v3174 = vmax.f32 %v3110, %v3142
      %v3175 = vmax.f32 %v3111, %v3143
      %v3176 = vmax.f32 %v3112, %v3144
      %v3177 = vmax.f32 %v3113, %v3145
      %v3178 = vmax.f32 %v3114, %v3146
      %v3179 = vmax.f32 %v3115, %v3147
      %v3180 = vmax.f32 %v3116, %v3148
      %v3181 = vmax.f32 %v3117, %v3149
      %v3182 = vmax.f32 %v3118, %v3150
      %v3183 = vmax.f32 %v3119, %v3151
      %v3184 = vmax.f32 %v3120, %v3152
      %v3185 = vmax.f32 %v3121, %v3153
      %v3186 = vld [vmem:[%s841] sm:$0xff]
      %v3187 = vld [vmem:[%s841 + $0x8] sm:$0xff]
      %v3188 = vld [vmem:[%s841 + $0x10] sm:$0xff]
      %v3189 = vld [vmem:[%s841 + $0x18] sm:$0xff]
      %v3190 = vld [vmem:[%s841 + $0x20] sm:$0xff]
      %v3191 = vld [vmem:[%s841 + $0x28] sm:$0xff]
      %v3192 = vld [vmem:[%s841 + $0x30] sm:$0xff]
      %v3193 = vld [vmem:[%s841 + $0x38] sm:$0xff]
      %v3194 = vld [vmem:[%s841 + $0x40] sm:$0xff]
      %v3195 = vld [vmem:[%s841 + $0x48] sm:$0xff]
      %v3196 = vld [vmem:[%s841 + $0x50] sm:$0xff]
      %v3197 = vld [vmem:[%s841 + $0x58] sm:$0xff]
      %v3198 = vld [vmem:[%s841 + $0x60] sm:$0xff]
      %v3199 = vld [vmem:[%s841 + $0x68] sm:$0xff]
      %v3200 = vld [vmem:[%s841 + $0x70] sm:$0xff]
      %v3201 = vld [vmem:[%s841 + $0x78] sm:$0xff]
      %v3202 = vld [vmem:[%s841 + $0x80] sm:$0xff]
      %v3203 = vld [vmem:[%s841 + $0x88] sm:$0xff]
      %v3204 = vld [vmem:[%s841 + $0x90] sm:$0xff]
      %v3205 = vld [vmem:[%s841 + $0x98] sm:$0xff]
      %v3206 = vld [vmem:[%s841 + $0xa0] sm:$0xff]
      %v3207 = vld [vmem:[%s841 + $0xa8] sm:$0xff]
      %v3208 = vld [vmem:[%s841 + $0xb0] sm:$0xff]
      %v3209 = vld [vmem:[%s841 + $0xb8] sm:$0xff]
      %v3210 = vld [vmem:[%s841 + $0xc0] sm:$0xff]
      %v3211 = vld [vmem:[%s841 + $0xc8] sm:$0xff]
      %v3212 = vld [vmem:[%s841 + $0xd0] sm:$0xff]
      %v3213 = vld [vmem:[%s841 + $0xd8] sm:$0xff]
      %v3214 = vld [vmem:[%s841 + $0xe0] sm:$0xff]
      %v3215 = vld [vmem:[%s841 + $0xe8] sm:$0xff]
      %v3216 = vld [vmem:[%s841 + $0xf0] sm:$0xff]
      %v3217 = vld [vmem:[%s841 + $0xf8] sm:$0xff]
      %v3218 = vmax.f32 %v3154, %v3186
      %v3219 = vmax.f32 %v3155, %v3187
      %v3220 = vmax.f32 %v3156, %v3188
      %v3221 = vmax.f32 %v3157, %v3189
      %v3222 = vmax.f32 %v3158, %v3190
      %v3223 = vmax.f32 %v3159, %v3191
      %v3224 = vmax.f32 %v3160, %v3192
      %v3225 = vmax.f32 %v3161, %v3193
      %v3226 = vmax.f32 %v3162, %v3194
      %v3227 = vmax.f32 %v3163, %v3195
      %v3228 = vmax.f32 %v3164, %v3196
      %v3229 = vmax.f32 %v3165, %v3197
      %v3230 = vmax.f32 %v3166, %v3198
      %v3231 = vmax.f32 %v3167, %v3199
      %v3232 = vmax.f32 %v3168, %v3200
      %v3233 = vmax.f32 %v3169, %v3201
      %v3234 = vmax.f32 %v3170, %v3202
      %v3235 = vmax.f32 %v3171, %v3203
      %v3236 = vmax.f32 %v3172, %v3204
      %v3237 = vmax.f32 %v3173, %v3205
      %v3238 = vmax.f32 %v3174, %v3206
      %v3239 = vmax.f32 %v3175, %v3207
      %v3240 = vmax.f32 %v3176, %v3208
      %v3241 = vmax.f32 %v3177, %v3209
      %v3242 = vmax.f32 %v3178, %v3210
      %v3243 = vmax.f32 %v3179, %v3211
      %v3244 = vmax.f32 %v3180, %v3212
      %v3245 = vmax.f32 %v3181, %v3213
      %v3246 = vmax.f32 %v3182, %v3214
      %v3247 = vmax.f32 %v3183, %v3215
      %v3248 = vmax.f32 %v3184, %v3216
      %v3249 = vmax.f32 %v3185, %v3217
      %v3250 = vrot.slane %v3218, 1
      %v3251 = vrot.slane %v3220, 1
      %v3252 = vrot.slane %v3222, 1
      %v3253 = vrot.slane %v3224, 1
      %v3254 = vrot.slane %v3226, 1
      %v3255 = vrot.slane %v3228, 1
      %v3256 = vrot.slane %v3230, 1
      %v3257 = vrot.slane %v3232, 1
      %v3258 = vrot.slane %v3234, 1
      %v3259 = vrot.slane %v3236, 1
      %v3260 = vrot.slane %v3238, 1
      %v3261 = vrot.slane %v3240, 1
      %v3262 = vrot.slane %v3242, 1
      %v3263 = vrot.slane %v3244, 1
      %v3264 = vrot.slane %v3246, 1
      %v3265 = vrot.slane %v3248, 1
      %v3266 = vrot.slane %v3219, 1
      %v3267 = vrot.slane %v3221, 1
      %v3268 = vrot.slane %v3223, 1
      %v3269 = vrot.slane %v3225, 1
      %v3270 = vrot.slane %v3227, 1
      %v3271 = vrot.slane %v3229, 1
      %v3272 = vrot.slane %v3231, 1
      %v3273 = vrot.slane %v3233, 1
      %v3274 = vrot.slane %v3235, 1
      %v3275 = vrot.slane %v3237, 1
      %v3276 = vrot.slane %v3239, 1
      %v3277 = vrot.slane %v3241, 1
      %v3278 = vrot.slane %v3243, 1
      %v3279 = vrot.slane %v3245, 1
      %v3280 = vrot.slane %v3247, 1
      %v3281 = vrot.slane %v3249, 1
      %v3282 = vsel %vm938, %v3250, %v3266
      %v3283 = vsel %vm938, %v3251, %v3267
      %v3284 = vsel %vm938, %v3252, %v3268
      %v3285 = vsel %vm938, %v3253, %v3269
      %v3286 = vsel %vm938, %v3254, %v3270
      %v3287 = vsel %vm938, %v3255, %v3271
      %v3288 = vsel %vm938, %v3256, %v3272
      %v3289 = vsel %vm938, %v3257, %v3273
      %v3290 = vsel %vm938, %v3258, %v3274
      %v3291 = vsel %vm938, %v3259, %v3275
      %v3292 = vsel %vm938, %v3260, %v3276
      %v3293 = vsel %vm938, %v3261, %v3277
      %v3294 = vsel %vm938, %v3262, %v3278
      %v3295 = vsel %vm938, %v3263, %v3279
      %v3296 = vsel %vm938, %v3264, %v3280
      %v3297 = vsel %vm938, %v3265, %v3281
      %v3298 = vsel %vm938, %v3266, %v3250
      %v3299 = vsel %vm938, %v3267, %v3251
      %v3300 = vsel %vm938, %v3268, %v3252
      %v3301 = vsel %vm938, %v3269, %v3253
      %v3302 = vsel %vm938, %v3270, %v3254
      %v3303 = vsel %vm938, %v3271, %v3255
      %v3304 = vsel %vm938, %v3272, %v3256
      %v3305 = vsel %vm938, %v3273, %v3257
      %v3306 = vsel %vm938, %v3274, %v3258
      %v3307 = vsel %vm938, %v3275, %v3259
      %v3308 = vsel %vm938, %v3276, %v3260
      %v3309 = vsel %vm938, %v3277, %v3261
      %v3310 = vsel %vm938, %v3278, %v3262
      %v3311 = vsel %vm938, %v3279, %v3263
      %v3312 = vsel %vm938, %v3280, %v3264
      %v3313 = vsel %vm938, %v3281, %v3265
      %v3314 = vsel %vm975, %v3282, -inf
      %v3315 = vsel %vm976, %v3298, -inf
      %v3316 = vsel %vm975, %v3283, -inf
      %v3317 = vsel %vm976, %v3299, -inf
      %v3318 = vsel %vm975, %v3284, -inf
      %v3319 = vsel %vm976, %v3300, -inf
      %v3320 = vsel %vm975, %v3285, -inf
      %v3321 = vsel %vm976, %v3301, -inf
      %v3322 = vsel %vm975, %v3286, -inf
      %v3323 = vsel %vm976, %v3302, -inf
      %v3324 = vsel %vm975, %v3287, -inf
      %v3325 = vsel %vm976, %v3303, -inf
      %v3326 = vsel %vm975, %v3288, -inf
      %v3327 = vsel %vm976, %v3304, -inf
      %v3328 = vsel %vm975, %v3289, -inf
      %v3329 = vsel %vm976, %v3305, -inf
      %v3330 = vsel %vm975, %v3290, -inf
      %v3331 = vsel %vm976, %v3306, -inf
      %v3332 = vsel %vm975, %v3291, -inf
      %v3333 = vsel %vm976, %v3307, -inf
      %v3334 = vsel %vm975, %v3292, -inf
      %v3335 = vsel %vm976, %v3308, -inf
      %v3336 = vsel %vm975, %v3293, -inf
      %v3337 = vsel %vm976, %v3309, -inf
      %v3338 = vsel %vm975, %v3294, -inf
      %v3339 = vsel %vm976, %v3310, -inf
      %v3340 = vsel %vm975, %v3295, -inf
      %v3341 = vsel %vm976, %v3311, -inf
      %v3342 = vsel %vm975, %v3296, -inf
      %v3343 = vsel %vm976, %v3312, -inf
      %v3344 = vsel %vm975, %v3297, -inf
      %v3345 = vsel %vm976, %v3313, -inf
      %v3346 = vmax.f32 %v3218, %v3314
      %v3347 = vmax.f32 %v3219, %v3315
      %v3348 = vmax.f32 %v3220, %v3316
      %v3349 = vmax.f32 %v3221, %v3317
      %v3350 = vmax.f32 %v3222, %v3318
      %v3351 = vmax.f32 %v3223, %v3319
      %v3352 = vmax.f32 %v3224, %v3320
      %v3353 = vmax.f32 %v3225, %v3321
      %v3354 = vmax.f32 %v3226, %v3322
      %v3355 = vmax.f32 %v3227, %v3323
      %v3356 = vmax.f32 %v3228, %v3324
      %v3357 = vmax.f32 %v3229, %v3325
      %v3358 = vmax.f32 %v3230, %v3326
      %v3359 = vmax.f32 %v3231, %v3327
      %v3360 = vmax.f32 %v3232, %v3328
      %v3361 = vmax.f32 %v3233, %v3329
      %v3362 = vmax.f32 %v3234, %v3330
      %v3363 = vmax.f32 %v3235, %v3331
      %v3364 = vmax.f32 %v3236, %v3332
      %v3365 = vmax.f32 %v3237, %v3333
      %v3366 = vmax.f32 %v3238, %v3334
      %v3367 = vmax.f32 %v3239, %v3335
      %v3368 = vmax.f32 %v3240, %v3336
      %v3369 = vmax.f32 %v3241, %v3337
      %v3370 = vmax.f32 %v3242, %v3338
      %v3371 = vmax.f32 %v3243, %v3339
      %v3372 = vmax.f32 %v3244, %v3340
      %v3373 = vmax.f32 %v3245, %v3341
      %v3374 = vmax.f32 %v3246, %v3342
      %v3375 = vmax.f32 %v3247, %v3343
      %v3376 = vmax.f32 %v3248, %v3344
      %v3377 = vmax.f32 %v3249, %v3345
      %v3378 = vrot.slane %v3218, 7
      %v3379 = vrot.slane %v3220, 7
      %v3380 = vrot.slane %v3222, 7
      %v3381 = vrot.slane %v3224, 7
      %v3382 = vrot.slane %v3226, 7
      %v3383 = vrot.slane %v3228, 7
      %v3384 = vrot.slane %v3230, 7
      %v3385 = vrot.slane %v3232, 7
      %v3386 = vrot.slane %v3234, 7
      %v3387 = vrot.slane %v3236, 7
      %v3388 = vrot.slane %v3238, 7
      %v3389 = vrot.slane %v3240, 7
      %v3390 = vrot.slane %v3242, 7
      %v3391 = vrot.slane %v3244, 7
      %v3392 = vrot.slane %v3246, 7
      %v3393 = vrot.slane %v3248, 7
      %v3394 = vrot.slane %v3219, 7
      %v3395 = vrot.slane %v3221, 7
      %v3396 = vrot.slane %v3223, 7
      %v3397 = vrot.slane %v3225, 7
      %v3398 = vrot.slane %v3227, 7
      %v3399 = vrot.slane %v3229, 7
      %v3400 = vrot.slane %v3231, 7
      %v3401 = vrot.slane %v3233, 7
      %v3402 = vrot.slane %v3235, 7
      %v3403 = vrot.slane %v3237, 7
      %v3404 = vrot.slane %v3239, 7
      %v3405 = vrot.slane %v3241, 7
      %v3406 = vrot.slane %v3243, 7
      %v3407 = vrot.slane %v3245, 7
      %v3408 = vrot.slane %v3247, 7
      %v3409 = vrot.slane %v3249, 7
      %v3410 = vsel %vm1073, %v3378, %v3394
      %v3411 = vsel %vm1073, %v3379, %v3395
      %v3412 = vsel %vm1073, %v3380, %v3396
      %v3413 = vsel %vm1073, %v3381, %v3397
      %v3414 = vsel %vm1073, %v3382, %v3398
      %v3415 = vsel %vm1073, %v3383, %v3399
      %v3416 = vsel %vm1073, %v3384, %v3400
      %v3417 = vsel %vm1073, %v3385, %v3401
      %v3418 = vsel %vm1073, %v3386, %v3402
      %v3419 = vsel %vm1073, %v3387, %v3403
      %v3420 = vsel %vm1073, %v3388, %v3404
      %v3421 = vsel %vm1073, %v3389, %v3405
      %v3422 = vsel %vm1073, %v3390, %v3406
      %v3423 = vsel %vm1073, %v3391, %v3407
      %v3424 = vsel %vm1073, %v3392, %v3408
      %v3425 = vsel %vm1073, %v3393, %v3409
      %v3426 = vsel %vm1073, %v3394, %v3378
      %v3427 = vsel %vm1073, %v3395, %v3379
      %v3428 = vsel %vm1073, %v3396, %v3380
      %v3429 = vsel %vm1073, %v3397, %v3381
      %v3430 = vsel %vm1073, %v3398, %v3382
      %v3431 = vsel %vm1073, %v3399, %v3383
      %v3432 = vsel %vm1073, %v3400, %v3384
      %v3433 = vsel %vm1073, %v3401, %v3385
      %v3434 = vsel %vm1073, %v3402, %v3386
      %v3435 = vsel %vm1073, %v3403, %v3387
      %v3436 = vsel %vm1073, %v3404, %v3388
      %v3437 = vsel %vm1073, %v3405, %v3389
      %v3438 = vsel %vm1073, %v3406, %v3390
      %v3439 = vsel %vm1073, %v3407, %v3391
      %v3440 = vsel %vm1073, %v3408, %v3392
      %v3441 = vsel %vm1073, %v3409, %v3393
      %v3442 = vsel %vm1110, %v3426, -inf
      %v3443 = vsel %vm1111, %v3410, -inf
      %v3444 = vsel %vm1110, %v3427, -inf
      %v3445 = vsel %vm1111, %v3411, -inf
      %v3446 = vsel %vm1110, %v3428, -inf
      %v3447 = vsel %vm1111, %v3412, -inf
      %v3448 = vsel %vm1110, %v3429, -inf
      %v3449 = vsel %vm1111, %v3413, -inf
      %v3450 = vsel %vm1110, %v3430, -inf
      %v3451 = vsel %vm1111, %v3414, -inf
      %v3452 = vsel %vm1110, %v3431, -inf
      %v3453 = vsel %vm1111, %v3415, -inf
      %v3454 = vsel %vm1110, %v3432, -inf
      %v3455 = vsel %vm1111, %v3416, -inf
      %v3456 = vsel %vm1110, %v3433, -inf
      %v3457 = vsel %vm1111, %v3417, -inf
      %v3458 = vsel %vm1110, %v3434, -inf
      %v3459 = vsel %vm1111, %v3418, -inf
      %v3460 = vsel %vm1110, %v3435, -inf
      %v3461 = vsel %vm1111, %v3419, -inf
      %v3462 = vsel %vm1110, %v3436, -inf
      %v3463 = vsel %vm1111, %v3420, -inf
      %v3464 = vsel %vm1110, %v3437, -inf
      %v3465 = vsel %vm1111, %v3421, -inf
      %v3466 = vsel %vm1110, %v3438, -inf
      %v3467 = vsel %vm1111, %v3422, -inf
      %v3468 = vsel %vm1110, %v3439, -inf
      %v3469 = vsel %vm1111, %v3423, -inf
      %v3470 = vsel %vm1110, %v3440, -inf
      %v3471 = vsel %vm1111, %v3424, -inf
      %v3472 = vsel %vm1110, %v3441, -inf
      %v3473 = vsel %vm1111, %v3425, -inf
      %v3474 = vmax.f32 %v3346, %v3442
      %v3475 = vmax.f32 %v3347, %v3443
      %v3476 = vmax.f32 %v3348, %v3444
      %v3477 = vmax.f32 %v3349, %v3445
      %v3478 = vmax.f32 %v3350, %v3446
      %v3479 = vmax.f32 %v3351, %v3447
      %v3480 = vmax.f32 %v3352, %v3448
      %v3481 = vmax.f32 %v3353, %v3449
      %v3482 = vmax.f32 %v3354, %v3450
      %v3483 = vmax.f32 %v3355, %v3451
      %v3484 = vmax.f32 %v3356, %v3452
      %v3485 = vmax.f32 %v3357, %v3453
      %v3486 = vmax.f32 %v3358, %v3454
      %v3487 = vmax.f32 %v3359, %v3455
      %v3488 = vmax.f32 %v3360, %v3456
      %v3489 = vmax.f32 %v3361, %v3457
      %v3490 = vmax.f32 %v3362, %v3458
      %v3491 = vmax.f32 %v3363, %v3459
      %v3492 = vmax.f32 %v3364, %v3460
      %v3493 = vmax.f32 %v3365, %v3461
      %v3494 = vmax.f32 %v3366, %v3462
      %v3495 = vmax.f32 %v3367, %v3463
      %v3496 = vmax.f32 %v3368, %v3464
      %v3497 = vmax.f32 %v3369, %v3465
      %v3498 = vmax.f32 %v3370, %v3466
      %v3499 = vmax.f32 %v3371, %v3467
      %v3500 = vmax.f32 %v3372, %v3468
      %v3501 = vmax.f32 %v3373, %v3469
      %v3502 = vmax.f32 %v3374, %v3470
      %v3503 = vmax.f32 %v3375, %v3471
      %v3504 = vmax.f32 %v3376, %v3472
      %v3505 = vmax.f32 %v3377, %v3473
      %v3506 = vrot.slane %v3218, 2
      %v3507 = vrot.slane %v3220, 2
      %v3508 = vrot.slane %v3222, 2
      %v3509 = vrot.slane %v3224, 2
      %v3510 = vrot.slane %v3226, 2
      %v3511 = vrot.slane %v3228, 2
      %v3512 = vrot.slane %v3230, 2
      %v3513 = vrot.slane %v3232, 2
      %v3514 = vrot.slane %v3234, 2
      %v3515 = vrot.slane %v3236, 2
      %v3516 = vrot.slane %v3238, 2
      %v3517 = vrot.slane %v3240, 2
      %v3518 = vrot.slane %v3242, 2
      %v3519 = vrot.slane %v3244, 2
      %v3520 = vrot.slane %v3246, 2
      %v3521 = vrot.slane %v3248, 2
      %v3522 = vrot.slane %v3219, 2
      %v3523 = vrot.slane %v3221, 2
      %v3524 = vrot.slane %v3223, 2
      %v3525 = vrot.slane %v3225, 2
      %v3526 = vrot.slane %v3227, 2
      %v3527 = vrot.slane %v3229, 2
      %v3528 = vrot.slane %v3231, 2
      %v3529 = vrot.slane %v3233, 2
      %v3530 = vrot.slane %v3235, 2
      %v3531 = vrot.slane %v3237, 2
      %v3532 = vrot.slane %v3239, 2
      %v3533 = vrot.slane %v3241, 2
      %v3534 = vrot.slane %v3243, 2
      %v3535 = vrot.slane %v3245, 2
      %v3536 = vrot.slane %v3247, 2
      %v3537 = vrot.slane %v3249, 2
      %v3538 = vsel %vm1208, %v3506, %v3522
      %v3539 = vsel %vm1208, %v3507, %v3523
      %v3540 = vsel %vm1208, %v3508, %v3524
      %v3541 = vsel %vm1208, %v3509, %v3525
      %v3542 = vsel %vm1208, %v3510, %v3526
      %v3543 = vsel %vm1208, %v3511, %v3527
      %v3544 = vsel %vm1208, %v3512, %v3528
      %v3545 = vsel %vm1208, %v3513, %v3529
      %v3546 = vsel %vm1208, %v3514, %v3530
      %v3547 = vsel %vm1208, %v3515, %v3531
      %v3548 = vsel %vm1208, %v3516, %v3532
      %v3549 = vsel %vm1208, %v3517, %v3533
      %v3550 = vsel %vm1208, %v3518, %v3534
      %v3551 = vsel %vm1208, %v3519, %v3535
      %v3552 = vsel %vm1208, %v3520, %v3536
      %v3553 = vsel %vm1208, %v3521, %v3537
      %v3554 = vsel %vm1208, %v3522, %v3506
      %v3555 = vsel %vm1208, %v3523, %v3507
      %v3556 = vsel %vm1208, %v3524, %v3508
      %v3557 = vsel %vm1208, %v3525, %v3509
      %v3558 = vsel %vm1208, %v3526, %v3510
      %v3559 = vsel %vm1208, %v3527, %v3511
      %v3560 = vsel %vm1208, %v3528, %v3512
      %v3561 = vsel %vm1208, %v3529, %v3513
      %v3562 = vsel %vm1208, %v3530, %v3514
      %v3563 = vsel %vm1208, %v3531, %v3515
      %v3564 = vsel %vm1208, %v3532, %v3516
      %v3565 = vsel %vm1208, %v3533, %v3517
      %v3566 = vsel %vm1208, %v3534, %v3518
      %v3567 = vsel %vm1208, %v3535, %v3519
      %v3568 = vsel %vm1208, %v3536, %v3520
      %v3569 = vsel %vm1208, %v3537, %v3521
      %v3570 = vsel %vm1245, %v3538, -inf
      %v3571 = vsel %vm1246, %v3554, -inf
      %v3572 = vsel %vm1245, %v3539, -inf
      %v3573 = vsel %vm1246, %v3555, -inf
      %v3574 = vsel %vm1245, %v3540, -inf
      %v3575 = vsel %vm1246, %v3556, -inf
      %v3576 = vsel %vm1245, %v3541, -inf
      %v3577 = vsel %vm1246, %v3557, -inf
      %v3578 = vsel %vm1245, %v3542, -inf
      %v3579 = vsel %vm1246, %v3558, -inf
      %v3580 = vsel %vm1245, %v3543, -inf
      %v3581 = vsel %vm1246, %v3559, -inf
      %v3582 = vsel %vm1245, %v3544, -inf
      %v3583 = vsel %vm1246, %v3560, -inf
      %v3584 = vsel %vm1245, %v3545, -inf
      %v3585 = vsel %vm1246, %v3561, -inf
      %v3586 = vsel %vm1245, %v3546, -inf
      %v3587 = vsel %vm1246, %v3562, -inf
      %v3588 = vsel %vm1245, %v3547, -inf
      %v3589 = vsel %vm1246, %v3563, -inf
      %v3590 = vsel %vm1245, %v3548, -inf
      %v3591 = vsel %vm1246, %v3564, -inf
      %v3592 = vsel %vm1245, %v3549, -inf
      %v3593 = vsel %vm1246, %v3565, -inf
      %v3594 = vsel %vm1245, %v3550, -inf
      %v3595 = vsel %vm1246, %v3566, -inf
      %v3596 = vsel %vm1245, %v3551, -inf
      %v3597 = vsel %vm1246, %v3567, -inf
      %v3598 = vsel %vm1245, %v3552, -inf
      %v3599 = vsel %vm1246, %v3568, -inf
      %v3600 = vsel %vm1245, %v3553, -inf
      %v3601 = vsel %vm1246, %v3569, -inf
      %v3602 = vmax.f32 %v3474, %v3570
      %v3603 = vmax.f32 %v3475, %v3571
      %v3604 = vmax.f32 %v3476, %v3572
      %v3605 = vmax.f32 %v3477, %v3573
      %v3606 = vmax.f32 %v3478, %v3574
      %v3607 = vmax.f32 %v3479, %v3575
      %v3608 = vmax.f32 %v3480, %v3576
      %v3609 = vmax.f32 %v3481, %v3577
      %v3610 = vmax.f32 %v3482, %v3578
      %v3611 = vmax.f32 %v3483, %v3579
      %v3612 = vmax.f32 %v3484, %v3580
      %v3613 = vmax.f32 %v3485, %v3581
      %v3614 = vmax.f32 %v3486, %v3582
      %v3615 = vmax.f32 %v3487, %v3583
      %v3616 = vmax.f32 %v3488, %v3584
      %v3617 = vmax.f32 %v3489, %v3585
      %v3618 = vmax.f32 %v3490, %v3586
      %v3619 = vmax.f32 %v3491, %v3587
      %v3620 = vmax.f32 %v3492, %v3588
      %v3621 = vmax.f32 %v3493, %v3589
      %v3622 = vmax.f32 %v3494, %v3590
      %v3623 = vmax.f32 %v3495, %v3591
      %v3624 = vmax.f32 %v3496, %v3592
      %v3625 = vmax.f32 %v3497, %v3593
      %v3626 = vmax.f32 %v3498, %v3594
      %v3627 = vmax.f32 %v3499, %v3595
      %v3628 = vmax.f32 %v3500, %v3596
      %v3629 = vmax.f32 %v3501, %v3597
      %v3630 = vmax.f32 %v3502, %v3598
      %v3631 = vmax.f32 %v3503, %v3599
      %v3632 = vmax.f32 %v3504, %v3600
      %v3633 = vmax.f32 %v3505, %v3601
      %v3634 = vrot.slane %v3218, 6
      %v3635 = vrot.slane %v3220, 6
      %v3636 = vrot.slane %v3222, 6
      %v3637 = vrot.slane %v3224, 6
      %v3638 = vrot.slane %v3226, 6
      %v3639 = vrot.slane %v3228, 6
      %v3640 = vrot.slane %v3230, 6
      %v3641 = vrot.slane %v3232, 6
      %v3642 = vrot.slane %v3234, 6
      %v3643 = vrot.slane %v3236, 6
      %v3644 = vrot.slane %v3238, 6
      %v3645 = vrot.slane %v3240, 6
      %v3646 = vrot.slane %v3242, 6
      %v3647 = vrot.slane %v3244, 6
      %v3648 = vrot.slane %v3246, 6
      %v3649 = vrot.slane %v3248, 6
      %v3650 = vrot.slane %v3219, 6
      %v3651 = vrot.slane %v3221, 6
      %v3652 = vrot.slane %v3223, 6
      %v3653 = vrot.slane %v3225, 6
      %v3654 = vrot.slane %v3227, 6
      %v3655 = vrot.slane %v3229, 6
      %v3656 = vrot.slane %v3231, 6
      %v3657 = vrot.slane %v3233, 6
      %v3658 = vrot.slane %v3235, 6
      %v3659 = vrot.slane %v3237, 6
      %v3660 = vrot.slane %v3239, 6
      %v3661 = vrot.slane %v3241, 6
      %v3662 = vrot.slane %v3243, 6
      %v3663 = vrot.slane %v3245, 6
      %v3664 = vrot.slane %v3247, 6
      %v3665 = vrot.slane %v3249, 6
      %v3666 = vsel %vm1343, %v3634, %v3650
      %v3667 = vsel %vm1343, %v3635, %v3651
      %v3668 = vsel %vm1343, %v3636, %v3652
      %v3669 = vsel %vm1343, %v3637, %v3653
      %v3670 = vsel %vm1343, %v3638, %v3654
      %v3671 = vsel %vm1343, %v3639, %v3655
      %v3672 = vsel %vm1343, %v3640, %v3656
      %v3673 = vsel %vm1343, %v3641, %v3657
      %v3674 = vsel %vm1343, %v3642, %v3658
      %v3675 = vsel %vm1343, %v3643, %v3659
      %v3676 = vsel %vm1343, %v3644, %v3660
      %v3677 = vsel %vm1343, %v3645, %v3661
      %v3678 = vsel %vm1343, %v3646, %v3662
      %v3679 = vsel %vm1343, %v3647, %v3663
      %v3680 = vsel %vm1343, %v3648, %v3664
      %v3681 = vsel %vm1343, %v3649, %v3665
      %v3682 = vsel %vm1343, %v3650, %v3634
      %v3683 = vsel %vm1343, %v3651, %v3635
      %v3684 = vsel %vm1343, %v3652, %v3636
      %v3685 = vsel %vm1343, %v3653, %v3637
      %v3686 = vsel %vm1343, %v3654, %v3638
      %v3687 = vsel %vm1343, %v3655, %v3639
      %v3688 = vsel %vm1343, %v3656, %v3640
      %v3689 = vsel %vm1343, %v3657, %v3641
      %v3690 = vsel %vm1343, %v3658, %v3642
      %v3691 = vsel %vm1343, %v3659, %v3643
      %v3692 = vsel %vm1343, %v3660, %v3644
      %v3693 = vsel %vm1343, %v3661, %v3645
      %v3694 = vsel %vm1343, %v3662, %v3646
      %v3695 = vsel %vm1343, %v3663, %v3647
      %v3696 = vsel %vm1343, %v3664, %v3648
      %v3697 = vsel %vm1343, %v3665, %v3649
      %v3698 = vsel %vm1380, %v3682, -inf
      %v3699 = vsel %vm1381, %v3666, -inf
      %v3700 = vsel %vm1380, %v3683, -inf
      %v3701 = vsel %vm1381, %v3667, -inf
      %v3702 = vsel %vm1380, %v3684, -inf
      %v3703 = vsel %vm1381, %v3668, -inf
      %v3704 = vsel %vm1380, %v3685, -inf
      %v3705 = vsel %vm1381, %v3669, -inf
      %v3706 = vsel %vm1380, %v3686, -inf
      %v3707 = vsel %vm1381, %v3670, -inf
      %v3708 = vsel %vm1380, %v3687, -inf
      %v3709 = vsel %vm1381, %v3671, -inf
      %v3710 = vsel %vm1380, %v3688, -inf
      %v3711 = vsel %vm1381, %v3672, -inf
      %v3712 = vsel %vm1380, %v3689, -inf
      %v3713 = vsel %vm1381, %v3673, -inf
      %v3714 = vsel %vm1380, %v3690, -inf
      %v3715 = vsel %vm1381, %v3674, -inf
      %v3716 = vsel %vm1380, %v3691, -inf
      %v3717 = vsel %vm1381, %v3675, -inf
      %v3718 = vsel %vm1380, %v3692, -inf
      %v3719 = vsel %vm1381, %v3676, -inf
      %v3720 = vsel %vm1380, %v3693, -inf
      %v3721 = vsel %vm1381, %v3677, -inf
      %v3722 = vsel %vm1380, %v3694, -inf
      %v3723 = vsel %vm1381, %v3678, -inf
      %v3724 = vsel %vm1380, %v3695, -inf
      %v3725 = vsel %vm1381, %v3679, -inf
      %v3726 = vsel %vm1380, %v3696, -inf
      %v3727 = vsel %vm1381, %v3680, -inf
      %v3728 = vsel %vm1380, %v3697, -inf
      %v3729 = vsel %vm1381, %v3681, -inf
      %v3730 = vmax.f32 %v3602, %v3698
      %v3731 = vmax.f32 %v3603, %v3699
      %v3732 = vmax.f32 %v3604, %v3700
      %v3733 = vmax.f32 %v3605, %v3701
      %v3734 = vmax.f32 %v3606, %v3702
      %v3735 = vmax.f32 %v3607, %v3703
      %v3736 = vmax.f32 %v3608, %v3704
      %v3737 = vmax.f32 %v3609, %v3705
      %v3738 = vmax.f32 %v3610, %v3706
      %v3739 = vmax.f32 %v3611, %v3707
      %v3740 = vmax.f32 %v3612, %v3708
      %v3741 = vmax.f32 %v3613, %v3709
      %v3742 = vmax.f32 %v3614, %v3710
      %v3743 = vmax.f32 %v3615, %v3711
      %v3744 = vmax.f32 %v3616, %v3712
      %v3745 = vmax.f32 %v3617, %v3713
      %v3746 = vmax.f32 %v3618, %v3714
      %v3747 = vmax.f32 %v3619, %v3715
      %v3748 = vmax.f32 %v3620, %v3716
      %v3749 = vmax.f32 %v3621, %v3717
      %v3750 = vmax.f32 %v3622, %v3718
      %v3751 = vmax.f32 %v3623, %v3719
      %v3752 = vmax.f32 %v3624, %v3720
      %v3753 = vmax.f32 %v3625, %v3721
      %v3754 = vmax.f32 %v3626, %v3722
      %v3755 = vmax.f32 %v3627, %v3723
      %v3756 = vmax.f32 %v3628, %v3724
      %v3757 = vmax.f32 %v3629, %v3725
      %v3758 = vmax.f32 %v3630, %v3726
      %v3759 = vmax.f32 %v3631, %v3727
      %v3760 = vmax.f32 %v3632, %v3728
      %v3761 = vmax.f32 %v3633, %v3729
      %v3762 = vpack.c.bf16 %v3731, %v3730
      %v3763 = vpack.c.bf16 %v3733, %v3732
      %v3764 = vpack.c.bf16 %v3735, %v3734
      %v3765 = vpack.c.bf16 %v3737, %v3736
      %v3766 = vpack.c.bf16 %v3739, %v3738
      %v3767 = vpack.c.bf16 %v3741, %v3740
      %v3768 = vpack.c.bf16 %v3743, %v3742
      %v3769 = vpack.c.bf16 %v3745, %v3744
      %v3770 = vpack.c.bf16 %v3747, %v3746
      %v3771 = vpack.c.bf16 %v3749, %v3748
      %v3772 = vpack.c.bf16 %v3751, %v3750
      %v3773 = vpack.c.bf16 %v3753, %v3752
      %v3774 = vpack.c.bf16 %v3755, %v3754
      %v3775 = vpack.c.bf16 %v3757, %v3756
      %v3776 = vpack.c.bf16 %v3759, %v3758
      %v3777 = vpack.c.bf16 %v3761, %v3760
      %s3778 = scalar_lea.vmem %s1, 6
      %v3779 = vld [vmem:[%s3778] sm:$0x3]
      %v3781 = vsel %vm243, %v3762, 0
      %v3784 = vsel %vm243, %v3763, 0
      %v3787 = vsel %vm243, %v3764, 0
      %v3790 = vsel %vm243, %v3765, 0
      %v3793 = vsel %vm243, %v3766, 0
      %v3796 = vsel %vm243, %v3767, 0
      %v3799 = vsel %vm243, %v3768, 0
      %v3802 = vsel %vm243, %v3769, 0
      %v3805 = vsel %vm243, %v3770, 0
      %v3808 = vsel %vm243, %v3771, 0
      %v3811 = vsel %vm243, %v3772, 0
      %v3814 = vsel %vm243, %v3773, 0
      %v3817 = vsel %vm243, %v3774, 0
      %v3820 = vsel %vm243, %v3775, 0
      %v3823 = vsel %vm243, %v3776, 0
      %v3826 = vsel %vm243, %v3777, 0
      %v3829 = vsel %vm385, %v3779, 0
      %3831 = vmatprep.subr.bf16.mxu0 0
      %3832 = vmatpush1.bf16.msra.mxu0 %v3829
      %3833 = vmatprep.subr.bf16.mxu0 0
      %3834 = vmatpush1.bf16.msra.mxu0 0
      %3835 = vmatprep.subr.bf16.mxu0 0
      %3836 = vmatpush1.bf16.msra.mxu0 0
      %3837 = vmatprep.subr.bf16.mxu0 0
      %3838 = vmatpush1.bf16.msra.mxu0 0
      %3839 = vmatprep.subr.bf16.mxu0 0
      %3840 = vmatpush1.bf16.msra.mxu0 0
      %3841 = vmatprep.subr.bf16.mxu0 0
      %3842 = vmatpush1.bf16.msra.mxu0 0
      %3843 = vmatprep.subr.bf16.mxu0 0
      %3844 = vmatpush1.bf16.msra.mxu0 0
      %3845 = vmatprep.subr.bf16.mxu0 0
      %3846 = vmatpush1.bf16.msra.mxu0 0
      %3847 = vmatprep.subr.bf16.mxu0 0
      %3848 = vmatpush1.bf16.msra.mxu0 0
      %3849 = vmatprep.subr.bf16.mxu0 0
      %3850 = vmatpush1.bf16.msra.mxu0 0
      %3851 = vmatprep.subr.bf16.mxu0 0
      %3852 = vmatpush1.bf16.msra.mxu0 0
      %3853 = vmatprep.subr.bf16.mxu0 0
      %3854 = vmatpush1.bf16.msra.mxu0 0
      %3855 = vmatprep.subr.bf16.mxu0 0
      %3856 = vmatpush1.bf16.msra.mxu0 0
      %3857 = vmatprep.subr.bf16.mxu0 0
      %3858 = vmatpush1.bf16.msra.mxu0 0
      %3859 = vmatprep.subr.bf16.mxu0 0
      %3860 = vmatpush1.bf16.msra.mxu0 0
      %3861 = vmatprep.subr.bf16.mxu0 0
      %3862 = vmatpush1.bf16.msra.mxu0 0
      %3863 = vmatprep.mubr.bf16.mxu0 0
      %3864 = vmatmul.mubr.bf16.gmra.mrb[0].mxu0 %v3781
      %v3865 = vpop.f32.mrb[0].mxu0
      %v3866 = vadd.f32 0.0, %v3865
      %v3867 = vpop.f32.mrb[0].mxu0
      %v3868 = vpop.f32.mrb[0].mxu0
      %v3869 = vadd.f32 0.0, %v3868
      %v3870 = vpop.f32.mrb[0].mxu0
      %3871 = vmatprep.mubr.bf16.mxu0 0
      %3872 = vmatmul.mubr.bf16.gmra.mrb[0].mxu0 %v3784
      %v3873 = vpop.f32.mrb[0].mxu0
      %v3874 = vadd.f32 0.0, %v3873
      %v3875 = vpop.f32.mrb[0].mxu0
      %v3876 = vpop.f32.mrb[0].mxu0
      %v3877 = vadd.f32 0.0, %v3876
      %v3878 = vpop.f32.mrb[0].mxu0
      %3879 = vmatprep.mubr.bf16.mxu0 0
      %3880 = vmatmul.mubr.bf16.gmra.mrb[0].mxu0 %v3787
      %v3881 = vpop.f32.mrb[0].mxu0
      %v3882 = vadd.f32 0.0, %v3881
      %v3883 = vpop.f32.mrb[0].mxu0
      %v3884 = vpop.f32.mrb[0].mxu0
      %v3885 = vadd.f32 0.0, %v3884
      %v3886 = vpop.f32.mrb[0].mxu0
      %3887 = vmatprep.mubr.bf16.mxu0 0
      %3888 = vmatmul.mubr.bf16.gmra.mrb[0].mxu0 %v3790
      %v3889 = vpop.f32.mrb[0].mxu0
      %v3890 = vadd.f32 0.0, %v3889
      %v3891 = vpop.f32.mrb[0].mxu0
      %v3892 = vpop.f32.mrb[0].mxu0
      %v3893 = vadd.f32 0.0, %v3892
      %v3894 = vpop.f32.mrb[0].mxu0
      %3895 = vmatprep.mubr.bf16.mxu0 0
      %3896 = vmatmul.mubr.bf16.gmra.mrb[0].mxu0 %v3793
      %v3897 = vpop.f32.mrb[0].mxu0
      %v3898 = vadd.f32 0.0, %v3897
      %v3899 = vpop.f32.mrb[0].mxu0
      %v3900 = vpop.f32.mrb[0].mxu0
      %v3901 = vadd.f32 0.0, %v3900
      %v3902 = vpop.f32.mrb[0].mxu0
      %3903 = vmatprep.mubr.bf16.mxu0 0
      %3904 = vmatmul.mubr.bf16.gmra.mrb[0].mxu0 %v3796
      %v3905 = vpop.f32.mrb[0].mxu0
      %v3906 = vadd.f32 0.0, %v3905
      %v3907 = vpop.f32.mrb[0].mxu0
      %v3908 = vpop.f32.mrb[0].mxu0
      %v3909 = vadd.f32 0.0, %v3908
      %v3910 = vpop.f32.mrb[0].mxu0
      %3911 = vmatprep.mubr.bf16.mxu0 0
      %3912 = vmatmul.mubr.bf16.gmra.mrb[0].mxu0 %v3799
      %v3913 = vpop.f32.mrb[0].mxu0
      %v3914 = vadd.f32 0.0, %v3913
      %v3915 = vpop.f32.mrb[0].mxu0
      %v3916 = vpop.f32.mrb[0].mxu0
      %v3917 = vadd.f32 0.0, %v3916
      %v3918 = vpop.f32.mrb[0].mxu0
      %3919 = vmatprep.mubr.bf16.mxu0 0
      %3920 = vmatmul.mubr.bf16.gmra.mrb[0].mxu0 %v3802
      %v3921 = vpop.f32.mrb[0].mxu0
      %v3922 = vadd.f32 0.0, %v3921
      %v3923 = vpop.f32.mrb[0].mxu0
      %v3924 = vpop.f32.mrb[0].mxu0
      %v3925 = vadd.f32 0.0, %v3924
      %v3926 = vpop.f32.mrb[0].mxu0
      %3927 = vmatprep.mubr.bf16.mxu0 0
      %3928 = vmatmul.mubr.bf16.gmra.mrb[0].mxu0 %v3805
      %v3929 = vpop.f32.mrb[0].mxu0
      %v3930 = vadd.f32 0.0, %v3929
      %v3931 = vpop.f32.mrb[0].mxu0
      %v3932 = vpop.f32.mrb[0].mxu0
      %v3933 = vadd.f32 0.0, %v3932
      %v3934 = vpop.f32.mrb[0].mxu0
      %3935 = vmatprep.mubr.bf16.mxu0 0
      %3936 = vmatmul.mubr.bf16.gmra.mrb[0].mxu0 %v3808
      %v3937 = vpop.f32.mrb[0].mxu0
      %v3938 = vadd.f32 0.0, %v3937
      %v3939 = vpop.f32.mrb[0].mxu0
      %v3940 = vpop.f32.mrb[0].mxu0
      %v3941 = vadd.f32 0.0, %v3940
      %v3942 = vpop.f32.mrb[0].mxu0
      %3943 = vmatprep.mubr.bf16.mxu0 0
      %3944 = vmatmul.mubr.bf16.gmra.mrb[0].mxu0 %v3811
      %v3945 = vpop.f32.mrb[0].mxu0
      %v3946 = vadd.f32 0.0, %v3945
      %v3947 = vpop.f32.mrb[0].mxu0
      %v3948 = vpop.f32.mrb[0].mxu0
      %v3949 = vadd.f32 0.0, %v3948
      %v3950 = vpop.f32.mrb[0].mxu0
      %3951 = vmatprep.mubr.bf16.mxu0 0
      %3952 = vmatmul.mubr.bf16.gmra.mrb[0].mxu0 %v3814
      %v3953 = vpop.f32.mrb[0].mxu0
      %v3954 = vadd.f32 0.0, %v3953
      %v3955 = vpop.f32.mrb[0].mxu0
      %v3956 = vpop.f32.mrb[0].mxu0
      %v3957 = vadd.f32 0.0, %v3956
      %v3958 = vpop.f32.mrb[0].mxu0
      %3959 = vmatprep.mubr.bf16.mxu0 0
      %3960 = vmatmul.mubr.bf16.gmra.mrb[0].mxu0 %v3817
      %v3961 = vpop.f32.mrb[0].mxu0
      %v3962 = vadd.f32 0.0, %v3961
      %v3963 = vpop.f32.mrb[0].mxu0
      %v3964 = vpop.f32.mrb[0].mxu0
      %v3965 = vadd.f32 0.0, %v3964
      %v3966 = vpop.f32.mrb[0].mxu0
      %3967 = vmatprep.mubr.bf16.mxu0 0
      %3968 = vmatmul.mubr.bf16.gmra.mrb[0].mxu0 %v3820
      %v3969 = vpop.f32.mrb[0].mxu0
      %v3970 = vadd.f32 0.0, %v3969
      %v3971 = vpop.f32.mrb[0].mxu0
      %v3972 = vpop.f32.mrb[0].mxu0
      %v3973 = vadd.f32 0.0, %v3972
      %v3974 = vpop.f32.mrb[0].mxu0
      %3975 = vmatprep.mubr.bf16.mxu0 0
      %3976 = vmatmul.mubr.bf16.gmra.mrb[0].mxu0 %v3823
      %v3977 = vpop.f32.mrb[0].mxu0
      %v3978 = vadd.f32 0.0, %v3977
      %v3979 = vpop.f32.mrb[0].mxu0
      %v3980 = vpop.f32.mrb[0].mxu0
      %v3981 = vadd.f32 0.0, %v3980
      %v3982 = vpop.f32.mrb[0].mxu0
      %3983 = vmatprep.mubr.bf16.mxu0 0
      %3984 = vmatmul.mubr.bf16.gmra.mrb[0].mxu0 %v3826
      %v3985 = vpop.f32.mrb[0].mxu0
      %v3986 = vadd.f32 0.0, %v3985
      %v3987 = vpop.f32.mrb[0].mxu0
      %v3988 = vpop.f32.mrb[0].mxu0
      %v3989 = vadd.f32 0.0, %v3988
      %v3990 = vpop.f32.mrb[0].mxu0
      %3991 = vdwg.mxu0
      %v3992 = vld [vmem:[#allocation3] sm:$0xff]
      %v3993 = vld [vmem:[#allocation3 + $0x8] sm:$0xff]
      %v3994 = vld [vmem:[#allocation3 + $0x10] sm:$0xff]
      %v3995 = vld [vmem:[#allocation3 + $0x18] sm:$0xff]
      %v3996 = vld [vmem:[#allocation3 + $0x20] sm:$0xff]
      %v3997 = vld [vmem:[#allocation3 + $0x28] sm:$0xff]
      %v3998 = vld [vmem:[#allocation3 + $0x30] sm:$0xff]
      %v3999 = vld [vmem:[#allocation3 + $0x38] sm:$0xff]
      %v4000 = vld [vmem:[#allocation3 + $0x40] sm:$0xff]
      %v4001 = vld [vmem:[#allocation3 + $0x48] sm:$0xff]
      %v4002 = vld [vmem:[#allocation3 + $0x50] sm:$0xff]
      %v4003 = vld [vmem:[#allocation3 + $0x58] sm:$0xff]
      %v4004 = vld [vmem:[#allocation3 + $0x60] sm:$0xff]
      %v4005 = vld [vmem:[#allocation3 + $0x68] sm:$0xff]
      %v4006 = vld [vmem:[#allocation3 + $0x70] sm:$0xff]
      %v4007 = vld [vmem:[#allocation3 + $0x78] sm:$0xff]
      %v4008 = vld [vmem:[#allocation3 + $0x80] sm:$0xff]
      %v4009 = vld [vmem:[#allocation3 + $0x88] sm:$0xff]
      %v4010 = vld [vmem:[#allocation3 + $0x90] sm:$0xff]
      %v4011 = vld [vmem:[#allocation3 + $0x98] sm:$0xff]
      %v4012 = vld [vmem:[#allocation3 + $0xa0] sm:$0xff]
      %v4013 = vld [vmem:[#allocation3 + $0xa8] sm:$0xff]
      %v4014 = vld [vmem:[#allocation3 + $0xb0] sm:$0xff]
      %v4015 = vld [vmem:[#allocation3 + $0xb8] sm:$0xff]
      %v4016 = vld [vmem:[#allocation3 + $0xc0] sm:$0xff]
      %v4017 = vld [vmem:[#allocation3 + $0xc8] sm:$0xff]
      %v4018 = vld [vmem:[#allocation3 + $0xd0] sm:$0xff]
      %v4019 = vld [vmem:[#allocation3 + $0xd8] sm:$0xff]
      %v4020 = vld [vmem:[#allocation3 + $0xe0] sm:$0xff]
      %v4021 = vld [vmem:[#allocation3 + $0xe8] sm:$0xff]
      %v4022 = vld [vmem:[#allocation3 + $0xf0] sm:$0xff]
      %v4023 = vld [vmem:[#allocation3 + $0xf8] sm:$0xff]
      %v4024 = vadd.f32 %v3992, %v3866
      %v4025 = vadd.f32 %v3993, %v3869
      %v4026 = vadd.f32 %v3994, %v3874
      %v4027 = vadd.f32 %v3995, %v3877
      %v4028 = vadd.f32 %v3996, %v3882
      %v4029 = vadd.f32 %v3997, %v3885
      %v4030 = vadd.f32 %v3998, %v3890
      %v4031 = vadd.f32 %v3999, %v3893
      %v4032 = vadd.f32 %v4000, %v3898
      %v4033 = vadd.f32 %v4001, %v3901
      %v4034 = vadd.f32 %v4002, %v3906
      %v4035 = vadd.f32 %v4003, %v3909
      %v4036 = vadd.f32 %v4004, %v3914
      %v4037 = vadd.f32 %v4005, %v3917
      %v4038 = vadd.f32 %v4006, %v3922
      %v4039 = vadd.f32 %v4007, %v3925
      %v4040 = vadd.f32 %v4008, %v3930
      %v4041 = vadd.f32 %v4009, %v3933
      %v4042 = vadd.f32 %v4010, %v3938
      %v4043 = vadd.f32 %v4011, %v3941
      %v4044 = vadd.f32 %v4012, %v3946
      %v4045 = vadd.f32 %v4013, %v3949
      %v4046 = vadd.f32 %v4014, %v3954
      %v4047 = vadd.f32 %v4015, %v3957
      %v4048 = vadd.f32 %v4016, %v3962
      %v4049 = vadd.f32 %v4017, %v3965
      %v4050 = vadd.f32 %v4018, %v3970
      %v4051 = vadd.f32 %v4019, %v3973
      %v4052 = vadd.f32 %v4020, %v3978
      %v4053 = vadd.f32 %v4021, %v3981
      %v4054 = vadd.f32 %v4022, %v3986
      %v4055 = vadd.f32 %v4023, %v3989
      %4056 = vst.msk [vmem:[#allocation3] sm:$0xff] %vm243, %v4024
      %4057 = vst.msk [vmem:[#allocation3 + $0x8] sm:$0xff] %vm243, %v4025
      %4058 = vst.msk [vmem:[#allocation3 + $0x10] sm:$0xff] %vm243, %v4026
      %4059 = vst.msk [vmem:[#allocation3 + $0x18] sm:$0xff] %vm243, %v4027
      %4060 = vst.msk [vmem:[#allocation3 + $0x20] sm:$0xff] %vm243, %v4028
      %4061 = vst.msk [vmem:[#allocation3 + $0x28] sm:$0xff] %vm243, %v4029
      %4062 = vst.msk [vmem:[#allocation3 + $0x30] sm:$0xff] %vm243, %v4030
      %4063 = vst.msk [vmem:[#allocation3 + $0x38] sm:$0xff] %vm243, %v4031
      %4064 = vst.msk [vmem:[#allocation3 + $0x40] sm:$0xff] %vm243, %v4032
      %4065 = vst.msk [vmem:[#allocation3 + $0x48] sm:$0xff] %vm243, %v4033
      %4066 = vst.msk [vmem:[#allocation3 + $0x50] sm:$0xff] %vm243, %v4034
      %4067 = vst.msk [vmem:[#allocation3 + $0x58] sm:$0xff] %vm243, %v4035
      %4068 = vst.msk [vmem:[#allocation3 + $0x60] sm:$0xff] %vm243, %v4036
      %4069 = vst.msk [vmem:[#allocation3 + $0x68] sm:$0xff] %vm243, %v4037
      %4070 = vst.msk [vmem:[#allocation3 + $0x70] sm:$0xff] %vm243, %v4038
      %4071 = vst.msk [vmem:[#allocation3 + $0x78] sm:$0xff] %vm243, %v4039
      %4072 = vst.msk [vmem:[#allocation3 + $0x80] sm:$0xff] %vm243, %v4040
      %4073 = vst.msk [vmem:[#allocation3 + $0x88] sm:$0xff] %vm243, %v4041
      %4074 = vst.msk [vmem:[#allocation3 + $0x90] sm:$0xff] %vm243, %v4042
      %4075 = vst.msk [vmem:[#allocation3 + $0x98] sm:$0xff] %vm243, %v4043
      %4076 = vst.msk [vmem:[#allocation3 + $0xa0] sm:$0xff] %vm243, %v4044
      %4077 = vst.msk [vmem:[#allocation3 + $0xa8] sm:$0xff] %vm243, %v4045
      %4078 = vst.msk [vmem:[#allocation3 + $0xb0] sm:$0xff] %vm243, %v4046
      %4079 = vst.msk [vmem:[#allocation3 + $0xb8] sm:$0xff] %vm243, %v4047
      %4080 = vst.msk [vmem:[#allocation3 + $0xc0] sm:$0xff] %vm243, %v4048
      %4081 = vst.msk [vmem:[#allocation3 + $0xc8] sm:$0xff] %vm243, %v4049
      %4082 = vst.msk [vmem:[#allocation3 + $0xd0] sm:$0xff] %vm243, %v4050
      %4083 = vst.msk [vmem:[#allocation3 + $0xd8] sm:$0xff] %vm243, %v4051
      %4084 = vst.msk [vmem:[#allocation3 + $0xe0] sm:$0xff] %vm243, %v4052
      %4085 = vst.msk [vmem:[#allocation3 + $0xe8] sm:$0xff] %vm243, %v4053
      %4086 = vst.msk [vmem:[#allocation3 + $0xf0] sm:$0xff] %vm243, %v4054
      %4087 = vst.msk [vmem:[#allocation3 + $0xf8] sm:$0xff] %vm243, %v4055
      %v4088 = vld [vmem:[#allocation3] sm:$0xff]
      %v4089 = vld [vmem:[#allocation3 + $0x8] sm:$0xff]
      %v4090 = vld [vmem:[#allocation3 + $0x10] sm:$0xff]
      %v4091 = vld [vmem:[#allocation3 + $0x18] sm:$0xff]
      %v4092 = vld [vmem:[#allocation3 + $0x20] sm:$0xff]
      %v4093 = vld [vmem:[#allocation3 + $0x28] sm:$0xff]
      %v4094 = vld [vmem:[#allocation3 + $0x30] sm:$0xff]
      %v4095 = vld [vmem:[#allocation3 + $0x38] sm:$0xff]
      %v4096 = vld [vmem:[#allocation3 + $0x40] sm:$0xff]
      %v4097 = vld [vmem:[#allocation3 + $0x48] sm:$0xff]
      %v4098 = vld [vmem:[#allocation3 + $0x50] sm:$0xff]
      %v4099 = vld [vmem:[#allocation3 + $0x58] sm:$0xff]
      %v4100 = vld [vmem:[#allocation3 + $0x60] sm:$0xff]
      %v4101 = vld [vmem:[#allocation3 + $0x68] sm:$0xff]
      %v4102 = vld [vmem:[#allocation3 + $0x70] sm:$0xff]
      %v4103 = vld [vmem:[#allocation3 + $0x78] sm:$0xff]
      %v4104 = vld [vmem:[#allocation3 + $0x80] sm:$0xff]
      %v4105 = vld [vmem:[#allocation3 + $0x88] sm:$0xff]
      %v4106 = vld [vmem:[#allocation3 + $0x90] sm:$0xff]
      %v4107 = vld [vmem:[#allocation3 + $0x98] sm:$0xff]
      %v4108 = vld [vmem:[#allocation3 + $0xa0] sm:$0xff]
      %v4109 = vld [vmem:[#allocation3 + $0xa8] sm:$0xff]
      %v4110 = vld [vmem:[#allocation3 + $0xb0] sm:$0xff]
      %v4111 = vld [vmem:[#allocation3 + $0xb8] sm:$0xff]
      %v4112 = vld [vmem:[#allocation3 + $0xc0] sm:$0xff]
      %v4113 = vld [vmem:[#allocation3 + $0xc8] sm:$0xff]
      %v4114 = vld [vmem:[#allocation3 + $0xd0] sm:$0xff]
      %v4115 = vld [vmem:[#allocation3 + $0xd8] sm:$0xff]
      %v4116 = vld [vmem:[#allocation3 + $0xe0] sm:$0xff]
      %v4117 = vld [vmem:[#allocation3 + $0xe8] sm:$0xff]
      %v4118 = vld [vmem:[#allocation3 + $0xf0] sm:$0xff]
      %v4119 = vld [vmem:[#allocation3 + $0xf8] sm:$0xff]
      %v4120 = vld [vmem:[%s2] sm:$0x1]
      %v4122 = vlaneseq
      %v4123 = vshrl.u32 %v4122, 7
      %v4124 = vsub.s32 0, %v4123
      %v4125 = vrot.slane %v4120, %v4124
      %v4127 = vadd.f32 %v4088, %v4125
      %v4128 = vadd.f32 %v4089, %v4125
      %v4129 = vadd.f32 %v4090, %v4125
      %v4130 = vadd.f32 %v4091, %v4125
      %v4131 = vadd.f32 %v4092, %v4125
      %v4132 = vadd.f32 %v4093, %v4125
      %v4133 = vadd.f32 %v4094, %v4125
      %v4134 = vadd.f32 %v4095, %v4125
      %v4135 = vadd.f32 %v4096, %v4125
      %v4136 = vadd.f32 %v4097, %v4125
      %v4137 = vadd.f32 %v4098, %v4125
      %v4138 = vadd.f32 %v4099, %v4125
      %v4139 = vadd.f32 %v4100, %v4125
      %v4140 = vadd.f32 %v4101, %v4125
      %v4141 = vadd.f32 %v4102, %v4125
      %v4142 = vadd.f32 %v4103, %v4125
      %v4143 = vadd.f32 %v4104, %v4125
      %v4144 = vadd.f32 %v4105, %v4125
      %v4145 = vadd.f32 %v4106, %v4125
      %v4146 = vadd.f32 %v4107, %v4125
      %v4147 = vadd.f32 %v4108, %v4125
      %v4148 = vadd.f32 %v4109, %v4125
      %v4149 = vadd.f32 %v4110, %v4125
      %v4150 = vadd.f32 %v4111, %v4125
      %v4151 = vadd.f32 %v4112, %v4125
      %v4152 = vadd.f32 %v4113, %v4125
      %v4153 = vadd.f32 %v4114, %v4125
      %v4154 = vadd.f32 %v4115, %v4125
      %v4155 = vadd.f32 %v4116, %v4125
      %v4156 = vadd.f32 %v4117, %v4125
      %v4157 = vadd.f32 %v4118, %v4125
      %v4158 = vadd.f32 %v4119, %v4125
      %v4159 = vpack.c.bf16 %v4128, %v4127
      %v4160 = vpack.c.bf16 %v4130, %v4129
      %v4161 = vpack.c.bf16 %v4132, %v4131
      %v4162 = vpack.c.bf16 %v4134, %v4133
      %v4163 = vpack.c.bf16 %v4136, %v4135
      %v4164 = vpack.c.bf16 %v4138, %v4137
      %v4165 = vpack.c.bf16 %v4140, %v4139
      %v4166 = vpack.c.bf16 %v4142, %v4141
      %v4167 = vpack.c.bf16 %v4144, %v4143
      %v4168 = vpack.c.bf16 %v4146, %v4145
      %v4169 = vpack.c.bf16 %v4148, %v4147
      %v4170 = vpack.c.bf16 %v4150, %v4149
      %v4171 = vpack.c.bf16 %v4152, %v4151
      %v4172 = vpack.c.bf16 %v4154, %v4153
      %v4173 = vpack.c.bf16 %v4156, %v4155
      %v4174 = vpack.c.bf16 %v4158, %v4157
      %v4191 = vunpack.c.l.b16 %v4159
      %v4192 = vunpack.c.h.b16 %v4159
      %v4193 = vunpack.c.l.b16 %v4160
      %v4194 = vunpack.c.h.b16 %v4160
      %v4195 = vunpack.c.l.b16 %v4161
      %v4196 = vunpack.c.h.b16 %v4161
      %v4197 = vunpack.c.l.b16 %v4162
      %v4198 = vunpack.c.h.b16 %v4162
      %v4199 = vunpack.c.l.b16 %v4163
      %v4200 = vunpack.c.h.b16 %v4163
      %v4201 = vunpack.c.l.b16 %v4164
      %v4202 = vunpack.c.h.b16 %v4164
      %v4203 = vunpack.c.l.b16 %v4165
      %v4204 = vunpack.c.h.b16 %v4165
      %v4205 = vunpack.c.l.b16 %v4166
      %v4206 = vunpack.c.h.b16 %v4166
      %v4207 = vunpack.c.l.b16 %v4167
      %v4208 = vunpack.c.h.b16 %v4167
      %v4209 = vunpack.c.l.b16 %v4168
      %v4210 = vunpack.c.h.b16 %v4168
      %v4211 = vunpack.c.l.b16 %v4169
      %v4212 = vunpack.c.h.b16 %v4169
      %v4213 = vunpack.c.l.b16 %v4170
      %v4214 = vunpack.c.h.b16 %v4170
      %v4215 = vunpack.c.l.b16 %v4171
      %v4216 = vunpack.c.h.b16 %v4171
      %v4217 = vunpack.c.l.b16 %v4172
      %v4218 = vunpack.c.h.b16 %v4172
      %v4219 = vunpack.c.l.b16 %v4173
      %v4220 = vunpack.c.h.b16 %v4173
      %v4221 = vunpack.c.l.b16 %v4174
      %v4222 = vunpack.c.h.b16 %v4174
      %v4223 = vpack.c.b16 %v4191, %v4191
      %v4224 = vpack.c.b16 %v4192, %v4192
      %v4225 = vpack.c.b16 %v4193, %v4193
      %v4226 = vpack.c.b16 %v4194, %v4194
      %v4227 = vpack.c.b16 %v4195, %v4195
      %v4228 = vpack.c.b16 %v4196, %v4196
      %v4229 = vpack.c.b16 %v4197, %v4197
      %v4230 = vpack.c.b16 %v4198, %v4198
      %v4231 = vpack.c.b16 %v4199, %v4199
      %v4232 = vpack.c.b16 %v4200, %v4200
      %v4233 = vpack.c.b16 %v4201, %v4201
      %v4234 = vpack.c.b16 %v4202, %v4202
      %v4235 = vpack.c.b16 %v4203, %v4203
      %v4236 = vpack.c.b16 %v4204, %v4204
      %v4237 = vpack.c.b16 %v4205, %v4205
      %v4238 = vpack.c.b16 %v4206, %v4206
      %v4239 = vpack.c.b16 %v4207, %v4207
      %v4240 = vpack.c.b16 %v4208, %v4208
      %v4241 = vpack.c.b16 %v4209, %v4209
      %v4242 = vpack.c.b16 %v4210, %v4210
      %v4243 = vpack.c.b16 %v4211, %v4211
      %v4244 = vpack.c.b16 %v4212, %v4212
      %v4245 = vpack.c.b16 %v4213, %v4213
      %v4246 = vpack.c.b16 %v4214, %v4214
      %v4247 = vpack.c.b16 %v4215, %v4215
      %v4248 = vpack.c.b16 %v4216, %v4216
      %v4249 = vpack.c.b16 %v4217, %v4217
      %v4250 = vpack.c.b16 %v4218, %v4218
      %v4251 = vpack.c.b16 %v4219, %v4219
      %v4252 = vpack.c.b16 %v4220, %v4220
      %v4253 = vpack.c.b16 %v4221, %v4221
      %v4254 = vpack.c.b16 %v4222, %v4222
      %vm4287 = vcmask 27648
      %4288 = vst.msk [vmem:[%s235] sm:$0xf] %vm4287, %v4223
      %4289 = vst.msk [vmem:[%s235 + $0x4] sm:$0xf] %vm4287, %v4224
      %4290 = vst.msk [vmem:[%s235 + $0x8] sm:$0xf] %vm4287, %v4225
      %4291 = vst.msk [vmem:[%s235 + $0xc] sm:$0xf] %vm4287, %v4226
      %4292 = vst.msk [vmem:[%s235 + $0x10] sm:$0xf] %vm4287, %v4227
      %4293 = vst.msk [vmem:[%s235 + $0x14] sm:$0xf] %vm4287, %v4228
      %4294 = vst.msk [vmem:[%s235 + $0x18] sm:$0xf] %vm4287, %v4229
      %4295 = vst.msk [vmem:[%s235 + $0x1c] sm:$0xf] %vm4287, %v4230
      %4296 = vst.msk [vmem:[%s235 + $0x20] sm:$0xf] %vm4287, %v4231
      %4297 = vst.msk [vmem:[%s235 + $0x24] sm:$0xf] %vm4287, %v4232
      %4298 = vst.msk [vmem:[%s235 + $0x28] sm:$0xf] %vm4287, %v4233
      %4299 = vst.msk [vmem:[%s235 + $0x2c] sm:$0xf] %vm4287, %v4234
      %4300 = vst.msk [vmem:[%s235 + $0x30] sm:$0xf] %vm4287, %v4235
      %4301 = vst.msk [vmem:[%s235 + $0x34] sm:$0xf] %vm4287, %v4236
      %4302 = vst.msk [vmem:[%s235 + $0x38] sm:$0xf] %vm4287, %v4237
      %4303 = vst.msk [vmem:[%s235 + $0x3c] sm:$0xf] %vm4287, %v4238
      %4304 = vst.msk [vmem:[%s235 + $0x40] sm:$0xf] %vm4287, %v4239
      %4305 = vst.msk [vmem:[%s235 + $0x44] sm:$0xf] %vm4287, %v4240
      %4306 = vst.msk [vmem:[%s235 + $0x48] sm:$0xf] %vm4287, %v4241
      %4307 = vst.msk [vmem:[%s235 + $0x4c] sm:$0xf] %vm4287, %v4242
      %4308 = vst.msk [vmem:[%s235 + $0x50] sm:$0xf] %vm4287, %v4243
      %4309 = vst.msk [vmem:[%s235 + $0x54] sm:$0xf] %vm4287, %v4244
      %4310 = vst.msk [vmem:[%s235 + $0x58] sm:$0xf] %vm4287, %v4245
      %4311 = vst.msk [vmem:[%s235 + $0x5c] sm:$0xf] %vm4287, %v4246
      %4312 = vst.msk [vmem:[%s235 + $0x60] sm:$0xf] %vm4287, %v4247
      %4313 = vst.msk [vmem:[%s235 + $0x64] sm:$0xf] %vm4287, %v4248
      %4314 = vst.msk [vmem:[%s235 + $0x68] sm:$0xf] %vm4287, %v4249
      %4315 = vst.msk [vmem:[%s235 + $0x6c] sm:$0xf] %vm4287, %v4250
      %4316 = vst.msk [vmem:[%s235 + $0x70] sm:$0xf] %vm4287, %v4251
      %4317 = vst.msk [vmem:[%s235 + $0x74] sm:$0xf] %vm4287, %v4252
      %4318 = vst.msk [vmem:[%s235 + $0x78] sm:$0xf] %vm4287, %v4253
      %4319 = vst.msk [vmem:[%s235 + $0x7c] sm:$0xf] %vm4287, %v4254
      %v4320 = vsel %vm243, %v4127, 0.0
      %v4321 = vsel %vm243, %v4128, 0.0
      %v4322 = vadd.f32 %v4320, %v4321
      %v4323 = vsel %vm243, %v4129, 0.0
      %v4324 = vadd.f32 %v4322, %v4323
      %v4325 = vsel %vm243, %v4130, 0.0
      %v4326 = vadd.f32 %v4324, %v4325
      %v4327 = vsel %vm243, %v4131, 0.0
      %v4328 = vadd.f32 %v4326, %v4327
      %v4329 = vsel %vm243, %v4132, 0.0
      %v4330 = vadd.f32 %v4328, %v4329
      %v4331 = vsel %vm243, %v4133, 0.0
      %v4332 = vadd.f32 %v4330, %v4331
      %v4333 = vsel %vm243, %v4134, 0.0
      %v4334 = vadd.f32 %v4332, %v4333
      %v4335 = vsel %vm243, %v4135, 0.0
      %v4336 = vadd.f32 %v4334, %v4335
      %v4337 = vsel %vm243, %v4136, 0.0
      %v4338 = vadd.f32 %v4336, %v4337
      %v4339 = vsel %vm243, %v4137, 0.0
      %v4340 = vadd.f32 %v4338, %v4339
      %v4341 = vsel %vm243, %v4138, 0.0
      %v4342 = vadd.f32 %v4340, %v4341
      %v4343 = vsel %vm243, %v4139, 0.0
      %v4344 = vadd.f32 %v4342, %v4343
      %v4345 = vsel %vm243, %v4140, 0.0
      %v4346 = vadd.f32 %v4344, %v4345
      %v4347 = vsel %vm243, %v4141, 0.0
      %v4348 = vadd.f32 %v4346, %v4347
      %v4349 = vsel %vm243, %v4142, 0.0
      %v4350 = vadd.f32 %v4348, %v4349
      %v4351 = vsel %vm243, %v4143, 0.0
      %v4352 = vadd.f32 %v4350, %v4351
      %v4353 = vsel %vm243, %v4144, 0.0
      %v4354 = vadd.f32 %v4352, %v4353
      %v4355 = vsel %vm243, %v4145, 0.0
      %v4356 = vadd.f32 %v4354, %v4355
      %v4357 = vsel %vm243, %v4146, 0.0
      %v4358 = vadd.f32 %v4356, %v4357
      %v4359 = vsel %vm243, %v4147, 0.0
      %v4360 = vadd.f32 %v4358, %v4359
      %v4361 = vsel %vm243, %v4148, 0.0
      %v4362 = vadd.f32 %v4360, %v4361
      %v4363 = vsel %vm243, %v4149, 0.0
      %v4364 = vadd.f32 %v4362, %v4363
      %v4365 = vsel %vm243, %v4150, 0.0
      %v4366 = vadd.f32 %v4364, %v4365
      %v4367 = vsel %vm243, %v4151, 0.0
      %v4368 = vadd.f32 %v4366, %v4367
      %v4369 = vsel %vm243, %v4152, 0.0
      %v4370 = vadd.f32 %v4368, %v4369
      %v4371 = vsel %vm243, %v4153, 0.0
      %v4372 = vadd.f32 %v4370, %v4371
      %v4373 = vsel %vm243, %v4154, 0.0
      %v4374 = vadd.f32 %v4372, %v4373
      %v4375 = vsel %vm243, %v4155, 0.0
      %v4376 = vadd.f32 %v4374, %v4375
      %v4377 = vsel %vm243, %v4156, 0.0
      %v4378 = vadd.f32 %v4376, %v4377
      %v4379 = vsel %vm243, %v4157, 0.0
      %v4380 = vadd.f32 %v4378, %v4379
      %v4381 = vsel %vm243, %v4158, 0.0
      %v4382 = vadd.f32 %v4380, %v4381
      %v4383 = vrot.slane %v4382, 4
      %v4384 = vadd.f32 %v4382, %v4383
      %v4385 = vrot.slane %v4384, 2
      %v4386 = vadd.f32 %v4384, %v4385
      %v4387 = vrot.slane %v4386, 1
      %v4388 = vadd.f32 %v4386, %v4387
      %v4389 = vmul.f32 %v4388, 0.00390625
      %v4390 = vsub.f32 %v4127, %v4389
      %v4391 = vsub.f32 %v4128, %v4389
      %v4392 = vsub.f32 %v4129, %v4389
      %v4393 = vsub.f32 %v4130, %v4389
      %v4394 = vsub.f32 %v4131, %v4389
      %v4395 = vsub.f32 %v4132, %v4389
      %v4396 = vsub.f32 %v4133, %v4389
      %v4397 = vsub.f32 %v4134, %v4389
      %v4398 = vsub.f32 %v4135, %v4389
      %v4399 = vsub.f32 %v4136, %v4389
      %v4400 = vsub.f32 %v4137, %v4389
      %v4401 = vsub.f32 %v4138, %v4389
      %v4402 = vsub.f32 %v4139, %v4389
      %v4403 = vsub.f32 %v4140, %v4389
      %v4404 = vsub.f32 %v4141, %v4389
      %v4405 = vsub.f32 %v4142, %v4389
      %v4406 = vsub.f32 %v4143, %v4389
      %v4407 = vsub.f32 %v4144, %v4389
      %v4408 = vsub.f32 %v4145, %v4389
      %v4409 = vsub.f32 %v4146, %v4389
      %v4410 = vsub.f32 %v4147, %v4389
      %v4411 = vsub.f32 %v4148, %v4389
      %v4412 = vsub.f32 %v4149, %v4389
      %v4413 = vsub.f32 %v4150, %v4389
      %v4414 = vsub.f32 %v4151, %v4389
      %v4415 = vsub.f32 %v4152, %v4389
      %v4416 = vsub.f32 %v4153, %v4389
      %v4417 = vsub.f32 %v4154, %v4389
      %v4418 = vsub.f32 %v4155, %v4389
      %v4419 = vsub.f32 %v4156, %v4389
      %v4420 = vsub.f32 %v4157, %v4389
      %v4421 = vsub.f32 %v4158, %v4389
      %vm4422 = vcmask 24576
      %4423 = vst.msk [vmem:[%s238] sm:$0x1] %vm4422, %v4389
      %v4424 = vmul.f32 %v4390, %v4390
      %v4425 = vmul.f32 %v4391, %v4391
      %v4426 = vmul.f32 %v4392, %v4392
      %v4427 = vmul.f32 %v4393, %v4393
      %v4428 = vmul.f32 %v4394, %v4394
      %v4429 = vmul.f32 %v4395, %v4395
      %v4430 = vmul.f32 %v4396, %v4396
      %v4431 = vmul.f32 %v4397, %v4397
      %v4432 = vmul.f32 %v4398, %v4398
      %v4433 = vmul.f32 %v4399, %v4399
      %v4434 = vmul.f32 %v4400, %v4400
      %v4435 = vmul.f32 %v4401, %v4401
      %v4436 = vmul.f32 %v4402, %v4402
      %v4437 = vmul.f32 %v4403, %v4403
      %v4438 = vmul.f32 %v4404, %v4404
      %v4439 = vmul.f32 %v4405, %v4405
      %v4440 = vmul.f32 %v4406, %v4406
      %v4441 = vmul.f32 %v4407, %v4407
      %v4442 = vmul.f32 %v4408, %v4408
      %v4443 = vmul.f32 %v4409, %v4409
      %v4444 = vmul.f32 %v4410, %v4410
      %v4445 = vmul.f32 %v4411, %v4411
      %v4446 = vmul.f32 %v4412, %v4412
      %v4447 = vmul.f32 %v4413, %v4413
      %v4448 = vmul.f32 %v4414, %v4414
      %v4449 = vmul.f32 %v4415, %v4415
      %v4450 = vmul.f32 %v4416, %v4416
      %v4451 = vmul.f32 %v4417, %v4417
      %v4452 = vmul.f32 %v4418, %v4418
      %v4453 = vmul.f32 %v4419, %v4419
      %v4454 = vmul.f32 %v4420, %v4420
      %v4455 = vmul.f32 %v4421, %v4421
      %v4456 = vsel %vm243, %v4424, 0.0
      %v4457 = vsel %vm243, %v4425, 0.0
      %v4458 = vadd.f32 %v4456, %v4457
      %v4459 = vsel %vm243, %v4426, 0.0
      %v4460 = vadd.f32 %v4458, %v4459
      %v4461 = vsel %vm243, %v4427, 0.0
      %v4462 = vadd.f32 %v4460, %v4461
      %v4463 = vsel %vm243, %v4428, 0.0
      %v4464 = vadd.f32 %v4462, %v4463
      %v4465 = vsel %vm243, %v4429, 0.0
      %v4466 = vadd.f32 %v4464, %v4465
      %v4467 = vsel %vm243, %v4430, 0.0
      %v4468 = vadd.f32 %v4466, %v4467
      %v4469 = vsel %vm243, %v4431, 0.0
      %v4470 = vadd.f32 %v4468, %v4469
      %v4471 = vsel %vm243, %v4432, 0.0
      %v4472 = vadd.f32 %v4470, %v4471
      %v4473 = vsel %vm243, %v4433, 0.0
      %v4474 = vadd.f32 %v4472, %v4473
      %v4475 = vsel %vm243, %v4434, 0.0
      %v4476 = vadd.f32 %v4474, %v4475
      %v4477 = vsel %vm243, %v4435, 0.0
      %v4478 = vadd.f32 %v4476, %v4477
      %v4479 = vsel %vm243, %v4436, 0.0
      %v4480 = vadd.f32 %v4478, %v4479
      %v4481 = vsel %vm243, %v4437, 0.0
      %v4482 = vadd.f32 %v4480, %v4481
      %v4483 = vsel %vm243, %v4438, 0.0
      %v4484 = vadd.f32 %v4482, %v4483
      %v4485 = vsel %vm243, %v4439, 0.0
      %v4486 = vadd.f32 %v4484, %v4485
      %v4487 = vsel %vm243, %v4440, 0.0
      %v4488 = vadd.f32 %v4486, %v4487
      %v4489 = vsel %vm243, %v4441, 0.0
      %v4490 = vadd.f32 %v4488, %v4489
      %v4491 = vsel %vm243, %v4442, 0.0
      %v4492 = vadd.f32 %v4490, %v4491
      %v4493 = vsel %vm243, %v4443, 0.0
      %v4494 = vadd.f32 %v4492, %v4493
      %v4495 = vsel %vm243, %v4444, 0.0
      %v4496 = vadd.f32 %v4494, %v4495
      %v4497 = vsel %vm243, %v4445, 0.0
      %v4498 = vadd.f32 %v4496, %v4497
      %v4499 = vsel %vm243, %v4446, 0.0
      %v4500 = vadd.f32 %v4498, %v4499
      %v4501 = vsel %vm243, %v4447, 0.0
      %v4502 = vadd.f32 %v4500, %v4501
      %v4503 = vsel %vm243, %v4448, 0.0
      %v4504 = vadd.f32 %v4502, %v4503
      %v4505 = vsel %vm243, %v4449, 0.0
      %v4506 = vadd.f32 %v4504, %v4505
      %v4507 = vsel %vm243, %v4450, 0.0
      %v4508 = vadd.f32 %v4506, %v4507
      %v4509 = vsel %vm243, %v4451, 0.0
      %v4510 = vadd.f32 %v4508, %v4509
      %v4511 = vsel %vm243, %v4452, 0.0
      %v4512 = vadd.f32 %v4510, %v4511
      %v4513 = vsel %vm243, %v4453, 0.0
      %v4514 = vadd.f32 %v4512, %v4513
      %v4515 = vsel %vm243, %v4454, 0.0
      %v4516 = vadd.f32 %v4514, %v4515
      %v4517 = vsel %vm243, %v4455, 0.0
      %v4518 = vadd.f32 %v4516, %v4517
      %v4519 = vrot.slane %v4518, 4
      %v4520 = vadd.f32 %v4518, %v4519
      %v4521 = vrot.slane %v4520, 2
      %v4522 = vadd.f32 %v4520, %v4521
      %v4523 = vrot.slane %v4522, 1
      %v4524 = vadd.f32 %v4522, %v4523
      %4525 = vst.msk [vmem:[%s241] sm:$0x1] %vm4422, %v4524
      %p4526 = scmp.lt.s32.totalorder %s17, 1
      %s4527 = scalar_select %p4526, %s17, 1
      %s4528 = smul.addr %s4527, 32
      %s4529 = smul.addr %s4528, 4
      %s4530 = scalar_lea.vmem %s3, %s4529
      %p4531 = scmp.lt.s32.totalorder %s17, 1
      %s4532 = scalar_select %p4531, %s17, 1
      %s4533 = scalar_lea.vmem %s4, %s4532
      %p4534 = scmp.lt.s32.totalorder %s17, 1
      %s4535 = scalar_select %p4534, %s17, 1
      %s4536 = scalar_lea.vmem %s5, %s4535
      // Predicated region
      $region33: #{spp_forward.2} parent=31 // pred_check
        %p4537 = pneg %p103
      $region34: #{spp_forward.2} parent=31 // pred_check_branch
        %4539 = sbr.rel (%p4537) target = $region36
      $region35: #{spp_forward.2} parent=31 // pred_region
        _
      $region36: #{spp_forward.2} parent=31 // pred_fallthru
        _
      // Predicated region
      $region37: #{spp_forward.2} parent=31 // pred_check
        %p4540 = pneg %p129
      $region38: #{spp_forward.2} parent=31 // pred_check_branch
        %4542 = sbr.rel (%p4540) target = $region40
      $region39: #{spp_forward.2} parent=31 // pred_region
        _
      $region40: #{spp_forward.2} parent=31 // pred_fallthru
        _
      // Predicated region
      $region41: #{spp_forward.2} parent=31 // pred_check
        %p4543 = pneg %p155
      $region42: #{spp_forward.2} parent=31 // pred_check_branch
        %4545 = sbr.rel (%p4543) target = $region44
      $region43: #{spp_forward.2} parent=31 // pred_region
        _
      $region44: #{spp_forward.2} parent=31 // pred_fallthru
        _
    $region32: #{spp_forward.2} parent=5 // pred_fallthru
      _
    %p4546 = scmp.le.s32.totalorder 2, %s12
    // Predicated region
    $region45: #{spp_forward.2} parent=5 // pred_check
      %p4547 = pneg %p4546
    $region46: #{spp_forward.2} parent=5 // pred_check_branch
      %4549 = sbr.rel (%p4547) target = $region48
    $region47: #{spp_forward.2} parent=5 // pred_region
      %s4550 = ssub.s32 %s12, 2
      // Predicated region
      $region49: #{spp_forward.2} parent=47 // pred_check
        %p4551 = pneg %p109
      $region50: #{spp_forward.2} parent=47 // pred_check_branch
        %4553 = sbr.rel (%p4551) target = $region52
      $region51: #{spp_forward.2} parent=47 // pred_region
        %p4554 = scmp.lt.s32.totalorder %s18, 1
        %s4555 = scalar_select %p4554, %s18, 1
        %s4556 = smul.addr %s4555, 32
        %s4557 = smul.addr %s4556, 4
        %s4558 = scalar_lea.vmem %s3, %s4557
      $region52: #{spp_forward.2} parent=47 // pred_fallthru
        _
      // Predicated region
      $region53: #{spp_forward.2} parent=47 // pred_check
        %p4559 = pneg %p135
      $region54: #{spp_forward.2} parent=47 // pred_check_branch
        %4561 = sbr.rel (%p4559) target = $region56
      $region55: #{spp_forward.2} parent=47 // pred_region
        %p4562 = scmp.lt.s32.totalorder %s18, 1
        %s4563 = scalar_select %p4562, %s18, 1
        %s4564 = scalar_lea.vmem %s4, %s4563
      $region56: #{spp_forward.2} parent=47 // pred_fallthru
        _
      // Predicated region
      $region57: #{spp_forward.2} parent=47 // pred_check
        %p4565 = pneg %p161
      $region58: #{spp_forward.2} parent=47 // pred_check_branch
        %4567 = sbr.rel (%p4565) target = $region60
      $region59: #{spp_forward.2} parent=47 // pred_region
        %p4568 = scmp.lt.s32.totalorder %s18, 1
        %s4569 = scalar_select %p4568, %s18, 1
        %s4570 = scalar_lea.vmem %s5, %s4569
      $region60: #{spp_forward.2} parent=47 // pred_fallthru
        _
    $region48: #{spp_forward.2} parent=5 // pred_fallthru
      _
  $region6: #{spp_forward.2} parent=0 // loop_footer
    %s16 = sadd.s32 1, %s12
  $region7: #{spp_forward.2} parent=0 // loop_footer_branch
    %11 = sbr.rel target = $region3
  $region8: #{spp_forward.2} parent=0 // loop_exit
    _

</llo_original>
